<compile_context>
chip_gen: v7x
topology: tpu7x:2x2x1
jax: 0.10.0
libtpu: 0.0.40
codegen_flags: <defaults>
</compile_context>

<pallas_src>
import functools

import jax
import jax.numpy as jnp
import numpy as np
from jax import lax
from jax.experimental import pallas as pl
from jax.experimental.pallas import tpu as pltpu

LANE = 128
VMEM_FALLBACK = 48 * 1024 * 1024   # used if get_tpu_info() is unavailable


def _round_up(x, m):
    return (x + m - 1) // m * m


def _vmem_limit_bytes():
    """Generation-aware VMEM budget (v5e/v6e: 128 MiB, v7x: 64 MiB per TC)."""
    try:
        cap = int(pltpu.get_tpu_info().vmem_capacity_bytes)
        if cap > 0:
            return min(cap * 3 // 4, 100 * 1024 * 1024)
    except Exception:
        pass
    return VMEM_FALLBACK


def _auto_max_rows(cin_p, cout_p, vmem_budget):
    """Largest per-step row count that keeps the working set inside VMEM."""
    # per-row bytes: bf16 x dbuf (2*2*cin), <=f32 y dbuf (2*4*cout), bf16
    # staging window (2*cin), f32 accumulator + matmul temporaries (~3*4*cout).
    per_row = 6 * cin_p + 20 * cout_p
    fixed = 4 * 9 * cin_p * cout_p + (4 << 20)   # double-buffered bf16 weights + slack
    usable = max(vmem_budget - fixed, 4 << 20)
    return int(min(4096, max(256, usable // per_row)))


def _pick_tile_h(H, W, max_rows):
    divs = [d for d in range(1, H + 1) if H % d == 0]
    cands = [d for d in divs if (d * W) % 8 == 0 or d == H]
    fitting = [d for d in cands if d * W <= max_rows]
    if fitting:
        return max(fitting)
    return min(cands, key=lambda d: d * W)


def _pick_row_tile(R, max_rows=4096):
    for t in range(min(R, max_rows), 0, -1):
        if R % t == 0 and (t % 8 == 0 or t == R):
            return t
    return R


# ----------------------------------------------------------------------------
# Halo side-array: for each H block, the image row directly above and below it
# (zeros at the image border).  Built in XLA; reads only ~2/tile_h of the data.
# ----------------------------------------------------------------------------
def _make_halo(flat, H, W, tile_h):
    N, HW, C = flat.shape
    num_h = H // tile_h
    if num_h == 1:
        return jnp.zeros((N, 1, 2 * W, C), flat.dtype)
    img = flat.reshape(N, num_h, tile_h * W, C)
    zero = jnp.zeros((N, 1, W, C), flat.dtype)
    top = jnp.concatenate([zero, img[:, :-1, -W:, :]], axis=1)   # row above block
    bot = jnp.concatenate([img[:, 1:, :W, :], zero], axis=1)     # row below block
    return jnp.concatenate([top, bot], axis=2)                   # (N, num_h, 2W, C)


# ----------------------------------------------------------------------------
# Kernel 1: fused (optional BN+ReLU of previous layer) -> 3x3 conv (bf16 MXU)
#           + per-channel partial stats (sum, sum of squares) of the raw f32
#           output.  One grid step = one image n, one H tile h.
# ----------------------------------------------------------------------------
def _conv3x3_kernel(x_ref, halo_ref, w_ref, s_ref, t_ref,    # inputs
                    y_ref, stats_ref,                        # outputs
                    b_ref,                                   # scratch (bf16 window)
                    *, tile_h, width, off, apply_input_act):
    rows = tile_h * width

    if apply_input_act:
        scale = s_ref[...]     # (1, cin_p) f32 folded BN scale of the previous layer
        shift = t_ref[...]     # (1, cin_p) f32 folded BN shift

        def act(v):
            return jnp.maximum(v.astype(jnp.float32) * scale + shift,
                               0.0).astype(b_ref.dtype)
    else:
        def act(v):
            return v.astype(b_ref.dtype)

    # ---- stage [top halo | main block | bottom halo] contiguously in bf16 ---
    # 'off' is 8-aligned so the main-block store is sublane aligned; the halo
    # stores are tiny (W rows).  Halo rows arrive via the auto-pipeline.
    b_ref[off - width:off, :] = act(halo_ref[0, 0, :width, :])
    b_ref[off:off + rows, :] = act(x_ref[0])
    b_ref[off + rows:off + rows + width, :] = act(halo_ref[0, 0, width:, :])

    # ---- 3x3 conv: 9 lane-dense bf16 MXU matmuls, locally accumulated in f32.
    # dx shifts are plain contiguous row offsets on the flat buffer; the only
    # wrap-around rows (W boundary) are zeroed with a per-row select.
    col = lax.broadcasted_iota(jnp.int32, (rows, 1), 0) % width
    keep_left = col > 0               # taps with dx == 0 (need x[.., w-1])
    keep_right = col < (width - 1)    # taps with dx == 2 (need x[.., w+1])

    acc = None
    for dy in range(3):
        for dx in range(3):
            start = off + (dy - 1) * width + (dx - 1)
            patch = b_ref[start:start + rows, :]
            if dx == 0:
                patch = jnp.where(keep_left, patch, 0)
            elif dx == 2:
                patch = jnp.where(keep_right, patch, 0)
            contrib = jnp.dot(patch, w_ref[dy * 3 + dx],
                              preferred_element_type=jnp.float32)
            acc = contrib if acc is None else acc + contrib

    y_ref[0] = acc.astype(y_ref.dtype)

    # per-channel partial statistics of the raw f32 conv output (for next BN)
    s = jnp.sum(acc, axis=0, keepdims=True)
    q = jnp.sum(acc * acc, axis=0, keepdims=True)
    stats_ref[0, 0, :, :] = jnp.concatenate([s, q], axis=0)


def _conv3x3_call(x_flat, halo, w_taps, scale_in, shift_in, *, H, W, tile_h,
                  apply_input_act, out_dtype, vmem_limit):
    N, HW, cin_p = x_flat.shape
    cout_p = w_taps.shape[-1]
    num_h = H // tile_h
    rows = tile_h * W
    off = _round_up(W + 1, 8)                       # main block 8-aligned
    buf_rows = _round_up(off + rows + W + 1, 8)     # +1 guard row each side

    kernel = functools.partial(_conv3x3_kernel, tile_h=tile_h, width=W,
                               off=off, apply_input_act=apply_input_act)
    y, stats = pl.pallas_call(
        kernel,
        out_shape=(
            jax.ShapeDtypeStruct((N, HW, cout_p), out_dtype),
            jax.ShapeDtypeStruct((N, num_h, 2, cout_p), jnp.float32),
        ),
        grid=(N, num_h),
        in_specs=[
            pl.BlockSpec((1, rows, cin_p), lambda n, h: (n, h, 0)),
            pl.BlockSpec((1, 1, 2 * W, cin_p), lambda n, h: (n, h, 0, 0)),
            pl.BlockSpec((9, cin_p, cout_p), lambda n, h: (0, 0, 0)),
            pl.BlockSpec((1, cin_p), lambda n, h: (0, 0)),
            pl.BlockSpec((1, cin_p), lambda n, h: (0, 0)),
        ],
        out_specs=(
            pl.BlockSpec((1, rows, cout_p), lambda n, h: (n, h, 0)),
            pl.BlockSpec((1, 1, 2, cout_p), lambda n, h: (n, h, 0, 0)),
        ),
        scratch_shapes=[
            pltpu.VMEM((buf_rows, cin_p), jnp.bfloat16),   # padded input window
        ],
        compiler_params=pltpu.CompilerParams(
            dimension_semantics=("parallel", "parallel"),
            vmem_limit_bytes=vmem_limit),
    )(x_flat, halo, w_taps, scale_in, shift_in)
    return y, stats


# ----------------------------------------------------------------------------
# Kernel 2: final BN + ReLU as a flat, lane-dense, mem-bound elementwise pass.
# ----------------------------------------------------------------------------
def _bn_relu_kernel(x_ref, s_ref, t_ref, o_ref):
    o_ref[...] = jnp.maximum(
        x_ref[...].astype(jnp.float32) * s_ref[...] + t_ref[...], 0.0)


def _bn_relu_call(x2d, scale, shift, vmem_limit):
    R, C = x2d.shape
    tr = _pick_row_tile(R)
    return pl.pallas_call(
        _bn_relu_kernel,
        out_shape=jax.ShapeDtypeStruct((R, C), jnp.float32),
        grid=(R // tr,),
        in_specs=[
            pl.BlockSpec((tr, C), lambda i: (i, 0)),
            pl.BlockSpec((1, C), lambda i: (0, 0)),
            pl.BlockSpec((1, C), lambda i: (0, 0)),
        ],
        out_specs=pl.BlockSpec((tr, C), lambda i: (i, 0)),
        compiler_params=pltpu.CompilerParams(
            dimension_semantics=("parallel",),
            vmem_limit_bytes=vmem_limit),
    )(x2d, scale, shift)


# ----------------------------------------------------------------------------
# Glue: fold batch statistics (from in-kernel partial sums) + gamma/beta into a
# per-channel scale/shift.  Tiny (grid x C) reduction, done in XLA.
# ----------------------------------------------------------------------------
def _bn_fold(stats, gamma_p, beta_p, count, eps):
    s = jnp.sum(stats[:, :, 0, :], axis=(0, 1))
    q = jnp.sum(stats[:, :, 1, :], axis=(0, 1))
    mean = s / count
    var = jnp.maximum(q / count - mean * mean, 0.0)   # biased, like PyTorch BN
    scale = gamma_p * lax.rsqrt(var + eps)
    shift = beta_p - mean * scale
    cp = gamma_p.shape[0]
    return scale.reshape(1, cp), shift.reshape(1, cp)


def _pad_channels(v, c_pad):
    return jnp.pad(v.astype(jnp.float32), (0, c_pad - v.shape[0]))


def _prep_weights(w_hwio, cin_p, cout_p):
    kh, kw, cin, cout = w_hwio.shape
    w = jnp.pad(w_hwio.astype(jnp.float32),
                ((0, 0), (0, 0), (0, cin_p - cin), (0, cout_p - cout)))
    return w.reshape(kh * kw, cin_p, cout_p).astype(jnp.bfloat16)


# ----------------------------------------------------------------------------
# DoubleConv forward (public API: NCHW in, NCHW out, like the PyTorch module)
# ----------------------------------------------------------------------------
def double_conv_forward(x_nchw, params, *, tile_h=None, eps=1e-5):
    N, cin, H, W = x_nchw.shape
    w1, w2 = params["w1"], params["w2"]
    cmid, cout = w1.shape[-1], w2.shape[-1]
    cin_p = _round_up(cin, LANE)
    cmid_p = _round_up(cmid, LANE)
    cout_p = _round_up(cout, LANE)

    vmem_limit = _vmem_limit_bytes()
    if tile_h is None:
        max_rows = _auto_max_rows(max(cin_p, cmid_p), max(cmid_p, cout_p),
                                  vmem_limit)
        th = _pick_tile_h(H, W, max_rows)
    else:
        th = tile_h
    assert H % th == 0, "tile_h must divide H"
    assert (th * W) % 8 == 0 or th == H, "tile rows must be 8-aligned"
    # NOTE(v7x): both grid axes are 'parallel'; prefer N or H//tile_h even so
    # the 2 TensorCores split the grid evenly.

    # NCHW -> NHWC, channels padded lane-dense to 128, spatial flattened,
    # bf16: activations live as (N, H*W, Cpad) between kernels.
    x = jnp.transpose(x_nchw, (0, 2, 3, 1)).astype(jnp.float32)
    x = jnp.pad(x, ((0, 0), (0, 0), (0, 0), (0, cin_p - cin)))
    x = x.reshape(N, H * W, cin_p).astype(jnp.bfloat16)

    w1_t = _prep_weights(w1, cin_p, cmid_p)
    w2_t = _prep_weights(w2, cmid_p, cout_p)
    count = float(N * H * W)

    # conv1.  Conv bias is dropped: a per-channel constant is exactly cancelled
    # by the following training-mode BatchNorm's mean subtraction.
    one = jnp.ones((1, cin_p), jnp.float32)
    zero = jnp.zeros((1, cin_p), jnp.float32)
    halo_x = _make_halo(x, H, W, th)
    y1, st1 = _conv3x3_call(x, halo_x, w1_t, one, zero, H=H, W=W, tile_h=th,
                            apply_input_act=False, out_dtype=jnp.bfloat16,
                            vmem_limit=vmem_limit)
    sc1, sh1 = _bn_fold(st1, _pad_channels(params["gamma1"], cmid_p),
                        _pad_channels(params["beta1"], cmid_p), count, eps)

    # conv2 with BN1 + ReLU fused into its input staging (applied in f32 to the
    # bf16 intermediate y1).
    halo_y1 = _make_halo(y1, H, W, th)
    y2, st2 = _conv3x3_call(y1, halo_y1, w2_t, sc1, sh1, H=H, W=W, tile_h=th,
                            apply_input_act=True, out_dtype=jnp.float32,
                            vmem_limit=vmem_limit)
    sc2, sh2 = _bn_fold(st2, _pad_channels(params["gamma2"], cout_p),
                        _pad_channels(params["beta2"], cout_p), count, eps)

    # final BN2 + ReLU (separate pass is unavoidable: stats need all of y2).
    out = _bn_relu_call(y2.reshape(N * H * W, cout_p), sc2, sh2, vmem_limit)
    out = out.reshape(N, H, W, cout_p)[:, :, :, :cout]
    return jnp.transpose(out, (0, 3, 1, 2))   # NHWC -> NCHW (module API)


def init_params(key, in_channels, out_channels, mid_channels=None):
    if not mid_channels:
        mid_channels = out_channels
    k1, k2, k3, k4 = jax.random.split(key, 4)
    bound1 = 1.0 / np.sqrt(in_channels * 9)
    bound2 = 1.0 / np.sqrt(mid_channels * 9)
    return {
        "w1": jax.random.uniform(k1, (3, 3, in_channels, mid_channels),
                                 jnp.float32, -bound1, bound1),
        "b1": jax.random.uniform(k2, (mid_channels,), jnp.float32,
                                 -bound1, bound1),
        "gamma1": jnp.ones((mid_channels,), jnp.float32),
        "beta1": jnp.zeros((mid_channels,), jnp.float32),
        "w2": jax.random.uniform(k3, (3, 3, mid_channels, out_channels),
                                 jnp.float32, -bound2, bound2),
        "b2": jax.random.uniform(k4, (out_channels,), jnp.float32,
                                 -bound2, bound2),
        "gamma2": jnp.ones((out_channels,), jnp.float32),
        "beta2": jnp.zeros((out_channels,), jnp.float32),
    }


# Pure-JAX f32 reference (mirrors the PyTorch module, incl. the conv bias).
def _reference_forward(x_nchw, params, eps=1e-5):
    x = jnp.transpose(x_nchw, (0, 2, 3, 1))
    for (w, b, g, bt) in (
        (params["w1"], params["b1"], params["gamma1"], params["beta1"]),
        (params["w2"], params["b2"], params["gamma2"], params["beta2"]),
    ):
        x = jax.lax.conv_general_dilated(
            x, w, window_strides=(1, 1), padding="SAME",
            dimension_numbers=("NHWC", "HWIO", "NHWC"),
            precision=jax.lax.Precision.HIGHEST) + b
        mean = jnp.mean(x, axis=(0, 1, 2))
        var = jnp.var(x, axis=(0, 1, 2))
        x = (x - mean) / jnp.sqrt(var + eps) * g + bt
        x = jnp.maximum(x, 0.0)
    return jnp.transpose(x, (0, 3, 1, 2))


if __name__ == "__main__":
    key = jax.random.PRNGKey(0)
    kx, kp = jax.random.split(key)

    N, Cin, H, W = 2, 4, 16, 16
    Cout = 8
    x = jax.random.normal(kx, (N, Cin, H, W), dtype=jnp.float32)
    params = init_params(kp, Cin, Cout)

    ref = jax.block_until_ready(_reference_forward(x, params))

    # tile_h=8 exercises the multi-block H tiling + halo path (2 H blocks);
    # tile_h=None lets the wrapper auto-pick the tile (whole image here).
    # Tolerance is loosened vs. the f32 reference because the MXU operands and
    # the conv1->conv2 intermediate are bf16 (per the perf review).
    for th in (8, None):
        out = jax.block_until_ready(double_conv_forward(x, params, tile_h=th))
        assert out.shape == (N, Cout, H, W)
        np.testing.assert_allclose(np.asarray(out, dtype=np.float32),
                                   np.asarray(ref), rtol=5e-2, atol=5e-2)
    print("KERNEL_OK")
</pallas_src>

<mosaic_0001>
module attributes {stable_mosaic.version = 11 : i64} {
  func.func @_conv3x3_kernel(%arg0: i32, %arg1: i32, %arg2: memref<1x128x128xbf16, #tpu.memory_space<vmem>>, %arg3: memref<1x1x32x128xbf16, #tpu.memory_space<vmem>>, %arg4: memref<9x128x128xbf16, #tpu.memory_space<vmem>>, %arg5: memref<1x128xf32, #tpu.memory_space<vmem>>, %arg6: memref<1x128xf32, #tpu.memory_space<vmem>>, %arg7: memref<1x128x128xbf16, #tpu.memory_space<vmem>>, %arg8: memref<1x1x2x128xf32, #tpu.memory_space<vmem>>, %arg9: memref<176x128xbf16, #tpu.memory_space<vmem>>) attributes {dimension_semantics = [#tpu.dimension_semantics<parallel>, #tpu.dimension_semantics<parallel>], iteration_bounds = array<i64: 2, 2>, scalar_prefetch = 0 : i64, scratch_operands = 1 : i64, tpu.core_type = #tpu.core_type<tc>, window_params = [{transform_indices = @transform_0, window_bounds = array<i64: 1, 128, 128>}, {transform_indices = @transform_1, window_bounds = array<i64: 1, 1, 32, 128>}, {pipeline_mode = #tpu.pipeline_mode<synchronous>, transform_indices = @transform_2, window_bounds = array<i64: 9, 128, 128>}, {pipeline_mode = #tpu.pipeline_mode<synchronous>, transform_indices = @transform_3, window_bounds = array<i64: 1, 128>}, {pipeline_mode = #tpu.pipeline_mode<synchronous>, transform_indices = @transform_4, window_bounds = array<i64: 1, 128>}, {transform_indices = @transform_5, window_bounds = array<i64: 1, 128, 128>}, {transform_indices = @transform_6, window_bounds = array<i64: 1, 1, 2, 128>}]} {
    %c0 = arith.constant 0 : index
    %c0_0 = arith.constant 0 : index
    %c0_1 = arith.constant 0 : index
    %c0_2 = arith.constant 0 : index
    %0 = vector.load %arg3[%c0, %c0_0, %c0_1, %c0_2] : memref<1x1x32x128xbf16, #tpu.memory_space<vmem>>, vector<1x1x16x128xbf16>
    %1 = vector.shape_cast %0 : vector<1x1x16x128xbf16> to vector<16x128xbf16>
    %c8 = arith.constant 8 : index
    %c0_3 = arith.constant 0 : index
    %2 = vector.load %arg9[%c8, %c0_3] : memref<176x128xbf16, #tpu.memory_space<vmem>>, vector<16x128xbf16>
    tpu.vector_store %arg9[%c8, %c0_3], %1 {strides = array<i32>} : memref<176x128xbf16, #tpu.memory_space<vmem>>, vector<16x128xbf16>,
    %c0_4 = arith.constant 0 : index
    %c0_5 = arith.constant 0 : index
    %c0_6 = arith.constant 0 : index
    %3 = vector.load %arg2[%c0_4, %c0_5, %c0_6] : memref<1x128x128xbf16, #tpu.memory_space<vmem>>, vector<1x128x128xbf16>
    %4 = vector.shape_cast %3 : vector<1x128x128xbf16> to vector<128x128xbf16>
    %c24 = arith.constant 24 : index
    %c0_7 = arith.constant 0 : index
    %5 = vector.load %arg9[%c24, %c0_7] : memref<176x128xbf16, #tpu.memory_space<vmem>>, vector<128x128xbf16>
    tpu.vector_store %arg9[%c24, %c0_7], %4 {strides = array<i32>} : memref<176x128xbf16, #tpu.memory_space<vmem>>, vector<128x128xbf16>,
    %c0_8 = arith.constant 0 : index
    %c0_9 = arith.constant 0 : index
    %c16 = arith.constant 16 : index
    %c0_10 = arith.constant 0 : index
    %6 = vector.load %arg3[%c0_8, %c0_9, %c16, %c0_10] : memref<1x1x32x128xbf16, #tpu.memory_space<vmem>>, vector<1x1x16x128xbf16>
    %7 = vector.shape_cast %6 : vector<1x1x16x128xbf16> to vector<16x128xbf16>
    %c152 = arith.constant 152 : index
    %c0_11 = arith.constant 0 : index
    %8 = vector.load %arg9[%c152, %c0_11] : memref<176x128xbf16, #tpu.memory_space<vmem>>, vector<16x128xbf16>
    tpu.vector_store %arg9[%c152, %c0_11], %7 {strides = array<i32>} : memref<176x128xbf16, #tpu.memory_space<vmem>>, vector<16x128xbf16>,
    %9 = tpu.iota {dimensions = array<i32: 0>} : vector<128x1xi32>
    %c16_i32 = arith.constant 16 : i32
    %c0_i32 = arith.constant 0 : i32
    %10 = arith.cmpi eq, %c16_i32, %c0_i32 : i32
    %c1_i32 = arith.constant 1 : i32
    %11 = arith.select %10, %c1_i32, %c16_i32 : i32
    %12 = vector.broadcast %11 : i32 to vector<128x1xi32>
    %13 = arith.remsi %9, %12 : vector<128x1xi32>
    %c0_i32_12 = arith.constant 0 : i32
    %14 = vector.broadcast %c0_i32_12 : i32 to vector<128x1xi32>
    %15 = arith.cmpi ne, %13, %14 : vector<128x1xi32>
    %c0_i32_13 = arith.constant 0 : i32
    %16 = vector.broadcast %c0_i32_13 : i32 to vector<128x1xi32>
    %17 = arith.cmpi slt, %13, %16 : vector<128x1xi32>
    %c0_i32_14 = arith.constant 0 : i32
    %18 = arith.cmpi slt, %11, %c0_i32_14 : i32
    %19 = vector.broadcast %18 : i1 to vector<128x1xi1>
    %20 = vector.broadcast %19 : vector<128x1xi1> to vector<128x1xi1>
    %21 = arith.xori %17, %20 : vector<128x1xi1>
    %22 = arith.andi %21, %15 : vector<128x1xi1>
    %23 = vector.broadcast %11 : i32 to vector<128x1xi32>
    %24 = arith.addi %13, %23 : vector<128x1xi32>
    %25 = arith.select %22, %24, %13 : vector<128x1xi1>, vector<128x1xi32>
    %c0_i32_15 = arith.constant 0 : i32
    %26 = vector.broadcast %c0_i32_15 : i32 to vector<128x1xi32>
    %27 = arith.cmpi sgt, %25, %26 : vector<128x1xi32>
    %c15_i32 = arith.constant 15 : i32
    %28 = vector.broadcast %c15_i32 : i32 to vector<128x1xi32>
    %29 = arith.cmpi slt, %25, %28 : vector<128x1xi32>
    %c7 = arith.constant 7 : index
    %c0_16 = arith.constant 0 : index
    %30 = vector.load %arg9[%c7, %c0_16] : memref<176x128xbf16, #tpu.memory_space<vmem>>, vector<128x128xbf16>
    %c0_i32_17 = arith.constant 0 : i32
    %31 = arith.sitofp %c0_i32_17 : i32 to bf16
    %32 = vector.shape_cast %27 : vector<128x1xi1> to vector<128x1xi1>
    %33 = vector.broadcast %32 : vector<128x1xi1> to vector<128x128xi1>
    %34 = vector.broadcast %31 : bf16 to vector<128x128xbf16>
    %35 = arith.select %33, %30, %34 : vector<128x128xi1>, vector<128x128xbf16>
    %c0_18 = arith.constant 0 : index
    %c0_19 = arith.constant 0 : index
    %c0_20 = arith.constant 0 : index
    %36 = vector.load %arg4[%c0_18, %c0_19, %c0_20] : memref<9x128x128xbf16, #tpu.memory_space<vmem>>, vector<1x128x128xbf16>
    %37 = vector.shape_cast %36 : vector<1x128x128xbf16> to vector<128x128xbf16>
    %cst = arith.constant dense<0.000000e+00> : vector<128x128xf32>
    %38 = tpu.matmul %35, %37, %cst {dimension_numbers = #tpu.dot_dimension_numbers<[1], [0], [0], [1], [0, 0, 1, 1], [], []>} : vector<128x128xbf16>, vector<128x128xbf16>, vector<128x128xf32> -> vector<128x128xf32>
    %c8_21 = arith.constant 8 : index
    %c0_22 = arith.constant 0 : index
    %39 = vector.load %arg9[%c8_21, %c0_22] : memref<176x128xbf16, #tpu.memory_space<vmem>>, vector<128x128xbf16>
    %c1 = arith.constant 1 : index
    %c0_23 = arith.constant 0 : index
    %c0_24 = arith.constant 0 : index
    %40 = vector.load %arg4[%c1, %c0_23, %c0_24] : memref<9x128x128xbf16, #tpu.memory_space<vmem>>, vector<1x128x128xbf16>
    %41 = vector.shape_cast %40 : vector<1x128x128xbf16> to vector<128x128xbf16>
    %cst_25 = arith.constant dense<0.000000e+00> : vector<128x128xf32>
    %42 = tpu.matmul %39, %41, %cst_25 {dimension_numbers = #tpu.dot_dimension_numbers<[1], [0], [0], [1], [0, 0, 1, 1], [], []>} : vector<128x128xbf16>, vector<128x128xbf16>, vector<128x128xf32> -> vector<128x128xf32>
    %43 = arith.addf %38, %42 : vector<128x128xf32>
    %c9 = arith.constant 9 : index
    %c0_26 = arith.constant 0 : index
    %44 = vector.load %arg9[%c9, %c0_26] : memref<176x128xbf16, #tpu.memory_space<vmem>>, vector<128x128xbf16>
    %c0_i32_27 = arith.constant 0 : i32
    %45 = arith.sitofp %c0_i32_27 : i32 to bf16
    %46 = vector.shape_cast %29 : vector<128x1xi1> to vector<128x1xi1>
    %47 = vector.broadcast %46 : vector<128x1xi1> to vector<128x128xi1>
    %48 = vector.broadcast %45 : bf16 to vector<128x128xbf16>
    %49 = arith.select %47, %44, %48 : vector<128x128xi1>, vector<128x128xbf16>
    %c2 = arith.constant 2 : index
    %c0_28 = arith.constant 0 : index
    %c0_29 = arith.constant 0 : index
    %50 = vector.load %arg4[%c2, %c0_28, %c0_29] : memref<9x128x128xbf16, #tpu.memory_space<vmem>>, vector<1x128x128xbf16>
    %51 = vector.shape_cast %50 : vector<1x128x128xbf16> to vector<128x128xbf16>
    %cst_30 = arith.constant dense<0.000000e+00> : vector<128x128xf32>
    %52 = tpu.matmul %49, %51, %cst_30 {dimension_numbers = #tpu.dot_dimension_numbers<[1], [0], [0], [1], [0, 0, 1, 1], [], []>} : vector<128x128xbf16>, vector<128x128xbf16>, vector<128x128xf32> -> vector<128x128xf32>
    %53 = arith.addf %43, %52 : vector<128x128xf32>
    %c23 = arith.constant 23 : index
    %c0_31 = arith.constant 0 : index
    %54 = vector.load %arg9[%c23, %c0_31] : memref<176x128xbf16, #tpu.memory_space<vmem>>, vector<128x128xbf16>
    %c0_i32_32 = arith.constant 0 : i32
    %55 = arith.sitofp %c0_i32_32 : i32 to bf16
    %56 = vector.shape_cast %27 : vector<128x1xi1> to vector<128x1xi1>
    %57 = vector.broadcast %56 : vector<128x1xi1> to vector<128x128xi1>
    %58 = vector.broadcast %55 : bf16 to vector<128x128xbf16>
    %59 = arith.select %57, %54, %58 : vector<128x128xi1>, vector<128x128xbf16>
    %c3 = arith.constant 3 : index
    %c0_33 = arith.constant 0 : index
    %c0_34 = arith.constant 0 : index
    %60 = vector.load %arg4[%c3, %c0_33, %c0_34] : memref<9x128x128xbf16, #tpu.memory_space<vmem>>, vector<1x128x128xbf16>
    %61 = vector.shape_cast %60 : vector<1x128x128xbf16> to vector<128x128xbf16>
    %cst_35 = arith.constant dense<0.000000e+00> : vector<128x128xf32>
    %62 = tpu.matmul %59, %61, %cst_35 {dimension_numbers = #tpu.dot_dimension_numbers<[1], [0], [0], [1], [0, 0, 1, 1], [], []>} : vector<128x128xbf16>, vector<128x128xbf16>, vector<128x128xf32> -> vector<128x128xf32>
    %63 = arith.addf %53, %62 : vector<128x128xf32>
    %c24_36 = arith.constant 24 : index
    %c0_37 = arith.constant 0 : index
    %64 = vector.load %arg9[%c24_36, %c0_37] : memref<176x128xbf16, #tpu.memory_space<vmem>>, vector<128x128xbf16>
    %c4 = arith.constant 4 : index
    %c0_38 = arith.constant 0 : index
    %c0_39 = arith.constant 0 : index
    %65 = vector.load %arg4[%c4, %c0_38, %c0_39] : memref<9x128x128xbf16, #tpu.memory_space<vmem>>, vector<1x128x128xbf16>
    %66 = vector.shape_cast %65 : vector<1x128x128xbf16> to vector<128x128xbf16>
    %cst_40 = arith.constant dense<0.000000e+00> : vector<128x128xf32>
    %67 = tpu.matmul %64, %66, %cst_40 {dimension_numbers = #tpu.dot_dimension_numbers<[1], [0], [0], [1], [0, 0, 1, 1], [], []>} : vector<128x128xbf16>, vector<128x128xbf16>, vector<128x128xf32> -> vector<128x128xf32>
    %68 = arith.addf %63, %67 : vector<128x128xf32>
    %c25 = arith.constant 25 : index
    %c0_41 = arith.constant 0 : index
    %69 = vector.load %arg9[%c25, %c0_41] : memref<176x128xbf16, #tpu.memory_space<vmem>>, vector<128x128xbf16>
    %c0_i32_42 = arith.constant 0 : i32
    %70 = arith.sitofp %c0_i32_42 : i32 to bf16
    %71 = vector.shape_cast %29 : vector<128x1xi1> to vector<128x1xi1>
    %72 = vector.broadcast %71 : vector<128x1xi1> to vector<128x128xi1>
    %73 = vector.broadcast %70 : bf16 to vector<128x128xbf16>
    %74 = arith.select %72, %69, %73 : vector<128x128xi1>, vector<128x128xbf16>
    %c5 = arith.constant 5 : index
    %c0_43 = arith.constant 0 : index
    %c0_44 = arith.constant 0 : index
    %75 = vector.load %arg4[%c5, %c0_43, %c0_44] : memref<9x128x128xbf16, #tpu.memory_space<vmem>>, vector<1x128x128xbf16>
    %76 = vector.shape_cast %75 : vector<1x128x128xbf16> to vector<128x128xbf16>
    %cst_45 = arith.constant dense<0.000000e+00> : vector<128x128xf32>
    %77 = tpu.matmul %74, %76, %cst_45 {dimension_numbers = #tpu.dot_dimension_numbers<[1], [0], [0], [1], [0, 0, 1, 1], [], []>} : vector<128x128xbf16>, vector<128x128xbf16>, vector<128x128xf32> -> vector<128x128xf32>
    %78 = arith.addf %68, %77 : vector<128x128xf32>
    %c39 = arith.constant 39 : index
    %c0_46 = arith.constant 0 : index
    %79 = vector.load %arg9[%c39, %c0_46] : memref<176x128xbf16, #tpu.memory_space<vmem>>, vector<128x128xbf16>
    %c0_i32_47 = arith.constant 0 : i32
    %80 = arith.sitofp %c0_i32_47 : i32 to bf16
    %81 = vector.shape_cast %27 : vector<128x1xi1> to vector<128x1xi1>
    %82 = vector.broadcast %81 : vector<128x1xi1> to vector<128x128xi1>
    %83 = vector.broadcast %80 : bf16 to vector<128x128xbf16>
    %84 = arith.select %82, %79, %83 : vector<128x128xi1>, vector<128x128xbf16>
    %c6 = arith.constant 6 : index
    %c0_48 = arith.constant 0 : index
    %c0_49 = arith.constant 0 : index
    %85 = vector.load %arg4[%c6, %c0_48, %c0_49] : memref<9x128x128xbf16, #tpu.memory_space<vmem>>, vector<1x128x128xbf16>
    %86 = vector.shape_cast %85 : vector<1x128x128xbf16> to vector<128x128xbf16>
    %cst_50 = arith.constant dense<0.000000e+00> : vector<128x128xf32>
    %87 = tpu.matmul %84, %86, %cst_50 {dimension_numbers = #tpu.dot_dimension_numbers<[1], [0], [0], [1], [0, 0, 1, 1], [], []>} : vector<128x128xbf16>, vector<128x128xbf16>, vector<128x128xf32> -> vector<128x128xf32>
    %88 = arith.addf %78, %87 : vector<128x128xf32>
    %c40 = arith.constant 40 : index
    %c0_51 = arith.constant 0 : index
    %89 = vector.load %arg9[%c40, %c0_51] : memref<176x128xbf16, #tpu.memory_space<vmem>>, vector<128x128xbf16>
    %c7_52 = arith.constant 7 : index
    %c0_53 = arith.constant 0 : index
    %c0_54 = arith.constant 0 : index
    %90 = vector.load %arg4[%c7_52, %c0_53, %c0_54] : memref<9x128x128xbf16, #tpu.memory_space<vmem>>, vector<1x128x128xbf16>
    %91 = vector.shape_cast %90 : vector<1x128x128xbf16> to vector<128x128xbf16>
    %cst_55 = arith.constant dense<0.000000e+00> : vector<128x128xf32>
    %92 = tpu.matmul %89, %91, %cst_55 {dimension_numbers = #tpu.dot_dimension_numbers<[1], [0], [0], [1], [0, 0, 1, 1], [], []>} : vector<128x128xbf16>, vector<128x128xbf16>, vector<128x128xf32> -> vector<128x128xf32>
    %93 = arith.addf %88, %92 : vector<128x128xf32>
    %c41 = arith.constant 41 : index
    %c0_56 = arith.constant 0 : index
    %94 = vector.load %arg9[%c41, %c0_56] : memref<176x128xbf16, #tpu.memory_space<vmem>>, vector<128x128xbf16>
    %c0_i32_57 = arith.constant 0 : i32
    %95 = arith.sitofp %c0_i32_57 : i32 to bf16
    %96 = vector.shape_cast %29 : vector<128x1xi1> to vector<128x1xi1>
    %97 = vector.broadcast %96 : vector<128x1xi1> to vector<128x128xi1>
    %98 = vector.broadcast %95 : bf16 to vector<128x128xbf16>
    %99 = arith.select %97, %94, %98 : vector<128x128xi1>, vector<128x128xbf16>
    %c8_58 = arith.constant 8 : index
    %c0_59 = arith.constant 0 : index
    %c0_60 = arith.constant 0 : index
    %100 = vector.load %arg4[%c8_58, %c0_59, %c0_60] : memref<9x128x128xbf16, #tpu.memory_space<vmem>>, vector<1x128x128xbf16>
    %101 = vector.shape_cast %100 : vector<1x128x128xbf16> to vector<128x128xbf16>
    %cst_61 = arith.constant dense<0.000000e+00> : vector<128x128xf32>
    %102 = tpu.matmul %99, %101, %cst_61 {dimension_numbers = #tpu.dot_dimension_numbers<[1], [0], [0], [1], [0, 0, 1, 1], [], []>} : vector<128x128xbf16>, vector<128x128xbf16>, vector<128x128xf32> -> vector<128x128xf32>
    %103 = arith.addf %93, %102 : vector<128x128xf32>
    %104 = arith.truncf %103 : vector<128x128xf32> to vector<128x128xbf16>
    %c0_62 = arith.constant 0 : index
    %c0_63 = arith.constant 0 : index
    %c0_64 = arith.constant 0 : index
    %105 = vector.load %arg7[%c0_62, %c0_63, %c0_64] : memref<1x128x128xbf16, #tpu.memory_space<vmem>>, vector<1x128x128xbf16>
    %106 = vector.shape_cast %105 : vector<1x128x128xbf16> to vector<128x128xbf16>
    %107 = vector.shape_cast %104 : vector<128x128xbf16> to vector<1x128x128xbf16>
    tpu.vector_store %arg7[%c0_62, %c0_63, %c0_64], %107 {strides = array<i32>} : memref<1x128x128xbf16, #tpu.memory_space<vmem>>, vector<1x128x128xbf16>,
    %cst_65 = arith.constant dense<0.000000e+00> : vector<128xf32>
    %108 = vector.multi_reduction <add>, %103, %cst_65 [0] : vector<128x128xf32> to vector<128xf32>
    %109 = vector.shape_cast %108 : vector<128xf32> to vector<1x128xf32>
    %110 = arith.mulf %103, %103 : vector<128x128xf32>
    %cst_66 = arith.constant dense<0.000000e+00> : vector<128xf32>
    %111 = vector.multi_reduction <add>, %110, %cst_66 [0] : vector<128x128xf32> to vector<128xf32>
    %112 = vector.shape_cast %111 : vector<128xf32> to vector<1x128xf32>
    %113 = tpu.concatenate %109, %112 in 0 : vector<1x128xf32>, vector<1x128xf32> -> vector<2x128xf32>
    %c0_67 = arith.constant 0 : index
    %c0_68 = arith.constant 0 : index
    %c0_69 = arith.constant 0 : index
    %c0_70 = arith.constant 0 : index
    %114 = vector.load %arg8[%c0_67, %c0_68, %c0_69, %c0_70] : memref<1x1x2x128xf32, #tpu.memory_space<vmem>>, vector<1x1x2x128xf32>
    %115 = vector.shape_cast %114 : vector<1x1x2x128xf32> to vector<2x128xf32>
    %116 = vector.shape_cast %113 : vector<2x128xf32> to vector<1x1x2x128xf32>
    tpu.vector_store %arg8[%c0_67, %c0_68, %c0_69, %c0_70], %116 {strides = array<i32>} : memref<1x1x2x128xf32, #tpu.memory_space<vmem>>, vector<1x1x2x128xf32>,
    return
  }
  func.func @transform_0(%arg0: i32, %arg1: i32) -> (i32, i32, i32) {
    %c0_i32 = arith.constant 0 : i32
    %c0_i32_0 = arith.constant 0 : i32
    return %arg0, %arg1, %c0_i32 : i32, i32, i32
  }
  func.func @transform_1(%arg0: i32, %arg1: i32) -> (i32, i32, i32, i32) {
    %c0_i32 = arith.constant 0 : i32
    %c0_i32_0 = arith.constant 0 : i32
    %c0_i32_1 = arith.constant 0 : i32
    return %arg0, %arg1, %c0_i32, %c0_i32_0 : i32, i32, i32, i32
  }
  func.func @transform_2(%arg0: i32, %arg1: i32) -> (i32, i32, i32) {
    %c0_i32 = arith.constant 0 : i32
    %c0_i32_0 = arith.constant 0 : i32
    %c0_i32_1 = arith.constant 0 : i32
    %c0_i32_2 = arith.constant 0 : i32
    return %c0_i32, %c0_i32_0, %c0_i32_1 : i32, i32, i32
  }
  func.func @transform_3(%arg0: i32, %arg1: i32) -> (i32, i32) {
    %c0_i32 = arith.constant 0 : i32
    %c0_i32_0 = arith.constant 0 : i32
    %c0_i32_1 = arith.constant 0 : i32
    return %c0_i32, %c0_i32_0 : i32, i32
  }
  func.func @transform_4(%arg0: i32, %arg1: i32) -> (i32, i32) {
    %c0_i32 = arith.constant 0 : i32
    %c0_i32_0 = arith.constant 0 : i32
    %c0_i32_1 = arith.constant 0 : i32
    return %c0_i32, %c0_i32_0 : i32, i32
  }
  func.func @transform_5(%arg0: i32, %arg1: i32) -> (i32, i32, i32) {
    %c0_i32 = arith.constant 0 : i32
    %c0_i32_0 = arith.constant 0 : i32
    return %arg0, %arg1, %c0_i32 : i32, i32, i32
  }
  func.func @transform_6(%arg0: i32, %arg1: i32) -> (i32, i32, i32, i32) {
    %c0_i32 = arith.constant 0 : i32
    %c0_i32_0 = arith.constant 0 : i32
    %c0_i32_1 = arith.constant 0 : i32
    return %arg0, %arg1, %c0_i32, %c0_i32_0 : i32, i32, i32, i32
  }
}

</mosaic_0001>

<llo_original>
// kernel: tpu_custom_call.1
$region0: #{tpu_custom_call.1}
  #allocation0 [shape = 'u32[]', space=smem, size = 0x4, offset = 0x4, fixed_abs, tag = 'smem constant byte address 0x4 - core index']
  #allocation1 [shape = 'u32[144,128]{1,0:T(1,128)}', space=vmem, size = 0x12000, scoped, tag = 'internal scratch']
  #allocation2 [shape = 'bf16[176,128]{1,0:T(16,128)(2,1)}', space=vmem, size = 0xb000, scoped, tag = 'scratch operand']
  %s0 = inlined_call_operand.hbm [shape: bf16[2,256,128], index: 0, kind: input, shape index: {}]
  %s1 = inlined_call_operand.hbm [shape: bf16[2,2,32,128], index: 1, kind: input, shape index: {}]
  %s2 = inlined_call_operand.hbm [shape: bf16[9,128,128], index: 2, kind: input, shape index: {}]
  %s3 = inlined_call_operand.vmem [shape: f32[1,128], index: 3, kind: input, shape index: {}]
  %s4 = inlined_call_operand.vmem [shape: f32[1,128], index: 4, kind: input, shape index: {}]
  %s5 = inlined_call_operand.hbm [shape: bf16[2,256,128], index: 5, kind: output, shape index: {0}]
  %s6 = inlined_call_operand.hbm [shape: f32[2,2,2,128], index: 6, kind: output, shape index: {1}]
  %7 = xla_tuple %s5, %s6
  %s8 = sld [smem:[#allocation0]]
  $region73: #{tpu_custom_call.1} parent=0
    _
  %s10 = ssub.s32 1, %s8
  %s11 = scalar_select 0, %s10, %s8
  $region1: #{tpu_custom_call.1} parent=0
    #allocation3 [shape = 'u8[65536]{0}', space=vmem, size = 0x10000, scoped, tag = 'input window, operand 0']
    #allocation4 [shape = 's32[2]{0}', space=sflag, size = 0x8, scoped, tag = 'scoped memory for tpu_custom_call.1']
    #allocation5 [shape = 's32[2]{0}', space=sflag, size = 0x8, scoped, tag = 'scoped memory for tpu_custom_call.1']
    #allocation6 [shape = 'u8[16384]{0}', space=vmem, size = 0x4000, scoped, tag = 'input window, operand 1']
    #allocation7 [shape = 's32[2]{0}', space=sflag, size = 0x8, scoped, tag = 'scoped memory for tpu_custom_call.1']
    #allocation8 [shape = 'u8[294912]{0}', space=vmem, size = 0x48000, scoped, tag = 'input window, operand 2, single buffered']
    #allocation9 [shape = 'u8[65536]{0}', space=vmem, size = 0x10000, scoped, tag = 'output window, operand 0']
    #allocation10 [shape = 'u8[2048]{0}', space=vmem, size = 0x800, scoped, tag = 'output window, operand 1']
    #allocation11 [shape = 's32[2]{0}', space=sflag, size = 0x8, scoped, tag = 'scoped memory for tpu_custom_call.1']
    %12 = vsyncpa [#allocation4], 0
    %s13 = scalar_lea.sflag [#allocation4], 1
    %14 = vsyncpa %s13, 0
    %15 = vsyncpa [#allocation7], 0
    %s16 = scalar_lea.sflag [#allocation7], 1
    %17 = vsyncpa %s16, 0
    %18 = vsyncpa [#allocation5], 0
    %s19 = scalar_lea.sflag [#allocation5], 1
    %20 = vsyncpa %s19, 0
    %21 = vsyncpa [#allocation11], 0
    %s22 = scalar_lea.sflag [#allocation11], 1
    %23 = vsyncpa %s22, 0
    loop: start=0, step=1, limit=6
    $region2: #{tpu_custom_call.1} parent=1 // loop_pre_header
      _
    $region3: #{tpu_custom_call.1} parent=1 // loop_header
      %s25 = sphi 0, %s29
      %p26 = scmp.ge.s32.totalorder %s25, 6
      %s32 = sphi 0, %s44
      %s33 = sphi 0, %s40
      %s34 = sphi 0, %s32
      %s35 = sphi 0, %s33
      %s36 = sphi 0, %s34
      %s37 = sphi 0, %s35
      %s49 = sphi 0, %s51
      %s52 = sphi 0, %s49
      %s53 = sphi 0, %s52
      %s69 = sphi 0, %s53
      %s77 = sphi 0, %s79
      %s80 = sphi 0, %s77
      %s81 = sphi 0, %s80
      %s97 = sphi 0, %s81
      %s101 = sphi 0, %s101
      %s103 = sphi 0, %s101
      %s104 = sphi 0, %s103
      %s118 = sphi 0, %s104
      %s122 = sphi 0, %s122
      %s124 = sphi 0, %s122
      %s125 = sphi 0, %s124
      %s139 = sphi 0, %s125
      %s143 = sphi 0, %s143
      %s145 = sphi 0, %s143
      %s146 = sphi 0, %s145
      %s160 = sphi 0, %s146
      %s168 = sphi 0, %s170
      %s171 = sphi 0, %s168
      %s172 = sphi 0, %s171
      %s188 = sphi 0, %s172
      %s196 = sphi 0, %s198
      %s199 = sphi 0, %s196
      %s200 = sphi 0, %s199
      %s216 = sphi 0, %s200
    $region4: #{tpu_custom_call.1} parent=1 // loop_header_branch
      %28 = sbr.rel (%p26) target = $region8
    $region5: #{tpu_custom_call.1} parent=1 // loop_body
      %s30 = ssub.s32 %s25, 1
      %s31 = ssub.s32 %s25, 2
      %s38 = sadd.s32 1, %s33
      %p39 = scmp.ge.s32.totalorder %s38, 2
      %s40 = scalar_select %p39, 0, %s38
      %s41 = sadd.s32 1, %s32
      %s42 = scalar_select %p39, %s41, %s32
      %p43 = scmp.ge.s32.totalorder %s42, 2
      %s44 = scalar_select %p43, 0, %s42
      %s45 = ssub.s32 %s32, %s44
      %s46 = ssub.s32 %s33, %s40
      %s47 = sor.u32 %s45, %s46
      %p48 = scmp.eq.s32.totalorder %s47, 0
      %s50 = sadd.s32 %s49, 1
      %s51 = scalar_select %p48, %s49, %s50
      %p54 = pneg %p48
      %p55 = scmp.eq.s32.totalorder %s25, 3
      %p56 = por %p54, %p55
      %p57 = scmp.ne.s32.totalorder %s49, %s52
      %p58 = scmp.eq.s32.totalorder %s25, 0
      %p59 = por %p57, %p58
      %p60 = scmp.ne.s32.totalorder %s49, %s52
      %p61 = scmp.eq.s32.totalorder %s30, 3
      %p62 = por %p60, %p61
      %p63 = scmp.ne.s32.totalorder %s52, %s53
      %p64 = scmp.eq.s32.totalorder %s30, 0
      %p65 = por %p63, %p64
      %p66 = scmp.ne.s32.totalorder %s52, %s53
      %p67 = scmp.eq.s32.totalorder %s31, 3
      %p68 = por %p66, %p67
      %p70 = scmp.ne.s32.totalorder %s53, %s69
      %p71 = scmp.eq.s32.totalorder %s31, 0
      %p72 = por %p70, %p71
      %s73 = ssub.s32 %s32, %s44
      %s74 = ssub.s32 %s33, %s40
      %s75 = sor.u32 %s73, %s74
      %p76 = scmp.eq.s32.totalorder %s75, 0
      %s78 = sadd.s32 %s77, 1
      %s79 = scalar_select %p76, %s77, %s78
      %p82 = pneg %p76
      %p83 = scmp.eq.s32.totalorder %s25, 3
      %p84 = por %p82, %p83
      %p85 = scmp.ne.s32.totalorder %s77, %s80
      %p86 = scmp.eq.s32.totalorder %s25, 0
      %p87 = por %p85, %p86
      %p88 = scmp.ne.s32.totalorder %s77, %s80
      %p89 = scmp.eq.s32.totalorder %s30, 3
      %p90 = por %p88, %p89
      %p91 = scmp.ne.s32.totalorder %s80, %s81
      %p92 = scmp.eq.s32.totalorder %s30, 0
      %p93 = por %p91, %p92
      %p94 = scmp.ne.s32.totalorder %s80, %s81
      %p95 = scmp.eq.s32.totalorder %s31, 3
      %p96 = por %p94, %p95
      %p98 = scmp.ne.s32.totalorder %s81, %s97
      %p99 = scmp.eq.s32.totalorder %s31, 0
      %p100 = por %p98, %p99
      %s102 = sadd.s32 %s101, 1
      %p105 = scmp.eq.s32.totalorder %s25, 3
      %p106 = scmp.ne.s32.totalorder %s101, %s103
      %p107 = scmp.eq.s32.totalorder %s25, 0
      %p108 = por %p106, %p107
      %p109 = scmp.ne.s32.totalorder %s101, %s103
      %p110 = scmp.eq.s32.totalorder %s30, 3
      %p111 = por %p109, %p110
      %p112 = scmp.ne.s32.totalorder %s103, %s104
      %p113 = scmp.eq.s32.totalorder %s30, 0
      %p114 = por %p112, %p113
      %p115 = scmp.ne.s32.totalorder %s103, %s104
      %p116 = scmp.eq.s32.totalorder %s31, 3
      %p117 = por %p115, %p116
      %p119 = scmp.ne.s32.totalorder %s104, %s118
      %p120 = scmp.eq.s32.totalorder %s31, 0
      %p121 = por %p119, %p120
      %s123 = sadd.s32 %s122, 1
      %p126 = scmp.eq.s32.totalorder %s25, 3
      %p127 = scmp.ne.s32.totalorder %s122, %s124
      %p128 = scmp.eq.s32.totalorder %s25, 0
      %p129 = por %p127, %p128
      %p130 = scmp.ne.s32.totalorder %s122, %s124
      %p131 = scmp.eq.s32.totalorder %s30, 3
      %p132 = por %p130, %p131
      %p133 = scmp.ne.s32.totalorder %s124, %s125
      %p134 = scmp.eq.s32.totalorder %s30, 0
      %p135 = por %p133, %p134
      %p136 = scmp.ne.s32.totalorder %s124, %s125
      %p137 = scmp.eq.s32.totalorder %s31, 3
      %p138 = por %p136, %p137
      %p140 = scmp.ne.s32.totalorder %s125, %s139
      %p141 = scmp.eq.s32.totalorder %s31, 0
      %p142 = por %p140, %p141
      %s144 = sadd.s32 %s143, 1
      %p147 = scmp.eq.s32.totalorder %s25, 3
      %p148 = scmp.ne.s32.totalorder %s143, %s145
      %p149 = scmp.eq.s32.totalorder %s25, 0
      %p150 = por %p148, %p149
      %p151 = scmp.ne.s32.totalorder %s143, %s145
      %p152 = scmp.eq.s32.totalorder %s30, 3
      %p153 = por %p151, %p152
      %p154 = scmp.ne.s32.totalorder %s145, %s146
      %p155 = scmp.eq.s32.totalorder %s30, 0
      %p156 = por %p154, %p155
      %p157 = scmp.ne.s32.totalorder %s145, %s146
      %p158 = scmp.eq.s32.totalorder %s31, 3
      %p159 = por %p157, %p158
      %p161 = scmp.ne.s32.totalorder %s146, %s160
      %p162 = scmp.eq.s32.totalorder %s31, 0
      %p163 = por %p161, %p162
      %s164 = ssub.s32 %s32, %s44
      %s165 = ssub.s32 %s33, %s40
      %s166 = sor.u32 %s164, %s165
      %p167 = scmp.eq.s32.totalorder %s166, 0
      %s169 = sadd.s32 %s168, 1
      %s170 = scalar_select %p167, %s168, %s169
      %p173 = pneg %p167
      %p174 = scmp.eq.s32.totalorder %s25, 3
      %p175 = por %p173, %p174
      %p176 = scmp.ne.s32.totalorder %s168, %s171
      %p177 = scmp.eq.s32.totalorder %s25, 0
      %p178 = por %p176, %p177
      %p179 = scmp.ne.s32.totalorder %s168, %s171
      %p180 = scmp.eq.s32.totalorder %s30, 3
      %p181 = por %p179, %p180
      %p182 = scmp.ne.s32.totalorder %s171, %s172
      %p183 = scmp.eq.s32.totalorder %s30, 0
      %p184 = por %p182, %p183
      %p185 = scmp.ne.s32.totalorder %s171, %s172
      %p186 = scmp.eq.s32.totalorder %s31, 3
      %p187 = por %p185, %p186
      %p189 = scmp.ne.s32.totalorder %s172, %s188
      %p190 = scmp.eq.s32.totalorder %s31, 0
      %p191 = por %p189, %p190
      %s192 = ssub.s32 %s32, %s44
      %s193 = ssub.s32 %s33, %s40
      %s194 = sor.u32 %s192, %s193
      %p195 = scmp.eq.s32.totalorder %s194, 0
      %s197 = sadd.s32 %s196, 1
      %s198 = scalar_select %p195, %s196, %s197
      %p201 = pneg %p195
      %p202 = scmp.eq.s32.totalorder %s25, 3
      %p203 = por %p201, %p202
      %p204 = scmp.ne.s32.totalorder %s196, %s199
      %p205 = scmp.eq.s32.totalorder %s25, 0
      %p206 = por %p204, %p205
      %p207 = scmp.ne.s32.totalorder %s196, %s199
      %p208 = scmp.eq.s32.totalorder %s30, 3
      %p209 = por %p207, %p208
      %p210 = scmp.ne.s32.totalorder %s199, %s200
      %p211 = scmp.eq.s32.totalorder %s30, 0
      %p212 = por %p210, %p211
      %p213 = scmp.ne.s32.totalorder %s199, %s200
      %p214 = scmp.eq.s32.totalorder %s31, 3
      %p215 = por %p213, %p214
      %p217 = scmp.ne.s32.totalorder %s200, %s216
      %p218 = scmp.eq.s32.totalorder %s31, 0
      %p219 = por %p217, %p218
      %p220 = scmp.le.s32.totalorder 1, %s25
      %p221 = scmp.lt.s32.totalorder %s25, 5
      %p222 = pnand %p220, %p221
      %p223 = pneg %p222
      // Predicated region
      $region9: #{tpu_custom_call.1} parent=5 // pred_check
        _
      $region10: #{tpu_custom_call.1} parent=5 // pred_check_branch
        %225 = sbr.rel (%p222) target = $region12
      $region11: #{tpu_custom_call.1} parent=5 // pred_region
        %s226 = ssub.s32 %s25, 1
        // Predicated region
        $region13: #{tpu_custom_call.1} parent=11 // pred_check
          %p227 = pneg %p114
        $region14: #{tpu_custom_call.1} parent=11 // pred_check_branch
          %229 = sbr.rel (%p227) target = $region16
        $region15: #{tpu_custom_call.1} parent=11 // pred_region
          %s231 = ssub.s32 9216, 9216
          %232 = vsyncadd [#allocation7], %s231
          %s233 = sshll.u32 [#allocation8], 4
          %s234 = int_to_ptr.vmem [resolvable:$true] %s233
          %239 = dma.hbm_to_vmem [thread:$0]  %s2, 9216, %s234, [#allocation7], 64, 64, 4
        $region16: #{tpu_custom_call.1} parent=11 // pred_fallthru
          _
        // Predicated region
        $region17: #{tpu_custom_call.1} parent=11 // pred_check
          %p240 = pneg %p135
        $region18: #{tpu_custom_call.1} parent=11 // pred_check_branch
          %242 = sbr.rel (%p240) target = $region20
        $region19: #{tpu_custom_call.1} parent=11 // pred_region
          _
        $region20: #{tpu_custom_call.1} parent=11 // pred_fallthru
          _
        // Predicated region
        $region21: #{tpu_custom_call.1} parent=11 // pred_check
          %p243 = pneg %p156
        $region22: #{tpu_custom_call.1} parent=11 // pred_check_branch
          %245 = sbr.rel (%p243) target = $region24
        $region23: #{tpu_custom_call.1} parent=11 // pred_region
          _
        $region24: #{tpu_custom_call.1} parent=11 // pred_fallthru
          _
      $region12: #{tpu_custom_call.1} parent=5 // pred_fallthru
        _
      %p246 = scmp.lt.s32.totalorder %s25, 4
      // Predicated region
      $region25: #{tpu_custom_call.1} parent=5 // pred_check
        %p247 = pneg %p246
      $region26: #{tpu_custom_call.1} parent=5 // pred_check_branch
        %249 = sbr.rel (%p247) target = $region28
      $region27: #{tpu_custom_call.1} parent=5 // pred_region
        // Predicated region
        $region29: #{tpu_custom_call.1} parent=27 // pred_check
          %p250 = pneg %p59
        $region30: #{tpu_custom_call.1} parent=27 // pred_check_branch
          %252 = sbr.rel (%p250) target = $region32
        $region31: #{tpu_custom_call.1} parent=27 // pred_region
          %s253 = sand.u32 %s49, 1
          %s254 = scalar_lea.sflag [#allocation4], %s253
          %s255 = sand.u32 %s49, 1
          %s256 = smul.addr %s255, 64
          %s257 = scalar_lea.vmem [#allocation3], %s256
          %s258 = smul.u32 16, %s33
          %s260 = ssub.s32 1024, 1024
          %261 = vsyncadd %s254, %s260
          %s262 = smul.addr %s32, 32
          %s263 = sadd.s32 %s258, %s262
          %s264 = smul.addr %s263, 64
          %s265 = scalar_lea.hbm %s0, %s264
          %s266 = sshll.u32 %s257, 4
          %s267 = int_to_ptr.vmem [resolvable:$true] %s266
          %272 = dma.hbm_to_vmem [thread:$0]  %s265, 1024, %s267, %s254, 64, 64, 4
        $region32: #{tpu_custom_call.1} parent=27 // pred_fallthru
          _
        // Predicated region
        $region33: #{tpu_custom_call.1} parent=27 // pred_check
          %p273 = pneg %p87
        $region34: #{tpu_custom_call.1} parent=27 // pred_check_branch
          %275 = sbr.rel (%p273) target = $region36
        $region35: #{tpu_custom_call.1} parent=27 // pred_region
          %s276 = sand.u32 %s25, 1
          %s277 = scalar_lea.sflag [#allocation7], %s276
          %s278 = sand.u32 %s77, 1
          %s279 = smul.addr %s278, 16
          %s280 = scalar_lea.vmem [#allocation6], %s279
          %s282 = ssub.s32 256, 256
          %283 = vsyncadd %s277, %s282
          %s284 = smul.addr %s33, 4
          %s285 = smul.addr %s32, 8
          %s286 = sadd.s32 %s284, %s285
          %s287 = smul.addr %s286, 64
          %s288 = scalar_lea.hbm %s1, %s287
          %s289 = sshll.u32 %s280, 4
          %s290 = int_to_ptr.vmem [resolvable:$true] %s289
          %295 = dma.hbm_to_vmem [thread:$0]  %s288, 256, %s290, %s277, 64, 64, 4
        $region36: #{tpu_custom_call.1} parent=27 // pred_fallthru
          _
      $region28: #{tpu_custom_call.1} parent=5 // pred_fallthru
        _
      %p296 = scmp.le.s32.totalorder 1, %s25
      %p297 = scmp.lt.s32.totalorder %s25, 5
      %p298 = pnand %p296, %p297
      %p299 = pneg %p298
      // Predicated region
      $region37: #{tpu_custom_call.1} parent=5 // pred_check
        _
      $region38: #{tpu_custom_call.1} parent=5 // pred_check_branch
        %301 = sbr.rel (%p298) target = $region40
      $region39: #{tpu_custom_call.1} parent=5 // pred_region
        %s302 = ssub.s32 %s25, 1
        %s303 = sand.u32 %s52, 1
        %s304 = scalar_lea.sflag [#allocation4], %s303
        %s305 = sand.u32 %s52, 1
        %s306 = smul.addr %s305, 64
        %s307 = scalar_lea.vmem [#allocation3], %s306
        // Predicated region
        $region41: #{tpu_custom_call.1} parent=39 // pred_check
          %p308 = pneg %p65
        $region42: #{tpu_custom_call.1} parent=39 // pred_check_branch
          %310 = sbr.rel (%p308) target = $region44
        $region43: #{tpu_custom_call.1} parent=39 // pred_region
          %311 = dma.done %s304, 1024
        $region44: #{tpu_custom_call.1} parent=39 // pred_fallthru
          _
        %s312 = sand.u32 %s30, 1
        %s313 = scalar_lea.sflag [#allocation7], %s312
        %s314 = sand.u32 %s80, 1
        %s315 = smul.addr %s314, 16
        %s316 = scalar_lea.vmem [#allocation6], %s315
        // Predicated region
        $region45: #{tpu_custom_call.1} parent=39 // pred_check
          %p317 = pneg %p93
        $region46: #{tpu_custom_call.1} parent=39 // pred_check_branch
          %319 = sbr.rel (%p317) target = $region48
        $region47: #{tpu_custom_call.1} parent=39 // pred_region
          %320 = dma.done %s313, 256
        $region48: #{tpu_custom_call.1} parent=39 // pred_fallthru
          _
        // Predicated region
        $region49: #{tpu_custom_call.1} parent=39 // pred_check
          %p321 = pneg %p114
        $region50: #{tpu_custom_call.1} parent=39 // pred_check_branch
          %323 = sbr.rel (%p321) target = $region52
        $region51: #{tpu_custom_call.1} parent=39 // pred_region
          %324 = dma.done [#allocation7], 9216
        $region52: #{tpu_custom_call.1} parent=39 // pred_fallthru
          _
        %s325 = sand.u32 %s52, 1
        %s326 = scalar_lea.sflag [#allocation4], %s325
        %s327 = sand.u32 %s52, 1
        %s328 = smul.addr %s327, 64
        %s329 = scalar_lea.vmem [#allocation3], %s328
        %p330 = pneg %p65
        %p331 = pneg %p62
        %s332 = sand.u32 %s30, 1
        %s333 = scalar_lea.sflag [#allocation7], %s332
        %s334 = sand.u32 %s80, 1
        %s335 = smul.addr %s334, 16
        %s336 = scalar_lea.vmem [#allocation6], %s335
        %p337 = pneg %p93
        %p338 = pneg %p90
        %p339 = pneg %p114
        %p340 = pneg %p111
        %p341 = pneg %p135
        %p342 = pneg %p132
        %p343 = pneg %p156
        %p344 = pneg %p153
        %p345 = pneg %p184
        %p346 = pneg %p181
        %s347 = sand.u32 %s171, 1
        %s348 = scalar_lea.sflag [#allocation5], %s347
        %s349 = sand.u32 %s171, 1
        %s350 = smul.addr %s349, 64
        %s351 = scalar_lea.vmem [#allocation9], %s350
        %p352 = pneg %p212
        %p353 = pneg %p209
        %s354 = sand.u32 %s199, 1
        %s355 = scalar_lea.sflag [#allocation11], %s354
        %s356 = sand.u32 %s199, 1
        %s357 = smul.addr %s356, 2
        %s358 = scalar_lea.vmem [#allocation10], %s357
        %s359 = smul.u32 16, %s35
        %s360 = smul.u32 16, %s35
        %v364 = vld [vmem:[%s316] sm:$0xf]
        %v365 = vld [vmem:[%s316 + $0x4] sm:$0xf]
        %v368 = vunpack.c.l.b16 %v364
        %v369 = vunpack.c.l.b16 %v365
        %v370 = vpack.c.b16 %v368, %v368
        %v371 = vpack.c.b16 %v369, %v369
        %374 = vst [vmem:[#allocation2] sm:$0xf0] %v370
        %375 = vst [vmem:[#allocation2 + $0x8] sm:$0xf] %v371
        %v376 = vld [vmem:[%s307] sm:$0xf]
        %v377 = vld [vmem:[%s307 + $0x4] sm:$0xf]
        %v378 = vld [vmem:[%s307 + $0x8] sm:$0xf]
        %v379 = vld [vmem:[%s307 + $0xc] sm:$0xf]
        %v380 = vld [vmem:[%s307 + $0x10] sm:$0xf]
        %v381 = vld [vmem:[%s307 + $0x14] sm:$0xf]
        %v382 = vld [vmem:[%s307 + $0x18] sm:$0xf]
        %v383 = vld [vmem:[%s307 + $0x1c] sm:$0xf]
        %v384 = vld [vmem:[%s307 + $0x20] sm:$0xf]
        %v385 = vld [vmem:[%s307 + $0x24] sm:$0xf]
        %v386 = vld [vmem:[%s307 + $0x28] sm:$0xf]
        %v387 = vld [vmem:[%s307 + $0x2c] sm:$0xf]
        %v388 = vld [vmem:[%s307 + $0x30] sm:$0xf]
        %v389 = vld [vmem:[%s307 + $0x34] sm:$0xf]
        %v390 = vld [vmem:[%s307 + $0x38] sm:$0xf]
        %v391 = vld [vmem:[%s307 + $0x3c] sm:$0xf]
        %v408 = vunpack.c.l.b16 %v376
        %v409 = vunpack.c.l.b16 %v377
        %v410 = vunpack.c.l.b16 %v378
        %v411 = vunpack.c.l.b16 %v379
        %v412 = vunpack.c.l.b16 %v380
        %v413 = vunpack.c.l.b16 %v381
        %v414 = vunpack.c.l.b16 %v382
        %v415 = vunpack.c.l.b16 %v383
        %v416 = vunpack.c.l.b16 %v384
        %v417 = vunpack.c.l.b16 %v385
        %v418 = vunpack.c.l.b16 %v386
        %v419 = vunpack.c.l.b16 %v387
        %v420 = vunpack.c.l.b16 %v388
        %v421 = vunpack.c.l.b16 %v389
        %v422 = vunpack.c.l.b16 %v390
        %v423 = vunpack.c.l.b16 %v391
        %v424 = vpack.c.b16 %v408, %v408
        %v425 = vpack.c.b16 %v410, %v409
        %v426 = vpack.c.b16 %v412, %v411
        %v427 = vpack.c.b16 %v414, %v413
        %v428 = vpack.c.b16 %v416, %v415
        %v429 = vpack.c.b16 %v418, %v417
        %v430 = vpack.c.b16 %v420, %v419
        %v431 = vpack.c.b16 %v422, %v421
        %v432 = vpack.c.b16 %v423, %v423
        %442 = vst [vmem:[#allocation2 + $0x8] sm:$0xf0] %v424
        %443 = vst [vmem:[#allocation2 + $0x10] sm:$0xff] %v425
        %444 = vst [vmem:[#allocation2 + $0x18] sm:$0xff] %v426
        %445 = vst [vmem:[#allocation2 + $0x20] sm:$0xff] %v427
        %446 = vst [vmem:[#allocation2 + $0x28] sm:$0xff] %v428
        %447 = vst [vmem:[#allocation2 + $0x30] sm:$0xff] %v429
        %448 = vst [vmem:[#allocation2 + $0x38] sm:$0xff] %v430
        %449 = vst [vmem:[#allocation2 + $0x40] sm:$0xff] %v431
        %450 = vst [vmem:[#allocation2 + $0x48] sm:$0xf] %v432
        %v451 = vld [vmem:[%s316 + $0x8] sm:$0xf]
        %v452 = vld [vmem:[%s316 + $0xc] sm:$0xf]
        %v455 = vunpack.c.l.b16 %v451
        %v456 = vunpack.c.l.b16 %v452
        %v457 = vpack.c.b16 %v455, %v455
        %v458 = vpack.c.b16 %v456, %v456
        %461 = vst [vmem:[#allocation2 + $0x48] sm:$0xf0] %v457
        %462 = vst [vmem:[#allocation2 + $0x50] sm:$0xf] %v458
        %v463 = vlaneseq
        %v464 = vshrl.u32 %v463, 7
        %v465 = vadd.s32 %v464, 8
        %v466 = vadd.s32 %v464, 16
        %v467 = vadd.s32 %v464, 24
        %v468 = vadd.s32 %v464, 32
        %v469 = vadd.s32 %v464, 40
        %v470 = vadd.s32 %v464, 48
        %v471 = vadd.s32 %v464, 56
        %v472 = vadd.s32 %v464, 64
        %v473 = vadd.s32 %v464, 72
        %v474 = vadd.s32 %v464, 80
        %v475 = vadd.s32 %v464, 88
        %v476 = vadd.s32 %v464, 96
        %v477 = vadd.s32 %v464, 104
        %v478 = vadd.s32 %v464, 112
        %v479 = vadd.s32 %v464, 120
        %vm480 = vcmp.lt.s32.totalorder %v464, 0
        %v481 = vsub.s32 0, %v464
        %v482 = vsel %vm480, %v481, %v464
        %v483 = vshrl.u32 %v482, 4
        %v484 = vand.u32 %v482, 15
        %v485 = vsub.s32 0, %v484
        %v486 = vsel %vm480, %v485, %v484
        %vm487 = vcmp.lt.s32.totalorder %v465, 0
        %v488 = vsub.s32 0, %v465
        %v489 = vsel %vm487, %v488, %v465
        %v490 = vshrl.u32 %v489, 4
        %v491 = vand.u32 %v489, 15
        %v492 = vsub.s32 0, %v491
        %v493 = vsel %vm487, %v492, %v491
        %vm494 = vcmp.lt.s32.totalorder %v466, 0
        %v495 = vsub.s32 0, %v466
        %v496 = vsel %vm494, %v495, %v466
        %v497 = vshrl.u32 %v496, 4
        %v498 = vand.u32 %v496, 15
        %v499 = vsub.s32 0, %v498
        %v500 = vsel %vm494, %v499, %v498
        %vm501 = vcmp.lt.s32.totalorder %v467, 0
        %v502 = vsub.s32 0, %v467
        %v503 = vsel %vm501, %v502, %v467
        %v504 = vshrl.u32 %v503, 4
        %v505 = vand.u32 %v503, 15
        %v506 = vsub.s32 0, %v505
        %v507 = vsel %vm501, %v506, %v505
        %vm508 = vcmp.lt.s32.totalorder %v468, 0
        %v509 = vsub.s32 0, %v468
        %v510 = vsel %vm508, %v509, %v468
        %v511 = vshrl.u32 %v510, 4
        %v512 = vand.u32 %v510, 15
        %v513 = vsub.s32 0, %v512
        %v514 = vsel %vm508, %v513, %v512
        %vm515 = vcmp.lt.s32.totalorder %v469, 0
        %v516 = vsub.s32 0, %v469
        %v517 = vsel %vm515, %v516, %v469
        %v518 = vshrl.u32 %v517, 4
        %v519 = vand.u32 %v517, 15
        %v520 = vsub.s32 0, %v519
        %v521 = vsel %vm515, %v520, %v519
        %vm522 = vcmp.lt.s32.totalorder %v470, 0
        %v523 = vsub.s32 0, %v470
        %v524 = vsel %vm522, %v523, %v470
        %v525 = vshrl.u32 %v524, 4
        %v526 = vand.u32 %v524, 15
        %v527 = vsub.s32 0, %v526
        %v528 = vsel %vm522, %v527, %v526
        %vm529 = vcmp.lt.s32.totalorder %v471, 0
        %v530 = vsub.s32 0, %v471
        %v531 = vsel %vm529, %v530, %v471
        %v532 = vshrl.u32 %v531, 4
        %v533 = vand.u32 %v531, 15
        %v534 = vsub.s32 0, %v533
        %v535 = vsel %vm529, %v534, %v533
        %vm536 = vcmp.lt.s32.totalorder %v472, 0
        %v537 = vsub.s32 0, %v472
        %v538 = vsel %vm536, %v537, %v472
        %v539 = vshrl.u32 %v538, 4
        %v540 = vand.u32 %v538, 15
        %v541 = vsub.s32 0, %v540
        %v542 = vsel %vm536, %v541, %v540
        %vm543 = vcmp.lt.s32.totalorder %v473, 0
        %v544 = vsub.s32 0, %v473
        %v545 = vsel %vm543, %v544, %v473
        %v546 = vshrl.u32 %v545, 4
        %v547 = vand.u32 %v545, 15
        %v548 = vsub.s32 0, %v547
        %v549 = vsel %vm543, %v548, %v547
        %vm550 = vcmp.lt.s32.totalorder %v474, 0
        %v551 = vsub.s32 0, %v474
        %v552 = vsel %vm550, %v551, %v474
        %v553 = vshrl.u32 %v552, 4
        %v554 = vand.u32 %v552, 15
        %v555 = vsub.s32 0, %v554
        %v556 = vsel %vm550, %v555, %v554
        %vm557 = vcmp.lt.s32.totalorder %v475, 0
        %v558 = vsub.s32 0, %v475
        %v559 = vsel %vm557, %v558, %v475
        %v560 = vshrl.u32 %v559, 4
        %v561 = vand.u32 %v559, 15
        %v562 = vsub.s32 0, %v561
        %v563 = vsel %vm557, %v562, %v561
        %vm564 = vcmp.lt.s32.totalorder %v476, 0
        %v565 = vsub.s32 0, %v476
        %v566 = vsel %vm564, %v565, %v476
        %v567 = vshrl.u32 %v566, 4
        %v568 = vand.u32 %v566, 15
        %v569 = vsub.s32 0, %v568
        %v570 = vsel %vm564, %v569, %v568
        %vm571 = vcmp.lt.s32.totalorder %v477, 0
        %v572 = vsub.s32 0, %v477
        %v573 = vsel %vm571, %v572, %v477
        %v574 = vshrl.u32 %v573, 4
        %v575 = vand.u32 %v573, 15
        %v576 = vsub.s32 0, %v575
        %v577 = vsel %vm571, %v576, %v575
        %vm578 = vcmp.lt.s32.totalorder %v478, 0
        %v579 = vsub.s32 0, %v478
        %v580 = vsel %vm578, %v579, %v478
        %v581 = vshrl.u32 %v580, 4
        %v582 = vand.u32 %v580, 15
        %v583 = vsub.s32 0, %v582
        %v584 = vsel %vm578, %v583, %v582
        %vm585 = vcmp.lt.s32.totalorder %v479, 0
        %v586 = vsub.s32 0, %v479
        %v587 = vsel %vm585, %v586, %v479
        %v588 = vshrl.u32 %v587, 4
        %v589 = vand.u32 %v587, 15
        %v590 = vsub.s32 0, %v589
        %v591 = vsel %vm585, %v590, %v589
        %vm592 = vcmp.ne.s32.totalorder %v486, 0
        %vm593 = vcmp.ne.s32.totalorder %v493, 0
        %vm594 = vcmp.ne.s32.totalorder %v500, 0
        %vm595 = vcmp.ne.s32.totalorder %v507, 0
        %vm596 = vcmp.ne.s32.totalorder %v514, 0
        %vm597 = vcmp.ne.s32.totalorder %v521, 0
        %vm598 = vcmp.ne.s32.totalorder %v528, 0
        %vm599 = vcmp.ne.s32.totalorder %v535, 0
        %vm600 = vcmp.ne.s32.totalorder %v542, 0
        %vm601 = vcmp.ne.s32.totalorder %v549, 0
        %vm602 = vcmp.ne.s32.totalorder %v556, 0
        %vm603 = vcmp.ne.s32.totalorder %v563, 0
        %vm604 = vcmp.ne.s32.totalorder %v570, 0
        %vm605 = vcmp.ne.s32.totalorder %v577, 0
        %vm606 = vcmp.ne.s32.totalorder %v584, 0
        %vm607 = vcmp.ne.s32.totalorder %v591, 0
        %vm608 = vcmp.lt.s32.totalorder %v486, 0
        %vm609 = vcmp.lt.s32.totalorder %v493, 0
        %vm610 = vcmp.lt.s32.totalorder %v500, 0
        %vm611 = vcmp.lt.s32.totalorder %v507, 0
        %vm612 = vcmp.lt.s32.totalorder %v514, 0
        %vm613 = vcmp.lt.s32.totalorder %v521, 0
        %vm614 = vcmp.lt.s32.totalorder %v528, 0
        %vm615 = vcmp.lt.s32.totalorder %v535, 0
        %vm616 = vcmp.lt.s32.totalorder %v542, 0
        %vm617 = vcmp.lt.s32.totalorder %v549, 0
        %vm618 = vcmp.lt.s32.totalorder %v556, 0
        %vm619 = vcmp.lt.s32.totalorder %v563, 0
        %vm620 = vcmp.lt.s32.totalorder %v570, 0
        %vm621 = vcmp.lt.s32.totalorder %v577, 0
        %vm622 = vcmp.lt.s32.totalorder %v584, 0
        %vm623 = vcmp.lt.s32.totalorder %v591, 0
        %vm624 = vmand %vm608, %vm592
        %vm625 = vmand %vm609, %vm593
        %vm626 = vmand %vm610, %vm594
        %vm627 = vmand %vm611, %vm595
        %vm628 = vmand %vm612, %vm596
        %vm629 = vmand %vm613, %vm597
        %vm630 = vmand %vm614, %vm598
        %vm631 = vmand %vm615, %vm599
        %vm632 = vmand %vm616, %vm600
        %vm633 = vmand %vm617, %vm601
        %vm634 = vmand %vm618, %vm602
        %vm635 = vmand %vm619, %vm603
        %vm636 = vmand %vm620, %vm604
        %vm637 = vmand %vm621, %vm605
        %vm638 = vmand %vm622, %vm606
        %vm639 = vmand %vm623, %vm607
        %v640 = vadd.s32 %v486, 16
        %v641 = vadd.s32 %v493, 16
        %v642 = vadd.s32 %v500, 16
        %v643 = vadd.s32 %v507, 16
        %v644 = vadd.s32 %v514, 16
        %v645 = vadd.s32 %v521, 16
        %v646 = vadd.s32 %v528, 16
        %v647 = vadd.s32 %v535, 16
        %v648 = vadd.s32 %v542, 16
        %v649 = vadd.s32 %v549, 16
        %v650 = vadd.s32 %v556, 16
        %v651 = vadd.s32 %v563, 16
        %v652 = vadd.s32 %v570, 16
        %v653 = vadd.s32 %v577, 16
        %v654 = vadd.s32 %v584, 16
        %v655 = vadd.s32 %v591, 16
        %v656 = vsel %vm624, %v640, %v486
        %v657 = vsel %vm625, %v641, %v493
        %v658 = vsel %vm626, %v642, %v500
        %v659 = vsel %vm627, %v643, %v507
        %v660 = vsel %vm628, %v644, %v514
        %v661 = vsel %vm629, %v645, %v521
        %v662 = vsel %vm630, %v646, %v528
        %v663 = vsel %vm631, %v647, %v535
        %v664 = vsel %vm632, %v648, %v542
        %v665 = vsel %vm633, %v649, %v549
        %v666 = vsel %vm634, %v650, %v556
        %v667 = vsel %vm635, %v651, %v563
        %v668 = vsel %vm636, %v652, %v570
        %v669 = vsel %vm637, %v653, %v577
        %v670 = vsel %vm638, %v654, %v584
        %v671 = vsel %vm639, %v655, %v591
        %vm672 = vcmp.gt.s32.totalorder %v656, 0
        %vm673 = vcmp.gt.s32.totalorder %v657, 0
        %vm674 = vcmp.gt.s32.totalorder %v658, 0
        %vm675 = vcmp.gt.s32.totalorder %v659, 0
        %vm676 = vcmp.gt.s32.totalorder %v660, 0
        %vm677 = vcmp.gt.s32.totalorder %v661, 0
        %vm678 = vcmp.gt.s32.totalorder %v662, 0
        %vm679 = vcmp.gt.s32.totalorder %v663, 0
        %vm680 = vcmp.gt.s32.totalorder %v664, 0
        %vm681 = vcmp.gt.s32.totalorder %v665, 0
        %vm682 = vcmp.gt.s32.totalorder %v666, 0
        %vm683 = vcmp.gt.s32.totalorder %v667, 0
        %vm684 = vcmp.gt.s32.totalorder %v668, 0
        %vm685 = vcmp.gt.s32.totalorder %v669, 0
        %vm686 = vcmp.gt.s32.totalorder %v670, 0
        %vm687 = vcmp.gt.s32.totalorder %v671, 0
        %vm688 = vcmp.lt.s32.totalorder %v656, 15
        %vm689 = vcmp.lt.s32.totalorder %v657, 15
        %vm690 = vcmp.lt.s32.totalorder %v658, 15
        %vm691 = vcmp.lt.s32.totalorder %v659, 15
        %vm692 = vcmp.lt.s32.totalorder %v660, 15
        %vm693 = vcmp.lt.s32.totalorder %v661, 15
        %vm694 = vcmp.lt.s32.totalorder %v662, 15
        %vm695 = vcmp.lt.s32.totalorder %v663, 15
        %vm696 = vcmp.lt.s32.totalorder %v664, 15
        %vm697 = vcmp.lt.s32.totalorder %v665, 15
        %vm698 = vcmp.lt.s32.totalorder %v666, 15
        %vm699 = vcmp.lt.s32.totalorder %v667, 15
        %vm700 = vcmp.lt.s32.totalorder %v668, 15
        %vm701 = vcmp.lt.s32.totalorder %v669, 15
        %vm702 = vcmp.lt.s32.totalorder %v670, 15
        %vm703 = vcmp.lt.s32.totalorder %v671, 15
        %v704 = vld [vmem:[#allocation2] sm:$0xf8]
        %v705 = vld [vmem:[#allocation2 + $0x8] sm:$0xff]
        %v706 = vld [vmem:[#allocation2 + $0x10] sm:$0xff]
        %v707 = vld [vmem:[#allocation2 + $0x18] sm:$0xff]
        %v708 = vld [vmem:[#allocation2 + $0x20] sm:$0xff]
        %v709 = vld [vmem:[#allocation2 + $0x28] sm:$0xff]
        %v710 = vld [vmem:[#allocation2 + $0x30] sm:$0xff]
        %v711 = vld [vmem:[#allocation2 + $0x38] sm:$0xff]
        %v712 = vld [vmem:[#allocation2 + $0x40] sm:$0xf]
        %v713 = vsel %vm672, 1, 0
        %v714 = vsel %vm673, 1, 0
        %v715 = vsel %vm674, 1, 0
        %v716 = vsel %vm675, 1, 0
        %v717 = vsel %vm676, 1, 0
        %v718 = vsel %vm677, 1, 0
        %v719 = vsel %vm678, 1, 0
        %v720 = vsel %vm679, 1, 0
        %v721 = vsel %vm680, 1, 0
        %v722 = vsel %vm681, 1, 0
        %v723 = vsel %vm682, 1, 0
        %v724 = vsel %vm683, 1, 0
        %v725 = vsel %vm684, 1, 0
        %v726 = vsel %vm685, 1, 0
        %v727 = vsel %vm686, 1, 0
        %v728 = vsel %vm687, 1, 0
        %vm729 = vcmp.eq.s32.totalorder %v713, 1
        %vm730 = vcmp.eq.s32.totalorder %v714, 1
        %vm731 = vcmp.eq.s32.totalorder %v715, 1
        %vm732 = vcmp.eq.s32.totalorder %v716, 1
        %vm733 = vcmp.eq.s32.totalorder %v717, 1
        %vm734 = vcmp.eq.s32.totalorder %v718, 1
        %vm735 = vcmp.eq.s32.totalorder %v719, 1
        %vm736 = vcmp.eq.s32.totalorder %v720, 1
        %vm737 = vcmp.eq.s32.totalorder %v721, 1
        %vm738 = vcmp.eq.s32.totalorder %v722, 1
        %vm739 = vcmp.eq.s32.totalorder %v723, 1
        %vm740 = vcmp.eq.s32.totalorder %v724, 1
        %vm741 = vcmp.eq.s32.totalorder %v725, 1
        %vm742 = vcmp.eq.s32.totalorder %v726, 1
        %vm743 = vcmp.eq.s32.totalorder %v727, 1
        %vm744 = vcmp.eq.s32.totalorder %v728, 1
        %vm745 = vmpackc.low %vm729, %vm729
        %vm746 = vmpackc.low %vm730, %vm730
        %vm747 = vmpackc.low %vm731, %vm731
        %vm748 = vmpackc.low %vm732, %vm732
        %vm749 = vmpackc.low %vm733, %vm733
        %vm750 = vmpackc.low %vm734, %vm734
        %vm751 = vmpackc.low %vm735, %vm735
        %vm752 = vmpackc.low %vm736, %vm736
        %vm753 = vmpackc.low %vm737, %vm737
        %vm754 = vmpackc.low %vm738, %vm738
        %vm755 = vmpackc.low %vm739, %vm739
        %vm756 = vmpackc.low %vm740, %vm740
        %vm757 = vmpackc.low %vm741, %vm741
        %vm758 = vmpackc.low %vm742, %vm742
        %vm759 = vmpackc.low %vm743, %vm743
        %vm760 = vmpackc.low %vm744, %vm744
        %v761 = vsel %vm745, 65537, 0
        %v762 = vsel %vm746, 65537, 0
        %v763 = vsel %vm747, 65537, 0
        %v764 = vsel %vm748, 65537, 0
        %v765 = vsel %vm749, 65537, 0
        %v766 = vsel %vm750, 65537, 0
        %v767 = vsel %vm751, 65537, 0
        %v768 = vsel %vm752, 65537, 0
        %v769 = vsel %vm753, 65537, 0
        %v770 = vsel %vm754, 65537, 0
        %v771 = vsel %vm755, 65537, 0
        %v772 = vsel %vm756, 65537, 0
        %v773 = vsel %vm757, 65537, 0
        %v774 = vsel %vm758, 65537, 0
        %v775 = vsel %vm759, 65537, 0
        %v776 = vsel %vm760, 65537, 0
        %v777 = vunpack.c.l.b16 %v761
        %v778 = vunpack.c.l.b16 %v762
        %v779 = vunpack.c.l.b16 %v763
        %v780 = vunpack.c.l.b16 %v764
        %v781 = vunpack.c.l.b16 %v765
        %v782 = vunpack.c.l.b16 %v766
        %v783 = vunpack.c.l.b16 %v767
        %v784 = vunpack.c.l.b16 %v768
        %v785 = vunpack.c.l.b16 %v769
        %v786 = vunpack.c.l.b16 %v770
        %v787 = vunpack.c.l.b16 %v771
        %v788 = vunpack.c.l.b16 %v772
        %v789 = vunpack.c.l.b16 %v773
        %v790 = vunpack.c.l.b16 %v774
        %v791 = vunpack.c.l.b16 %v775
        %v792 = vunpack.c.l.b16 %v776
        %v793 = vpack.c.b16 %v778, %v777
        %v794 = vpack.c.b16 %v780, %v779
        %v795 = vpack.c.b16 %v782, %v781
        %v796 = vpack.c.b16 %v784, %v783
        %v797 = vpack.c.b16 %v786, %v785
        %v798 = vpack.c.b16 %v788, %v787
        %v799 = vpack.c.b16 %v790, %v789
        %v800 = vpack.c.b16 %v792, %v791
        %vm801 = vsmask.f32 3328
        %v803 = vshrl.u32 %v793, 16
        %v805 = vrot.slane %v803, 4
        %v806 = vshll.u32 %v793, 16
        %v808 = vrot.slane %v806, 5
        %v809 = vor.u32 %v805, %v808
        %v811 = vshrl.u32 %v794, 16
        %v813 = vrot.slane %v811, 4
        %v814 = vshll.u32 %v794, 16
        %v816 = vrot.slane %v814, 5
        %v817 = vor.u32 %v813, %v816
        %v818 = vsel %vm801, %v809, %v817
        %v820 = vshrl.u32 %v795, 16
        %v822 = vrot.slane %v820, 4
        %v823 = vshll.u32 %v795, 16
        %v825 = vrot.slane %v823, 5
        %v826 = vor.u32 %v822, %v825
        %v827 = vsel %vm801, %v817, %v826
        %v829 = vshrl.u32 %v796, 16
        %v831 = vrot.slane %v829, 4
        %v832 = vshll.u32 %v796, 16
        %v834 = vrot.slane %v832, 5
        %v835 = vor.u32 %v831, %v834
        %v836 = vsel %vm801, %v826, %v835
        %v838 = vshrl.u32 %v797, 16
        %v840 = vrot.slane %v838, 4
        %v841 = vshll.u32 %v797, 16
        %v843 = vrot.slane %v841, 5
        %v844 = vor.u32 %v840, %v843
        %v845 = vsel %vm801, %v835, %v844
        %v847 = vshrl.u32 %v798, 16
        %v849 = vrot.slane %v847, 4
        %v850 = vshll.u32 %v798, 16
        %v852 = vrot.slane %v850, 5
        %v853 = vor.u32 %v849, %v852
        %v854 = vsel %vm801, %v844, %v853
        %v856 = vshrl.u32 %v799, 16
        %v858 = vrot.slane %v856, 4
        %v859 = vshll.u32 %v799, 16
        %v861 = vrot.slane %v859, 5
        %v862 = vor.u32 %v858, %v861
        %v863 = vsel %vm801, %v853, %v862
        %v865 = vshrl.u32 %v800, 16
        %v867 = vrot.slane %v865, 4
        %v868 = vshll.u32 %v800, 16
        %v870 = vrot.slane %v868, 5
        %v871 = vor.u32 %v867, %v870
        %v872 = vsel %vm801, %v862, %v871
        %vm873 = vcmp.ne.s16.totalorder %v809, 0
        %vm874 = vcmp.ne.s16.totalorder %v818, 0
        %vm875 = vcmp.ne.s16.totalorder %v827, 0
        %vm876 = vcmp.ne.s16.totalorder %v836, 0
        %vm877 = vcmp.ne.s16.totalorder %v845, 0
        %vm878 = vcmp.ne.s16.totalorder %v854, 0
        %vm879 = vcmp.ne.s16.totalorder %v863, 0
        %vm880 = vcmp.ne.s16.totalorder %v872, 0
        %vm881 = vcmp.ne.s16.totalorder %v871, 0
        %v882 = vsel %vm873, %v704, 0
        %v883 = vsel %vm874, %v705, 0
        %v884 = vsel %vm875, %v706, 0
        %v885 = vsel %vm876, %v707, 0
        %v886 = vsel %vm877, %v708, 0
        %v887 = vsel %vm878, %v709, 0
        %v888 = vsel %vm879, %v710, 0
        %v889 = vsel %vm880, %v711, 0
        %v890 = vsel %vm881, %v712, 0
        %v891 = vld [vmem:[#allocation8] sm:$0xf]
        %v892 = vld [vmem:[#allocation8 + $0x4] sm:$0xf]
        %v893 = vld [vmem:[#allocation8 + $0x8] sm:$0xf]
        %v894 = vld [vmem:[#allocation8 + $0xc] sm:$0xf]
        %v895 = vld [vmem:[#allocation8 + $0x10] sm:$0xf]
        %v896 = vld [vmem:[#allocation8 + $0x14] sm:$0xf]
        %v897 = vld [vmem:[#allocation8 + $0x18] sm:$0xf]
        %v898 = vld [vmem:[#allocation8 + $0x1c] sm:$0xf]
        %v899 = vld [vmem:[#allocation8 + $0x20] sm:$0xf]
        %v900 = vld [vmem:[#allocation8 + $0x24] sm:$0xf]
        %v901 = vld [vmem:[#allocation8 + $0x28] sm:$0xf]
        %v902 = vld [vmem:[#allocation8 + $0x2c] sm:$0xf]
        %v903 = vld [vmem:[#allocation8 + $0x30] sm:$0xf]
        %v904 = vld [vmem:[#allocation8 + $0x34] sm:$0xf]
        %v905 = vld [vmem:[#allocation8 + $0x38] sm:$0xf]
        %v906 = vld [vmem:[#allocation8 + $0x3c] sm:$0xf]
        %v907 = vld [vmem:[#allocation2] sm:$0xf0]
        %s908 = scalar_lea.vmem [#allocation8], 64
        %v909 = vld [vmem:[%s908] sm:$0xf]
        %v910 = vld [vmem:[%s908 + $0x4] sm:$0xf]
        %v911 = vld [vmem:[%s908 + $0x8] sm:$0xf]
        %v912 = vld [vmem:[%s908 + $0xc] sm:$0xf]
        %v913 = vld [vmem:[%s908 + $0x10] sm:$0xf]
        %v914 = vld [vmem:[%s908 + $0x14] sm:$0xf]
        %v915 = vld [vmem:[%s908 + $0x18] sm:$0xf]
        %v916 = vld [vmem:[%s908 + $0x1c] sm:$0xf]
        %v917 = vld [vmem:[%s908 + $0x20] sm:$0xf]
        %v918 = vld [vmem:[%s908 + $0x24] sm:$0xf]
        %v919 = vld [vmem:[%s908 + $0x28] sm:$0xf]
        %v920 = vld [vmem:[%s908 + $0x2c] sm:$0xf]
        %v921 = vld [vmem:[%s908 + $0x30] sm:$0xf]
        %v922 = vld [vmem:[%s908 + $0x34] sm:$0xf]
        %v923 = vld [vmem:[%s908 + $0x38] sm:$0xf]
        %v924 = vld [vmem:[%s908 + $0x3c] sm:$0xf]
        %vm934 = vcmask 1043456
        %v935 = vrot.slane %v907, 4
        %v936 = vrot.slane %v705, 4
        %v937 = vsel %vm934, %v935, %v936
        %v938 = vrot.slane %v706, 4
        %v939 = vsel %vm934, %v936, %v938
        %v940 = vrot.slane %v707, 4
        %v941 = vsel %vm934, %v938, %v940
        %v942 = vrot.slane %v708, 4
        %v943 = vsel %vm934, %v940, %v942
        %v944 = vrot.slane %v709, 4
        %v945 = vsel %vm934, %v942, %v944
        %v946 = vrot.slane %v710, 4
        %v947 = vsel %vm934, %v944, %v946
        %v948 = vrot.slane %v711, 4
        %v949 = vsel %vm934, %v946, %v948
        %v950 = vrot.slane %v712, 4
        %v951 = vsel %vm934, %v948, %v950
        %v976 = vunpack.c.l.b16 %v909
        %v977 = vunpack.c.l.b16 %v910
        %v978 = vunpack.c.l.b16 %v911
        %v979 = vunpack.c.l.b16 %v912
        %v980 = vunpack.c.l.b16 %v913
        %v981 = vunpack.c.l.b16 %v914
        %v982 = vunpack.c.l.b16 %v915
        %v983 = vunpack.c.l.b16 %v916
        %v984 = vunpack.c.l.b16 %v917
        %v985 = vunpack.c.l.b16 %v918
        %v986 = vunpack.c.l.b16 %v919
        %v987 = vunpack.c.l.b16 %v920
        %v988 = vunpack.c.l.b16 %v921
        %v989 = vunpack.c.l.b16 %v922
        %v990 = vunpack.c.l.b16 %v923
        %v991 = vunpack.c.l.b16 %v924
        %v992 = vpack.c.b16 %v977, %v976
        %v993 = vpack.c.b16 %v979, %v978
        %v994 = vpack.c.b16 %v981, %v980
        %v995 = vpack.c.b16 %v983, %v982
        %v996 = vpack.c.b16 %v985, %v984
        %v997 = vpack.c.b16 %v987, %v986
        %v998 = vpack.c.b16 %v989, %v988
        %v999 = vpack.c.b16 %v991, %v990
        %1008 = vmatprep.subr.bf16.mxu0 0
        %1009 = vmatpush1.bf16.msra.mxu0 %v992
        %1010 = vmatprep.subr.bf16.mxu0 0
        %1011 = vmatpush1.bf16.msra.mxu0 %v993
        %1012 = vmatprep.subr.bf16.mxu0 0
        %1013 = vmatpush1.bf16.msra.mxu0 %v994
        %1014 = vmatprep.subr.bf16.mxu0 0
        %1015 = vmatpush1.bf16.msra.mxu0 %v995
        %1016 = vmatprep.subr.bf16.mxu0 0
        %1017 = vmatpush1.bf16.msra.mxu0 %v996
        %1018 = vmatprep.subr.bf16.mxu0 0
        %1019 = vmatpush1.bf16.msra.mxu0 %v997
        %1020 = vmatprep.subr.bf16.mxu0 0
        %1021 = vmatpush1.bf16.msra.mxu0 %v998
        %1022 = vmatprep.subr.bf16.mxu0 0
        %1023 = vmatpush1.bf16.msra.mxu0 %v999
        %1024 = vmatprep.subr.bf16.mxu0 0
        %1025 = vmatpush1.bf16.msra.mxu0 0
        %1026 = vmatprep.subr.bf16.mxu0 0
        %1027 = vmatpush1.bf16.msra.mxu0 0
        %1028 = vmatprep.subr.bf16.mxu0 0
        %1029 = vmatpush1.bf16.msra.mxu0 0
        %1030 = vmatprep.subr.bf16.mxu0 0
        %1031 = vmatpush1.bf16.msra.mxu0 0
        %1032 = vmatprep.subr.bf16.mxu0 0
        %1033 = vmatpush1.bf16.msra.mxu0 0
        %1034 = vmatprep.subr.bf16.mxu0 0
        %1035 = vmatpush1.bf16.msra.mxu0 0
        %1036 = vmatprep.subr.bf16.mxu0 0
        %1037 = vmatpush1.bf16.msra.mxu0 0
        %1038 = vmatprep.subr.bf16.mxu0 0
        %1039 = vmatpush1.bf16.msra.mxu0 0
        %1040 = vmatprep.mubr.bf16.mxu0 0
        %1041 = vmatmul.mubr.bf16.gmra.mrb[0].mxu0 %v937
        %v1042 = vpop.f32.mrb[0].mxu0
        %v1043 = vadd.f32 0.0, %v1042
        %v1044 = vpop.f32.mrb[0].mxu0
        %v1045 = vpop.f32.mrb[0].mxu0
        %v1046 = vadd.f32 0.0, %v1045
        %v1047 = vpop.f32.mrb[0].mxu0
        %1048 = vmatprep.mubr.bf16.mxu0 0
        %1049 = vmatmul.mubr.bf16.gmra.mrb[0].mxu0 %v939
        %v1050 = vpop.f32.mrb[0].mxu0
        %v1051 = vadd.f32 0.0, %v1050
        %v1052 = vpop.f32.mrb[0].mxu0
        %v1053 = vpop.f32.mrb[0].mxu0
        %v1054 = vadd.f32 0.0, %v1053
        %v1055 = vpop.f32.mrb[0].mxu0
        %1056 = vmatprep.mubr.bf16.mxu0 0
        %1057 = vmatmul.mubr.bf16.gmra.mrb[0].mxu0 %v941
        %v1058 = vpop.f32.mrb[0].mxu0
        %v1059 = vadd.f32 0.0, %v1058
        %v1060 = vpop.f32.mrb[0].mxu0
        %v1061 = vpop.f32.mrb[0].mxu0
        %v1062 = vadd.f32 0.0, %v1061
        %v1063 = vpop.f32.mrb[0].mxu0
        %1064 = vmatprep.mubr.bf16.mxu0 0
        %1065 = vmatmul.mubr.bf16.gmra.mrb[0].mxu0 %v943
        %v1066 = vpop.f32.mrb[0].mxu0
        %v1067 = vadd.f32 0.0, %v1066
        %v1068 = vpop.f32.mrb[0].mxu0
        %v1069 = vpop.f32.mrb[0].mxu0
        %v1070 = vadd.f32 0.0, %v1069
        %v1071 = vpop.f32.mrb[0].mxu0
        %1072 = vmatprep.mubr.bf16.mxu0 0
        %1073 = vmatmul.mubr.bf16.gmra.mrb[0].mxu0 %v945
        %v1074 = vpop.f32.mrb[0].mxu0
        %v1075 = vadd.f32 0.0, %v1074
        %v1076 = vpop.f32.mrb[0].mxu0
        %v1077 = vpop.f32.mrb[0].mxu0
        %v1078 = vadd.f32 0.0, %v1077
        %v1079 = vpop.f32.mrb[0].mxu0
        %1080 = vmatprep.mubr.bf16.mxu0 0
        %1081 = vmatmul.mubr.bf16.gmra.mrb[0].mxu0 %v947
        %v1082 = vpop.f32.mrb[0].mxu0
        %v1083 = vadd.f32 0.0, %v1082
        %v1084 = vpop.f32.mrb[0].mxu0
        %v1085 = vpop.f32.mrb[0].mxu0
        %v1086 = vadd.f32 0.0, %v1085
        %v1087 = vpop.f32.mrb[0].mxu0
        %1088 = vmatprep.mubr.bf16.mxu0 0
        %1089 = vmatmul.mubr.bf16.gmra.mrb[0].mxu0 %v949
        %v1090 = vpop.f32.mrb[0].mxu0
        %v1091 = vadd.f32 0.0, %v1090
        %v1092 = vpop.f32.mrb[0].mxu0
        %v1093 = vpop.f32.mrb[0].mxu0
        %v1094 = vadd.f32 0.0, %v1093
        %v1095 = vpop.f32.mrb[0].mxu0
        %1096 = vmatprep.mubr.bf16.mxu0 0
        %1097 = vmatmul.mubr.bf16.gmra.mrb[0].mxu0 %v951
        %v1098 = vpop.f32.mrb[0].mxu0
        %v1099 = vadd.f32 0.0, %v1098
        %v1100 = vpop.f32.mrb[0].mxu0
        %v1101 = vpop.f32.mrb[0].mxu0
        %v1102 = vadd.f32 0.0, %v1101
        %v1103 = vpop.f32.mrb[0].mxu0
        %1104 = vdwg.mxu0
        %vm1105 = vsmask.f32 4352
        %v1107 = vshrl.u32 %v882, 16
        %v1109 = vrot.slane %v1107, 3
        %v1110 = vshll.u32 %v882, 16
        %v1112 = vrot.slane %v1110, 4
        %v1113 = vor.u32 %v1109, %v1112
        %v1115 = vshrl.u32 %v883, 16
        %v1117 = vrot.slane %v1115, 3
        %v1118 = vshll.u32 %v883, 16
        %v1120 = vrot.slane %v1118, 4
        %v1121 = vor.u32 %v1117, %v1120
        %v1122 = vsel %vm1105, %v1113, %v1121
        %v1124 = vshrl.u32 %v884, 16
        %v1126 = vrot.slane %v1124, 3
        %v1127 = vshll.u32 %v884, 16
        %v1129 = vrot.slane %v1127, 4
        %v1130 = vor.u32 %v1126, %v1129
        %v1131 = vsel %vm1105, %v1121, %v1130
        %v1133 = vshrl.u32 %v885, 16
        %v1135 = vrot.slane %v1133, 3
        %v1136 = vshll.u32 %v885, 16
        %v1138 = vrot.slane %v1136, 4
        %v1139 = vor.u32 %v1135, %v1138
        %v1140 = vsel %vm1105, %v1130, %v1139
        %v1142 = vshrl.u32 %v886, 16
        %v1144 = vrot.slane %v1142, 3
        %v1145 = vshll.u32 %v886, 16
        %v1147 = vrot.slane %v1145, 4
        %v1148 = vor.u32 %v1144, %v1147
        %v1149 = vsel %vm1105, %v1139, %v1148
        %v1151 = vshrl.u32 %v887, 16
        %v1153 = vrot.slane %v1151, 3
        %v1154 = vshll.u32 %v887, 16
        %v1156 = vrot.slane %v1154, 4
        %v1157 = vor.u32 %v1153, %v1156
        %v1158 = vsel %vm1105, %v1148, %v1157
        %v1160 = vshrl.u32 %v888, 16
        %v1162 = vrot.slane %v1160, 3
        %v1163 = vshll.u32 %v888, 16
        %v1165 = vrot.slane %v1163, 4
        %v1166 = vor.u32 %v1162, %v1165
        %v1167 = vsel %vm1105, %v1157, %v1166
        %v1169 = vshrl.u32 %v889, 16
        %v1171 = vrot.slane %v1169, 3
        %v1172 = vshll.u32 %v889, 16
        %v1174 = vrot.slane %v1172, 4
        %v1175 = vor.u32 %v1171, %v1174
        %v1176 = vsel %vm1105, %v1166, %v1175
        %v1178 = vshrl.u32 %v890, 16
        %v1180 = vrot.slane %v1178, 3
        %v1181 = vshll.u32 %v890, 16
        %v1183 = vrot.slane %v1181, 4
        %v1184 = vor.u32 %v1180, %v1183
        %v1185 = vsel %vm1105, %v1175, %v1184
        %v1210 = vunpack.c.l.b16 %v891
        %v1211 = vunpack.c.l.b16 %v892
        %v1212 = vunpack.c.l.b16 %v893
        %v1213 = vunpack.c.l.b16 %v894
        %v1214 = vunpack.c.l.b16 %v895
        %v1215 = vunpack.c.l.b16 %v896
        %v1216 = vunpack.c.l.b16 %v897
        %v1217 = vunpack.c.l.b16 %v898
        %v1218 = vunpack.c.l.b16 %v899
        %v1219 = vunpack.c.l.b16 %v900
        %v1220 = vunpack.c.l.b16 %v901
        %v1221 = vunpack.c.l.b16 %v902
        %v1222 = vunpack.c.l.b16 %v903
        %v1223 = vunpack.c.l.b16 %v904
        %v1224 = vunpack.c.l.b16 %v905
        %v1225 = vunpack.c.l.b16 %v906
        %v1226 = vpack.c.b16 %v1211, %v1210
        %v1227 = vpack.c.b16 %v1213, %v1212
        %v1228 = vpack.c.b16 %v1215, %v1214
        %v1229 = vpack.c.b16 %v1217, %v1216
        %v1230 = vpack.c.b16 %v1219, %v1218
        %v1231 = vpack.c.b16 %v1221, %v1220
        %v1232 = vpack.c.b16 %v1223, %v1222
        %v1233 = vpack.c.b16 %v1225, %v1224
        %1242 = vmatprep.subr.bf16.mxu0 0
        %1243 = vmatpush1.bf16.msra.mxu0 %v1226
        %1244 = vmatprep.subr.bf16.mxu0 0
        %1245 = vmatpush1.bf16.msra.mxu0 %v1227
        %1246 = vmatprep.subr.bf16.mxu0 0
        %1247 = vmatpush1.bf16.msra.mxu0 %v1228
        %1248 = vmatprep.subr.bf16.mxu0 0
        %1249 = vmatpush1.bf16.msra.mxu0 %v1229
        %1250 = vmatprep.subr.bf16.mxu0 0
        %1251 = vmatpush1.bf16.msra.mxu0 %v1230
        %1252 = vmatprep.subr.bf16.mxu0 0
        %1253 = vmatpush1.bf16.msra.mxu0 %v1231
        %1254 = vmatprep.subr.bf16.mxu0 0
        %1255 = vmatpush1.bf16.msra.mxu0 %v1232
        %1256 = vmatprep.subr.bf16.mxu0 0
        %1257 = vmatpush1.bf16.msra.mxu0 %v1233
        %1258 = vmatprep.subr.bf16.mxu0 0
        %1259 = vmatpush1.bf16.msra.mxu0 0
        %1260 = vmatprep.subr.bf16.mxu0 0
        %1261 = vmatpush1.bf16.msra.mxu0 0
        %1262 = vmatprep.subr.bf16.mxu0 0
        %1263 = vmatpush1.bf16.msra.mxu0 0
        %1264 = vmatprep.subr.bf16.mxu0 0
        %1265 = vmatpush1.bf16.msra.mxu0 0
        %1266 = vmatprep.subr.bf16.mxu0 0
        %1267 = vmatpush1.bf16.msra.mxu0 0
        %1268 = vmatprep.subr.bf16.mxu0 0
        %1269 = vmatpush1.bf16.msra.mxu0 0
        %1270 = vmatprep.subr.bf16.mxu0 0
        %1271 = vmatpush1.bf16.msra.mxu0 0
        %1272 = vmatprep.subr.bf16.mxu0 0
        %1273 = vmatpush1.bf16.msra.mxu0 0
        %1274 = vmatprep.mubr.bf16.mxu0 0
        %1275 = vmatmul.mubr.bf16.gmra.mrb[0].mxu0 %v1122
        %v1276 = vpop.f32.mrb[0].mxu0
        %v1277 = vadd.f32 %v1043, %v1276
        %v1278 = vpop.f32.mrb[0].mxu0
        %v1279 = vpop.f32.mrb[0].mxu0
        %v1280 = vadd.f32 %v1046, %v1279
        %v1281 = vpop.f32.mrb[0].mxu0
        %1282 = vmatprep.mubr.bf16.mxu0 0
        %1283 = vmatmul.mubr.bf16.gmra.mrb[0].mxu0 %v1131
        %v1284 = vpop.f32.mrb[0].mxu0
        %v1285 = vadd.f32 %v1051, %v1284
        %v1286 = vpop.f32.mrb[0].mxu0
        %v1287 = vpop.f32.mrb[0].mxu0
        %v1288 = vadd.f32 %v1054, %v1287
        %v1289 = vpop.f32.mrb[0].mxu0
        %1290 = vmatprep.mubr.bf16.mxu0 0
        %1291 = vmatmul.mubr.bf16.gmra.mrb[0].mxu0 %v1140
        %v1292 = vpop.f32.mrb[0].mxu0
        %v1293 = vadd.f32 %v1059, %v1292
        %v1294 = vpop.f32.mrb[0].mxu0
        %v1295 = vpop.f32.mrb[0].mxu0
        %v1296 = vadd.f32 %v1062, %v1295
        %v1297 = vpop.f32.mrb[0].mxu0
        %1298 = vmatprep.mubr.bf16.mxu0 0
        %1299 = vmatmul.mubr.bf16.gmra.mrb[0].mxu0 %v1149
        %v1300 = vpop.f32.mrb[0].mxu0
        %v1301 = vadd.f32 %v1067, %v1300
        %v1302 = vpop.f32.mrb[0].mxu0
        %v1303 = vpop.f32.mrb[0].mxu0
        %v1304 = vadd.f32 %v1070, %v1303
        %v1305 = vpop.f32.mrb[0].mxu0
        %1306 = vmatprep.mubr.bf16.mxu0 0
        %1307 = vmatmul.mubr.bf16.gmra.mrb[0].mxu0 %v1158
        %v1308 = vpop.f32.mrb[0].mxu0
        %v1309 = vadd.f32 %v1075, %v1308
        %v1310 = vpop.f32.mrb[0].mxu0
        %v1311 = vpop.f32.mrb[0].mxu0
        %v1312 = vadd.f32 %v1078, %v1311
        %v1313 = vpop.f32.mrb[0].mxu0
        %1314 = vmatprep.mubr.bf16.mxu0 0
        %1315 = vmatmul.mubr.bf16.gmra.mrb[0].mxu0 %v1167
        %v1316 = vpop.f32.mrb[0].mxu0
        %v1317 = vadd.f32 %v1083, %v1316
        %v1318 = vpop.f32.mrb[0].mxu0
        %v1319 = vpop.f32.mrb[0].mxu0
        %v1320 = vadd.f32 %v1086, %v1319
        %v1321 = vpop.f32.mrb[0].mxu0
        %1322 = vmatprep.mubr.bf16.mxu0 0
        %1323 = vmatmul.mubr.bf16.gmra.mrb[0].mxu0 %v1176
        %v1324 = vpop.f32.mrb[0].mxu0
        %v1325 = vadd.f32 %v1091, %v1324
        %v1326 = vpop.f32.mrb[0].mxu0
        %v1327 = vpop.f32.mrb[0].mxu0
        %v1328 = vadd.f32 %v1094, %v1327
        %v1329 = vpop.f32.mrb[0].mxu0
        %1330 = vmatprep.mubr.bf16.mxu0 0
        %1331 = vmatmul.mubr.bf16.gmra.mrb[0].mxu0 %v1185
        %v1332 = vpop.f32.mrb[0].mxu0
        %v1333 = vadd.f32 %v1099, %v1332
        %v1334 = vpop.f32.mrb[0].mxu0
        %v1335 = vpop.f32.mrb[0].mxu0
        %v1336 = vadd.f32 %v1102, %v1335
        %v1337 = vpop.f32.mrb[0].mxu0
        %1338 = vdwg.mxu0
        %v1339 = vld [vmem:[#allocation2 + $0x40] sm:$0x1f]
        %v1340 = vsel %vm688, 1, 0
        %v1341 = vsel %vm689, 1, 0
        %v1342 = vsel %vm690, 1, 0
        %v1343 = vsel %vm691, 1, 0
        %v1344 = vsel %vm692, 1, 0
        %v1345 = vsel %vm693, 1, 0
        %v1346 = vsel %vm694, 1, 0
        %v1347 = vsel %vm695, 1, 0
        %v1348 = vsel %vm696, 1, 0
        %v1349 = vsel %vm697, 1, 0
        %v1350 = vsel %vm698, 1, 0
        %v1351 = vsel %vm699, 1, 0
        %v1352 = vsel %vm700, 1, 0
        %v1353 = vsel %vm701, 1, 0
        %v1354 = vsel %vm702, 1, 0
        %v1355 = vsel %vm703, 1, 0
        %vm1356 = vcmp.eq.s32.totalorder %v1340, 1
        %vm1357 = vcmp.eq.s32.totalorder %v1341, 1
        %vm1358 = vcmp.eq.s32.totalorder %v1342, 1
        %vm1359 = vcmp.eq.s32.totalorder %v1343, 1
        %vm1360 = vcmp.eq.s32.totalorder %v1344, 1
        %vm1361 = vcmp.eq.s32.totalorder %v1345, 1
        %vm1362 = vcmp.eq.s32.totalorder %v1346, 1
        %vm1363 = vcmp.eq.s32.totalorder %v1347, 1
        %vm1364 = vcmp.eq.s32.totalorder %v1348, 1
        %vm1365 = vcmp.eq.s32.totalorder %v1349, 1
        %vm1366 = vcmp.eq.s32.totalorder %v1350, 1
        %vm1367 = vcmp.eq.s32.totalorder %v1351, 1
        %vm1368 = vcmp.eq.s32.totalorder %v1352, 1
        %vm1369 = vcmp.eq.s32.totalorder %v1353, 1
        %vm1370 = vcmp.eq.s32.totalorder %v1354, 1
        %vm1371 = vcmp.eq.s32.totalorder %v1355, 1
        %vm1372 = vmpackc.low %vm1356, %vm1356
        %vm1373 = vmpackc.low %vm1357, %vm1357
        %vm1374 = vmpackc.low %vm1358, %vm1358
        %vm1375 = vmpackc.low %vm1359, %vm1359
        %vm1376 = vmpackc.low %vm1360, %vm1360
        %vm1377 = vmpackc.low %vm1361, %vm1361
        %vm1378 = vmpackc.low %vm1362, %vm1362
        %vm1379 = vmpackc.low %vm1363, %vm1363
        %vm1380 = vmpackc.low %vm1364, %vm1364
        %vm1381 = vmpackc.low %vm1365, %vm1365
        %vm1382 = vmpackc.low %vm1366, %vm1366
        %vm1383 = vmpackc.low %vm1367, %vm1367
        %vm1384 = vmpackc.low %vm1368, %vm1368
        %vm1385 = vmpackc.low %vm1369, %vm1369
        %vm1386 = vmpackc.low %vm1370, %vm1370
        %vm1387 = vmpackc.low %vm1371, %vm1371
        %v1388 = vsel %vm1372, 65537, 0
        %v1389 = vsel %vm1373, 65537, 0
        %v1390 = vsel %vm1374, 65537, 0
        %v1391 = vsel %vm1375, 65537, 0
        %v1392 = vsel %vm1376, 65537, 0
        %v1393 = vsel %vm1377, 65537, 0
        %v1394 = vsel %vm1378, 65537, 0
        %v1395 = vsel %vm1379, 65537, 0
        %v1396 = vsel %vm1380, 65537, 0
        %v1397 = vsel %vm1381, 65537, 0
        %v1398 = vsel %vm1382, 65537, 0
        %v1399 = vsel %vm1383, 65537, 0
        %v1400 = vsel %vm1384, 65537, 0
        %v1401 = vsel %vm1385, 65537, 0
        %v1402 = vsel %vm1386, 65537, 0
        %v1403 = vsel %vm1387, 65537, 0
        %v1404 = vunpack.c.l.b16 %v1388
        %v1405 = vunpack.c.l.b16 %v1389
        %v1406 = vunpack.c.l.b16 %v1390
        %v1407 = vunpack.c.l.b16 %v1391
        %v1408 = vunpack.c.l.b16 %v1392
        %v1409 = vunpack.c.l.b16 %v1393
        %v1410 = vunpack.c.l.b16 %v1394
        %v1411 = vunpack.c.l.b16 %v1395
        %v1412 = vunpack.c.l.b16 %v1396
        %v1413 = vunpack.c.l.b16 %v1397
        %v1414 = vunpack.c.l.b16 %v1398
        %v1415 = vunpack.c.l.b16 %v1399
        %v1416 = vunpack.c.l.b16 %v1400
        %v1417 = vunpack.c.l.b16 %v1401
        %v1418 = vunpack.c.l.b16 %v1402
        %v1419 = vunpack.c.l.b16 %v1403
        %v1420 = vpack.c.b16 %v1405, %v1404
        %v1421 = vpack.c.b16 %v1407, %v1406
        %v1422 = vpack.c.b16 %v1409, %v1408
        %v1423 = vpack.c.b16 %v1411, %v1410
        %v1424 = vpack.c.b16 %v1413, %v1412
        %v1425 = vpack.c.b16 %v1415, %v1414
        %v1426 = vpack.c.b16 %v1417, %v1416
        %v1427 = vpack.c.b16 %v1419, %v1418
        %v1429 = vshrl.u32 %v1420, 16
        %v1431 = vrot.slane %v1429, 3
        %v1432 = vshll.u32 %v1420, 16
        %v1434 = vrot.slane %v1432, 4
        %v1435 = vor.u32 %v1431, %v1434
        %v1437 = vshrl.u32 %v1421, 16
        %v1439 = vrot.slane %v1437, 3
        %v1440 = vshll.u32 %v1421, 16
        %v1442 = vrot.slane %v1440, 4
        %v1443 = vor.u32 %v1439, %v1442
        %v1444 = vsel %vm1105, %v1435, %v1443
        %v1446 = vshrl.u32 %v1422, 16
        %v1448 = vrot.slane %v1446, 3
        %v1449 = vshll.u32 %v1422, 16
        %v1451 = vrot.slane %v1449, 4
        %v1452 = vor.u32 %v1448, %v1451
        %v1453 = vsel %vm1105, %v1443, %v1452
        %v1455 = vshrl.u32 %v1423, 16
        %v1457 = vrot.slane %v1455, 3
        %v1458 = vshll.u32 %v1423, 16
        %v1460 = vrot.slane %v1458, 4
        %v1461 = vor.u32 %v1457, %v1460
        %v1462 = vsel %vm1105, %v1452, %v1461
        %v1464 = vshrl.u32 %v1424, 16
        %v1466 = vrot.slane %v1464, 3
        %v1467 = vshll.u32 %v1424, 16
        %v1469 = vrot.slane %v1467, 4
        %v1470 = vor.u32 %v1466, %v1469
        %v1471 = vsel %vm1105, %v1461, %v1470
        %v1473 = vshrl.u32 %v1425, 16
        %v1475 = vrot.slane %v1473, 3
        %v1476 = vshll.u32 %v1425, 16
        %v1478 = vrot.slane %v1476, 4
        %v1479 = vor.u32 %v1475, %v1478
        %v1480 = vsel %vm1105, %v1470, %v1479
        %v1482 = vshrl.u32 %v1426, 16
        %v1484 = vrot.slane %v1482, 3
        %v1485 = vshll.u32 %v1426, 16
        %v1487 = vrot.slane %v1485, 4
        %v1488 = vor.u32 %v1484, %v1487
        %v1489 = vsel %vm1105, %v1479, %v1488
        %v1491 = vshrl.u32 %v1427, 16
        %v1493 = vrot.slane %v1491, 3
        %v1494 = vshll.u32 %v1427, 16
        %v1496 = vrot.slane %v1494, 4
        %v1497 = vor.u32 %v1493, %v1496
        %v1498 = vsel %vm1105, %v1488, %v1497
        %vm1499 = vcmp.ne.s16.totalorder %v1435, 0
        %vm1500 = vcmp.ne.s16.totalorder %v1444, 0
        %vm1501 = vcmp.ne.s16.totalorder %v1453, 0
        %vm1502 = vcmp.ne.s16.totalorder %v1462, 0
        %vm1503 = vcmp.ne.s16.totalorder %v1471, 0
        %vm1504 = vcmp.ne.s16.totalorder %v1480, 0
        %vm1505 = vcmp.ne.s16.totalorder %v1489, 0
        %vm1506 = vcmp.ne.s16.totalorder %v1498, 0
        %vm1507 = vcmp.ne.s16.totalorder %v1497, 0
        %v1508 = vsel %vm1499, %v907, 0
        %v1509 = vsel %vm1500, %v705, 0
        %v1510 = vsel %vm1501, %v706, 0
        %v1511 = vsel %vm1502, %v707, 0
        %v1512 = vsel %vm1503, %v708, 0
        %v1513 = vsel %vm1504, %v709, 0
        %v1514 = vsel %vm1505, %v710, 0
        %v1515 = vsel %vm1506, %v711, 0
        %v1516 = vsel %vm1507, %v1339, 0
        %s1517 = scalar_lea.vmem [#allocation8], 128
        %v1518 = vld [vmem:[%s1517] sm:$0xf]
        %v1519 = vld [vmem:[%s1517 + $0x4] sm:$0xf]
        %v1520 = vld [vmem:[%s1517 + $0x8] sm:$0xf]
        %v1521 = vld [vmem:[%s1517 + $0xc] sm:$0xf]
        %v1522 = vld [vmem:[%s1517 + $0x10] sm:$0xf]
        %v1523 = vld [vmem:[%s1517 + $0x14] sm:$0xf]
        %v1524 = vld [vmem:[%s1517 + $0x18] sm:$0xf]
        %v1525 = vld [vmem:[%s1517 + $0x1c] sm:$0xf]
        %v1526 = vld [vmem:[%s1517 + $0x20] sm:$0xf]
        %v1527 = vld [vmem:[%s1517 + $0x24] sm:$0xf]
        %v1528 = vld [vmem:[%s1517 + $0x28] sm:$0xf]
        %v1529 = vld [vmem:[%s1517 + $0x2c] sm:$0xf]
        %v1530 = vld [vmem:[%s1517 + $0x30] sm:$0xf]
        %v1531 = vld [vmem:[%s1517 + $0x34] sm:$0xf]
        %v1532 = vld [vmem:[%s1517 + $0x38] sm:$0xf]
        %v1533 = vld [vmem:[%s1517 + $0x3c] sm:$0xf]
        %v1535 = vshrl.u32 %v1508, 16
        %v1537 = vrot.slane %v1535, 4
        %v1538 = vshll.u32 %v1508, 16
        %v1540 = vrot.slane %v1538, 5
        %v1541 = vor.u32 %v1537, %v1540
        %v1543 = vshrl.u32 %v1509, 16
        %v1545 = vrot.slane %v1543, 4
        %v1546 = vshll.u32 %v1509, 16
        %v1548 = vrot.slane %v1546, 5
        %v1549 = vor.u32 %v1545, %v1548
        %v1550 = vsel %vm801, %v1541, %v1549
        %v1552 = vshrl.u32 %v1510, 16
        %v1554 = vrot.slane %v1552, 4
        %v1555 = vshll.u32 %v1510, 16
        %v1557 = vrot.slane %v1555, 5
        %v1558 = vor.u32 %v1554, %v1557
        %v1559 = vsel %vm801, %v1549, %v1558
        %v1561 = vshrl.u32 %v1511, 16
        %v1563 = vrot.slane %v1561, 4
        %v1564 = vshll.u32 %v1511, 16
        %v1566 = vrot.slane %v1564, 5
        %v1567 = vor.u32 %v1563, %v1566
        %v1568 = vsel %vm801, %v1558, %v1567
        %v1570 = vshrl.u32 %v1512, 16
        %v1572 = vrot.slane %v1570, 4
        %v1573 = vshll.u32 %v1512, 16
        %v1575 = vrot.slane %v1573, 5
        %v1576 = vor.u32 %v1572, %v1575
        %v1577 = vsel %vm801, %v1567, %v1576
        %v1579 = vshrl.u32 %v1513, 16
        %v1581 = vrot.slane %v1579, 4
        %v1582 = vshll.u32 %v1513, 16
        %v1584 = vrot.slane %v1582, 5
        %v1585 = vor.u32 %v1581, %v1584
        %v1586 = vsel %vm801, %v1576, %v1585
        %v1588 = vshrl.u32 %v1514, 16
        %v1590 = vrot.slane %v1588, 4
        %v1591 = vshll.u32 %v1514, 16
        %v1593 = vrot.slane %v1591, 5
        %v1594 = vor.u32 %v1590, %v1593
        %v1595 = vsel %vm801, %v1585, %v1594
        %v1597 = vshrl.u32 %v1515, 16
        %v1599 = vrot.slane %v1597, 4
        %v1600 = vshll.u32 %v1515, 16
        %v1602 = vrot.slane %v1600, 5
        %v1603 = vor.u32 %v1599, %v1602
        %v1604 = vsel %vm801, %v1594, %v1603
        %v1606 = vshrl.u32 %v1516, 16
        %v1608 = vrot.slane %v1606, 4
        %v1609 = vshll.u32 %v1516, 16
        %v1611 = vrot.slane %v1609, 5
        %v1612 = vor.u32 %v1608, %v1611
        %v1613 = vsel %vm801, %v1603, %v1612
        %v1638 = vunpack.c.l.b16 %v1518
        %v1639 = vunpack.c.l.b16 %v1519
        %v1640 = vunpack.c.l.b16 %v1520
        %v1641 = vunpack.c.l.b16 %v1521
        %v1642 = vunpack.c.l.b16 %v1522
        %v1643 = vunpack.c.l.b16 %v1523
        %v1644 = vunpack.c.l.b16 %v1524
        %v1645 = vunpack.c.l.b16 %v1525
        %v1646 = vunpack.c.l.b16 %v1526
        %v1647 = vunpack.c.l.b16 %v1527
        %v1648 = vunpack.c.l.b16 %v1528
        %v1649 = vunpack.c.l.b16 %v1529
        %v1650 = vunpack.c.l.b16 %v1530
        %v1651 = vunpack.c.l.b16 %v1531
        %v1652 = vunpack.c.l.b16 %v1532
        %v1653 = vunpack.c.l.b16 %v1533
        %v1654 = vpack.c.b16 %v1639, %v1638
        %v1655 = vpack.c.b16 %v1641, %v1640
        %v1656 = vpack.c.b16 %v1643, %v1642
        %v1657 = vpack.c.b16 %v1645, %v1644
        %v1658 = vpack.c.b16 %v1647, %v1646
        %v1659 = vpack.c.b16 %v1649, %v1648
        %v1660 = vpack.c.b16 %v1651, %v1650
        %v1661 = vpack.c.b16 %v1653, %v1652
        %1670 = vmatprep.subr.bf16.mxu0 0
        %1671 = vmatpush1.bf16.msra.mxu0 %v1654
        %1672 = vmatprep.subr.bf16.mxu0 0
        %1673 = vmatpush1.bf16.msra.mxu0 %v1655
        %1674 = vmatprep.subr.bf16.mxu0 0
        %1675 = vmatpush1.bf16.msra.mxu0 %v1656
        %1676 = vmatprep.subr.bf16.mxu0 0
        %1677 = vmatpush1.bf16.msra.mxu0 %v1657
        %1678 = vmatprep.subr.bf16.mxu0 0
        %1679 = vmatpush1.bf16.msra.mxu0 %v1658
        %1680 = vmatprep.subr.bf16.mxu0 0
        %1681 = vmatpush1.bf16.msra.mxu0 %v1659
        %1682 = vmatprep.subr.bf16.mxu0 0
        %1683 = vmatpush1.bf16.msra.mxu0 %v1660
        %1684 = vmatprep.subr.bf16.mxu0 0
        %1685 = vmatpush1.bf16.msra.mxu0 %v1661
        %1686 = vmatprep.subr.bf16.mxu0 0
        %1687 = vmatpush1.bf16.msra.mxu0 0
        %1688 = vmatprep.subr.bf16.mxu0 0
        %1689 = vmatpush1.bf16.msra.mxu0 0
        %1690 = vmatprep.subr.bf16.mxu0 0
        %1691 = vmatpush1.bf16.msra.mxu0 0
        %1692 = vmatprep.subr.bf16.mxu0 0
        %1693 = vmatpush1.bf16.msra.mxu0 0
        %1694 = vmatprep.subr.bf16.mxu0 0
        %1695 = vmatpush1.bf16.msra.mxu0 0
        %1696 = vmatprep.subr.bf16.mxu0 0
        %1697 = vmatpush1.bf16.msra.mxu0 0
        %1698 = vmatprep.subr.bf16.mxu0 0
        %1699 = vmatpush1.bf16.msra.mxu0 0
        %1700 = vmatprep.subr.bf16.mxu0 0
        %1701 = vmatpush1.bf16.msra.mxu0 0
        %1702 = vmatprep.mubr.bf16.mxu0 0
        %1703 = vmatmul.mubr.bf16.gmra.mrb[0].mxu0 %v1550
        %v1704 = vpop.f32.mrb[0].mxu0
        %v1705 = vadd.f32 0.0, %v1704
        %v1706 = vpop.f32.mrb[0].mxu0
        %v1707 = vpop.f32.mrb[0].mxu0
        %v1708 = vadd.f32 0.0, %v1707
        %v1709 = vpop.f32.mrb[0].mxu0
        %1710 = vmatprep.mubr.bf16.mxu0 0
        %1711 = vmatmul.mubr.bf16.gmra.mrb[0].mxu0 %v1559
        %v1712 = vpop.f32.mrb[0].mxu0
        %v1713 = vadd.f32 0.0, %v1712
        %v1714 = vpop.f32.mrb[0].mxu0
        %v1715 = vpop.f32.mrb[0].mxu0
        %v1716 = vadd.f32 0.0, %v1715
        %v1717 = vpop.f32.mrb[0].mxu0
        %1718 = vmatprep.mubr.bf16.mxu0 0
        %1719 = vmatmul.mubr.bf16.gmra.mrb[0].mxu0 %v1568
        %v1720 = vpop.f32.mrb[0].mxu0
        %v1721 = vadd.f32 0.0, %v1720
        %v1722 = vpop.f32.mrb[0].mxu0
        %v1723 = vpop.f32.mrb[0].mxu0
        %v1724 = vadd.f32 0.0, %v1723
        %v1725 = vpop.f32.mrb[0].mxu0
        %1726 = vmatprep.mubr.bf16.mxu0 0
        %1727 = vmatmul.mubr.bf16.gmra.mrb[0].mxu0 %v1577
        %v1728 = vpop.f32.mrb[0].mxu0
        %v1729 = vadd.f32 0.0, %v1728
        %v1730 = vpop.f32.mrb[0].mxu0
        %v1731 = vpop.f32.mrb[0].mxu0
        %v1732 = vadd.f32 0.0, %v1731
        %v1733 = vpop.f32.mrb[0].mxu0
        %1734 = vmatprep.mubr.bf16.mxu0 0
        %1735 = vmatmul.mubr.bf16.gmra.mrb[0].mxu0 %v1586
        %v1736 = vpop.f32.mrb[0].mxu0
        %v1737 = vadd.f32 0.0, %v1736
        %v1738 = vpop.f32.mrb[0].mxu0
        %v1739 = vpop.f32.mrb[0].mxu0
        %v1740 = vadd.f32 0.0, %v1739
        %v1741 = vpop.f32.mrb[0].mxu0
        %1742 = vmatprep.mubr.bf16.mxu0 0
        %1743 = vmatmul.mubr.bf16.gmra.mrb[0].mxu0 %v1595
        %v1744 = vpop.f32.mrb[0].mxu0
        %v1745 = vadd.f32 0.0, %v1744
        %v1746 = vpop.f32.mrb[0].mxu0
        %v1747 = vpop.f32.mrb[0].mxu0
        %v1748 = vadd.f32 0.0, %v1747
        %v1749 = vpop.f32.mrb[0].mxu0
        %1750 = vmatprep.mubr.bf16.mxu0 0
        %1751 = vmatmul.mubr.bf16.gmra.mrb[0].mxu0 %v1604
        %v1752 = vpop.f32.mrb[0].mxu0
        %v1753 = vadd.f32 0.0, %v1752
        %v1754 = vpop.f32.mrb[0].mxu0
        %v1755 = vpop.f32.mrb[0].mxu0
        %v1756 = vadd.f32 0.0, %v1755
        %v1757 = vpop.f32.mrb[0].mxu0
        %1758 = vmatprep.mubr.bf16.mxu0 0
        %1759 = vmatmul.mubr.bf16.gmra.mrb[0].mxu0 %v1613
        %v1760 = vpop.f32.mrb[0].mxu0
        %v1761 = vadd.f32 0.0, %v1760
        %v1762 = vpop.f32.mrb[0].mxu0
        %v1763 = vpop.f32.mrb[0].mxu0
        %v1764 = vadd.f32 0.0, %v1763
        %v1765 = vpop.f32.mrb[0].mxu0
        %1766 = vdwg.mxu0
        %v1767 = vadd.f32 %v1277, %v1705
        %v1768 = vadd.f32 %v1280, %v1708
        %v1769 = vadd.f32 %v1285, %v1713
        %v1770 = vadd.f32 %v1288, %v1716
        %v1771 = vadd.f32 %v1293, %v1721
        %v1772 = vadd.f32 %v1296, %v1724
        %v1773 = vadd.f32 %v1301, %v1729
        %v1774 = vadd.f32 %v1304, %v1732
        %v1775 = vadd.f32 %v1309, %v1737
        %v1776 = vadd.f32 %v1312, %v1740
        %v1777 = vadd.f32 %v1317, %v1745
        %v1778 = vadd.f32 %v1320, %v1748
        %v1779 = vadd.f32 %v1325, %v1753
        %v1780 = vadd.f32 %v1328, %v1756
        %v1781 = vadd.f32 %v1333, %v1761
        %v1782 = vadd.f32 %v1336, %v1764
        %v1783 = vld [vmem:[#allocation2 + $0x8] sm:$0xf8]
        %v1784 = vld [vmem:[#allocation2 + $0x10] sm:$0xff]
        %v1785 = vld [vmem:[#allocation2 + $0x18] sm:$0xff]
        %v1786 = vld [vmem:[#allocation2 + $0x20] sm:$0xff]
        %v1787 = vld [vmem:[#allocation2 + $0x28] sm:$0xff]
        %v1788 = vld [vmem:[#allocation2 + $0x30] sm:$0xff]
        %v1789 = vld [vmem:[#allocation2 + $0x38] sm:$0xff]
        %v1790 = vld [vmem:[#allocation2 + $0x40] sm:$0xff]
        %v1791 = vld [vmem:[#allocation2 + $0x48] sm:$0xf]
        %v1792 = vsel %vm873, %v1783, 0
        %v1793 = vsel %vm874, %v1784, 0
        %v1794 = vsel %vm875, %v1785, 0
        %v1795 = vsel %vm876, %v1786, 0
        %v1796 = vsel %vm877, %v1787, 0
        %v1797 = vsel %vm878, %v1788, 0
        %v1798 = vsel %vm879, %v1789, 0
        %v1799 = vsel %vm880, %v1790, 0
        %v1800 = vsel %vm881, %v1791, 0
        %s1801 = scalar_lea.vmem [#allocation8], 192
        %v1802 = vld [vmem:[%s1801] sm:$0xf]
        %v1803 = vld [vmem:[%s1801 + $0x4] sm:$0xf]
        %v1804 = vld [vmem:[%s1801 + $0x8] sm:$0xf]
        %v1805 = vld [vmem:[%s1801 + $0xc] sm:$0xf]
        %v1806 = vld [vmem:[%s1801 + $0x10] sm:$0xf]
        %v1807 = vld [vmem:[%s1801 + $0x14] sm:$0xf]
        %v1808 = vld [vmem:[%s1801 + $0x18] sm:$0xf]
        %v1809 = vld [vmem:[%s1801 + $0x1c] sm:$0xf]
        %v1810 = vld [vmem:[%s1801 + $0x20] sm:$0xf]
        %v1811 = vld [vmem:[%s1801 + $0x24] sm:$0xf]
        %v1812 = vld [vmem:[%s1801 + $0x28] sm:$0xf]
        %v1813 = vld [vmem:[%s1801 + $0x2c] sm:$0xf]
        %v1814 = vld [vmem:[%s1801 + $0x30] sm:$0xf]
        %v1815 = vld [vmem:[%s1801 + $0x34] sm:$0xf]
        %v1816 = vld [vmem:[%s1801 + $0x38] sm:$0xf]
        %v1817 = vld [vmem:[%s1801 + $0x3c] sm:$0xf]
        %v1819 = vshrl.u32 %v1792, 16
        %v1821 = vrot.slane %v1819, 3
        %v1822 = vshll.u32 %v1792, 16
        %v1824 = vrot.slane %v1822, 4
        %v1825 = vor.u32 %v1821, %v1824
        %v1827 = vshrl.u32 %v1793, 16
        %v1829 = vrot.slane %v1827, 3
        %v1830 = vshll.u32 %v1793, 16
        %v1832 = vrot.slane %v1830, 4
        %v1833 = vor.u32 %v1829, %v1832
        %v1834 = vsel %vm1105, %v1825, %v1833
        %v1836 = vshrl.u32 %v1794, 16
        %v1838 = vrot.slane %v1836, 3
        %v1839 = vshll.u32 %v1794, 16
        %v1841 = vrot.slane %v1839, 4
        %v1842 = vor.u32 %v1838, %v1841
        %v1843 = vsel %vm1105, %v1833, %v1842
        %v1845 = vshrl.u32 %v1795, 16
        %v1847 = vrot.slane %v1845, 3
        %v1848 = vshll.u32 %v1795, 16
        %v1850 = vrot.slane %v1848, 4
        %v1851 = vor.u32 %v1847, %v1850
        %v1852 = vsel %vm1105, %v1842, %v1851
        %v1854 = vshrl.u32 %v1796, 16
        %v1856 = vrot.slane %v1854, 3
        %v1857 = vshll.u32 %v1796, 16
        %v1859 = vrot.slane %v1857, 4
        %v1860 = vor.u32 %v1856, %v1859
        %v1861 = vsel %vm1105, %v1851, %v1860
        %v1863 = vshrl.u32 %v1797, 16
        %v1865 = vrot.slane %v1863, 3
        %v1866 = vshll.u32 %v1797, 16
        %v1868 = vrot.slane %v1866, 4
        %v1869 = vor.u32 %v1865, %v1868
        %v1870 = vsel %vm1105, %v1860, %v1869
        %v1872 = vshrl.u32 %v1798, 16
        %v1874 = vrot.slane %v1872, 3
        %v1875 = vshll.u32 %v1798, 16
        %v1877 = vrot.slane %v1875, 4
        %v1878 = vor.u32 %v1874, %v1877
        %v1879 = vsel %vm1105, %v1869, %v1878
        %v1881 = vshrl.u32 %v1799, 16
        %v1883 = vrot.slane %v1881, 3
        %v1884 = vshll.u32 %v1799, 16
        %v1886 = vrot.slane %v1884, 4
        %v1887 = vor.u32 %v1883, %v1886
        %v1888 = vsel %vm1105, %v1878, %v1887
        %v1890 = vshrl.u32 %v1800, 16
        %v1892 = vrot.slane %v1890, 3
        %v1893 = vshll.u32 %v1800, 16
        %v1895 = vrot.slane %v1893, 4
        %v1896 = vor.u32 %v1892, %v1895
        %v1897 = vsel %vm1105, %v1887, %v1896
        %v1922 = vunpack.c.l.b16 %v1802
        %v1923 = vunpack.c.l.b16 %v1803
        %v1924 = vunpack.c.l.b16 %v1804
        %v1925 = vunpack.c.l.b16 %v1805
        %v1926 = vunpack.c.l.b16 %v1806
        %v1927 = vunpack.c.l.b16 %v1807
        %v1928 = vunpack.c.l.b16 %v1808
        %v1929 = vunpack.c.l.b16 %v1809
        %v1930 = vunpack.c.l.b16 %v1810
        %v1931 = vunpack.c.l.b16 %v1811
        %v1932 = vunpack.c.l.b16 %v1812
        %v1933 = vunpack.c.l.b16 %v1813
        %v1934 = vunpack.c.l.b16 %v1814
        %v1935 = vunpack.c.l.b16 %v1815
        %v1936 = vunpack.c.l.b16 %v1816
        %v1937 = vunpack.c.l.b16 %v1817
        %v1938 = vpack.c.b16 %v1923, %v1922
        %v1939 = vpack.c.b16 %v1925, %v1924
        %v1940 = vpack.c.b16 %v1927, %v1926
        %v1941 = vpack.c.b16 %v1929, %v1928
        %v1942 = vpack.c.b16 %v1931, %v1930
        %v1943 = vpack.c.b16 %v1933, %v1932
        %v1944 = vpack.c.b16 %v1935, %v1934
        %v1945 = vpack.c.b16 %v1937, %v1936
        %1954 = vmatprep.subr.bf16.mxu0 0
        %1955 = vmatpush1.bf16.msra.mxu0 %v1938
        %1956 = vmatprep.subr.bf16.mxu0 0
        %1957 = vmatpush1.bf16.msra.mxu0 %v1939
        %1958 = vmatprep.subr.bf16.mxu0 0
        %1959 = vmatpush1.bf16.msra.mxu0 %v1940
        %1960 = vmatprep.subr.bf16.mxu0 0
        %1961 = vmatpush1.bf16.msra.mxu0 %v1941
        %1962 = vmatprep.subr.bf16.mxu0 0
        %1963 = vmatpush1.bf16.msra.mxu0 %v1942
        %1964 = vmatprep.subr.bf16.mxu0 0
        %1965 = vmatpush1.bf16.msra.mxu0 %v1943
        %1966 = vmatprep.subr.bf16.mxu0 0
        %1967 = vmatpush1.bf16.msra.mxu0 %v1944
        %1968 = vmatprep.subr.bf16.mxu0 0
        %1969 = vmatpush1.bf16.msra.mxu0 %v1945
        %1970 = vmatprep.subr.bf16.mxu0 0
        %1971 = vmatpush1.bf16.msra.mxu0 0
        %1972 = vmatprep.subr.bf16.mxu0 0
        %1973 = vmatpush1.bf16.msra.mxu0 0
        %1974 = vmatprep.subr.bf16.mxu0 0
        %1975 = vmatpush1.bf16.msra.mxu0 0
        %1976 = vmatprep.subr.bf16.mxu0 0
        %1977 = vmatpush1.bf16.msra.mxu0 0
        %1978 = vmatprep.subr.bf16.mxu0 0
        %1979 = vmatpush1.bf16.msra.mxu0 0
        %1980 = vmatprep.subr.bf16.mxu0 0
        %1981 = vmatpush1.bf16.msra.mxu0 0
        %1982 = vmatprep.subr.bf16.mxu0 0
        %1983 = vmatpush1.bf16.msra.mxu0 0
        %1984 = vmatprep.subr.bf16.mxu0 0
        %1985 = vmatpush1.bf16.msra.mxu0 0
        %1986 = vmatprep.mubr.bf16.mxu0 0
        %1987 = vmatmul.mubr.bf16.gmra.mrb[0].mxu0 %v1834
        %v1988 = vpop.f32.mrb[0].mxu0
        %v1989 = vadd.f32 0.0, %v1988
        %v1990 = vpop.f32.mrb[0].mxu0
        %v1991 = vpop.f32.mrb[0].mxu0
        %v1992 = vadd.f32 0.0, %v1991
        %v1993 = vpop.f32.mrb[0].mxu0
        %1994 = vmatprep.mubr.bf16.mxu0 0
        %1995 = vmatmul.mubr.bf16.gmra.mrb[0].mxu0 %v1843
        %v1996 = vpop.f32.mrb[0].mxu0
        %v1997 = vadd.f32 0.0, %v1996
        %v1998 = vpop.f32.mrb[0].mxu0
        %v1999 = vpop.f32.mrb[0].mxu0
        %v2000 = vadd.f32 0.0, %v1999
        %v2001 = vpop.f32.mrb[0].mxu0
        %2002 = vmatprep.mubr.bf16.mxu0 0
        %2003 = vmatmul.mubr.bf16.gmra.mrb[0].mxu0 %v1852
        %v2004 = vpop.f32.mrb[0].mxu0
        %v2005 = vadd.f32 0.0, %v2004
        %v2006 = vpop.f32.mrb[0].mxu0
        %v2007 = vpop.f32.mrb[0].mxu0
        %v2008 = vadd.f32 0.0, %v2007
        %v2009 = vpop.f32.mrb[0].mxu0
        %2010 = vmatprep.mubr.bf16.mxu0 0
        %2011 = vmatmul.mubr.bf16.gmra.mrb[0].mxu0 %v1861
        %v2012 = vpop.f32.mrb[0].mxu0
        %v2013 = vadd.f32 0.0, %v2012
        %v2014 = vpop.f32.mrb[0].mxu0
        %v2015 = vpop.f32.mrb[0].mxu0
        %v2016 = vadd.f32 0.0, %v2015
        %v2017 = vpop.f32.mrb[0].mxu0
        %2018 = vmatprep.mubr.bf16.mxu0 0
        %2019 = vmatmul.mubr.bf16.gmra.mrb[0].mxu0 %v1870
        %v2020 = vpop.f32.mrb[0].mxu0
        %v2021 = vadd.f32 0.0, %v2020
        %v2022 = vpop.f32.mrb[0].mxu0
        %v2023 = vpop.f32.mrb[0].mxu0
        %v2024 = vadd.f32 0.0, %v2023
        %v2025 = vpop.f32.mrb[0].mxu0
        %2026 = vmatprep.mubr.bf16.mxu0 0
        %2027 = vmatmul.mubr.bf16.gmra.mrb[0].mxu0 %v1879
        %v2028 = vpop.f32.mrb[0].mxu0
        %v2029 = vadd.f32 0.0, %v2028
        %v2030 = vpop.f32.mrb[0].mxu0
        %v2031 = vpop.f32.mrb[0].mxu0
        %v2032 = vadd.f32 0.0, %v2031
        %v2033 = vpop.f32.mrb[0].mxu0
        %2034 = vmatprep.mubr.bf16.mxu0 0
        %2035 = vmatmul.mubr.bf16.gmra.mrb[0].mxu0 %v1888
        %v2036 = vpop.f32.mrb[0].mxu0
        %v2037 = vadd.f32 0.0, %v2036
        %v2038 = vpop.f32.mrb[0].mxu0
        %v2039 = vpop.f32.mrb[0].mxu0
        %v2040 = vadd.f32 0.0, %v2039
        %v2041 = vpop.f32.mrb[0].mxu0
        %2042 = vmatprep.mubr.bf16.mxu0 0
        %2043 = vmatmul.mubr.bf16.gmra.mrb[0].mxu0 %v1897
        %v2044 = vpop.f32.mrb[0].mxu0
        %v2045 = vadd.f32 0.0, %v2044
        %v2046 = vpop.f32.mrb[0].mxu0
        %v2047 = vpop.f32.mrb[0].mxu0
        %v2048 = vadd.f32 0.0, %v2047
        %v2049 = vpop.f32.mrb[0].mxu0
        %2050 = vdwg.mxu0
        %v2051 = vadd.f32 %v1767, %v1989
        %v2052 = vadd.f32 %v1768, %v1992
        %v2053 = vadd.f32 %v1769, %v1997
        %v2054 = vadd.f32 %v1770, %v2000
        %v2055 = vadd.f32 %v1771, %v2005
        %v2056 = vadd.f32 %v1772, %v2008
        %v2057 = vadd.f32 %v1773, %v2013
        %v2058 = vadd.f32 %v1774, %v2016
        %v2059 = vadd.f32 %v1775, %v2021
        %v2060 = vadd.f32 %v1776, %v2024
        %v2061 = vadd.f32 %v1777, %v2029
        %v2062 = vadd.f32 %v1778, %v2032
        %v2063 = vadd.f32 %v1779, %v2037
        %v2064 = vadd.f32 %v1780, %v2040
        %v2065 = vadd.f32 %v1781, %v2045
        %v2066 = vadd.f32 %v1782, %v2048
        %v2067 = vld [vmem:[#allocation2 + $0x8] sm:$0xf0]
        %s2068 = scalar_lea.vmem [#allocation8], 256
        %v2069 = vld [vmem:[%s2068] sm:$0xf]
        %v2070 = vld [vmem:[%s2068 + $0x4] sm:$0xf]
        %v2071 = vld [vmem:[%s2068 + $0x8] sm:$0xf]
        %v2072 = vld [vmem:[%s2068 + $0xc] sm:$0xf]
        %v2073 = vld [vmem:[%s2068 + $0x10] sm:$0xf]
        %v2074 = vld [vmem:[%s2068 + $0x14] sm:$0xf]
        %v2075 = vld [vmem:[%s2068 + $0x18] sm:$0xf]
        %v2076 = vld [vmem:[%s2068 + $0x1c] sm:$0xf]
        %v2077 = vld [vmem:[%s2068 + $0x20] sm:$0xf]
        %v2078 = vld [vmem:[%s2068 + $0x24] sm:$0xf]
        %v2079 = vld [vmem:[%s2068 + $0x28] sm:$0xf]
        %v2080 = vld [vmem:[%s2068 + $0x2c] sm:$0xf]
        %v2081 = vld [vmem:[%s2068 + $0x30] sm:$0xf]
        %v2082 = vld [vmem:[%s2068 + $0x34] sm:$0xf]
        %v2083 = vld [vmem:[%s2068 + $0x38] sm:$0xf]
        %v2084 = vld [vmem:[%s2068 + $0x3c] sm:$0xf]
        %v2094 = vrot.slane %v2067, 4
        %v2095 = vrot.slane %v1784, 4
        %v2096 = vsel %vm934, %v2094, %v2095
        %v2097 = vrot.slane %v1785, 4
        %v2098 = vsel %vm934, %v2095, %v2097
        %v2099 = vrot.slane %v1786, 4
        %v2100 = vsel %vm934, %v2097, %v2099
        %v2101 = vrot.slane %v1787, 4
        %v2102 = vsel %vm934, %v2099, %v2101
        %v2103 = vrot.slane %v1788, 4
        %v2104 = vsel %vm934, %v2101, %v2103
        %v2105 = vrot.slane %v1789, 4
        %v2106 = vsel %vm934, %v2103, %v2105
        %v2107 = vrot.slane %v1790, 4
        %v2108 = vsel %vm934, %v2105, %v2107
        %v2109 = vrot.slane %v1791, 4
        %v2110 = vsel %vm934, %v2107, %v2109
        %v2135 = vunpack.c.l.b16 %v2069
        %v2136 = vunpack.c.l.b16 %v2070
        %v2137 = vunpack.c.l.b16 %v2071
        %v2138 = vunpack.c.l.b16 %v2072
        %v2139 = vunpack.c.l.b16 %v2073
        %v2140 = vunpack.c.l.b16 %v2074
        %v2141 = vunpack.c.l.b16 %v2075
        %v2142 = vunpack.c.l.b16 %v2076
        %v2143 = vunpack.c.l.b16 %v2077
        %v2144 = vunpack.c.l.b16 %v2078
        %v2145 = vunpack.c.l.b16 %v2079
        %v2146 = vunpack.c.l.b16 %v2080
        %v2147 = vunpack.c.l.b16 %v2081
        %v2148 = vunpack.c.l.b16 %v2082
        %v2149 = vunpack.c.l.b16 %v2083
        %v2150 = vunpack.c.l.b16 %v2084
        %v2151 = vpack.c.b16 %v2136, %v2135
        %v2152 = vpack.c.b16 %v2138, %v2137
        %v2153 = vpack.c.b16 %v2140, %v2139
        %v2154 = vpack.c.b16 %v2142, %v2141
        %v2155 = vpack.c.b16 %v2144, %v2143
        %v2156 = vpack.c.b16 %v2146, %v2145
        %v2157 = vpack.c.b16 %v2148, %v2147
        %v2158 = vpack.c.b16 %v2150, %v2149
        %2167 = vmatprep.subr.bf16.mxu0 0
        %2168 = vmatpush1.bf16.msra.mxu0 %v2151
        %2169 = vmatprep.subr.bf16.mxu0 0
        %2170 = vmatpush1.bf16.msra.mxu0 %v2152
        %2171 = vmatprep.subr.bf16.mxu0 0
        %2172 = vmatpush1.bf16.msra.mxu0 %v2153
        %2173 = vmatprep.subr.bf16.mxu0 0
        %2174 = vmatpush1.bf16.msra.mxu0 %v2154
        %2175 = vmatprep.subr.bf16.mxu0 0
        %2176 = vmatpush1.bf16.msra.mxu0 %v2155
        %2177 = vmatprep.subr.bf16.mxu0 0
        %2178 = vmatpush1.bf16.msra.mxu0 %v2156
        %2179 = vmatprep.subr.bf16.mxu0 0
        %2180 = vmatpush1.bf16.msra.mxu0 %v2157
        %2181 = vmatprep.subr.bf16.mxu0 0
        %2182 = vmatpush1.bf16.msra.mxu0 %v2158
        %2183 = vmatprep.subr.bf16.mxu0 0
        %2184 = vmatpush1.bf16.msra.mxu0 0
        %2185 = vmatprep.subr.bf16.mxu0 0
        %2186 = vmatpush1.bf16.msra.mxu0 0
        %2187 = vmatprep.subr.bf16.mxu0 0
        %2188 = vmatpush1.bf16.msra.mxu0 0
        %2189 = vmatprep.subr.bf16.mxu0 0
        %2190 = vmatpush1.bf16.msra.mxu0 0
        %2191 = vmatprep.subr.bf16.mxu0 0
        %2192 = vmatpush1.bf16.msra.mxu0 0
        %2193 = vmatprep.subr.bf16.mxu0 0
        %2194 = vmatpush1.bf16.msra.mxu0 0
        %2195 = vmatprep.subr.bf16.mxu0 0
        %2196 = vmatpush1.bf16.msra.mxu0 0
        %2197 = vmatprep.subr.bf16.mxu0 0
        %2198 = vmatpush1.bf16.msra.mxu0 0
        %2199 = vmatprep.mubr.bf16.mxu0 0
        %2200 = vmatmul.mubr.bf16.gmra.mrb[0].mxu0 %v2096
        %v2201 = vpop.f32.mrb[0].mxu0
        %v2202 = vadd.f32 0.0, %v2201
        %v2203 = vpop.f32.mrb[0].mxu0
        %v2204 = vpop.f32.mrb[0].mxu0
        %v2205 = vadd.f32 0.0, %v2204
        %v2206 = vpop.f32.mrb[0].mxu0
        %2207 = vmatprep.mubr.bf16.mxu0 0
        %2208 = vmatmul.mubr.bf16.gmra.mrb[0].mxu0 %v2098
        %v2209 = vpop.f32.mrb[0].mxu0
        %v2210 = vadd.f32 0.0, %v2209
        %v2211 = vpop.f32.mrb[0].mxu0
        %v2212 = vpop.f32.mrb[0].mxu0
        %v2213 = vadd.f32 0.0, %v2212
        %v2214 = vpop.f32.mrb[0].mxu0
        %2215 = vmatprep.mubr.bf16.mxu0 0
        %2216 = vmatmul.mubr.bf16.gmra.mrb[0].mxu0 %v2100
        %v2217 = vpop.f32.mrb[0].mxu0
        %v2218 = vadd.f32 0.0, %v2217
        %v2219 = vpop.f32.mrb[0].mxu0
        %v2220 = vpop.f32.mrb[0].mxu0
        %v2221 = vadd.f32 0.0, %v2220
        %v2222 = vpop.f32.mrb[0].mxu0
        %2223 = vmatprep.mubr.bf16.mxu0 0
        %2224 = vmatmul.mubr.bf16.gmra.mrb[0].mxu0 %v2102
        %v2225 = vpop.f32.mrb[0].mxu0
        %v2226 = vadd.f32 0.0, %v2225
        %v2227 = vpop.f32.mrb[0].mxu0
        %v2228 = vpop.f32.mrb[0].mxu0
        %v2229 = vadd.f32 0.0, %v2228
        %v2230 = vpop.f32.mrb[0].mxu0
        %2231 = vmatprep.mubr.bf16.mxu0 0
        %2232 = vmatmul.mubr.bf16.gmra.mrb[0].mxu0 %v2104
        %v2233 = vpop.f32.mrb[0].mxu0
        %v2234 = vadd.f32 0.0, %v2233
        %v2235 = vpop.f32.mrb[0].mxu0
        %v2236 = vpop.f32.mrb[0].mxu0
        %v2237 = vadd.f32 0.0, %v2236
        %v2238 = vpop.f32.mrb[0].mxu0
        %2239 = vmatprep.mubr.bf16.mxu0 0
        %2240 = vmatmul.mubr.bf16.gmra.mrb[0].mxu0 %v2106
        %v2241 = vpop.f32.mrb[0].mxu0
        %v2242 = vadd.f32 0.0, %v2241
        %v2243 = vpop.f32.mrb[0].mxu0
        %v2244 = vpop.f32.mrb[0].mxu0
        %v2245 = vadd.f32 0.0, %v2244
        %v2246 = vpop.f32.mrb[0].mxu0
        %2247 = vmatprep.mubr.bf16.mxu0 0
        %2248 = vmatmul.mubr.bf16.gmra.mrb[0].mxu0 %v2108
        %v2249 = vpop.f32.mrb[0].mxu0
        %v2250 = vadd.f32 0.0, %v2249
        %v2251 = vpop.f32.mrb[0].mxu0
        %v2252 = vpop.f32.mrb[0].mxu0
        %v2253 = vadd.f32 0.0, %v2252
        %v2254 = vpop.f32.mrb[0].mxu0
        %2255 = vmatprep.mubr.bf16.mxu0 0
        %2256 = vmatmul.mubr.bf16.gmra.mrb[0].mxu0 %v2110
        %v2257 = vpop.f32.mrb[0].mxu0
        %v2258 = vadd.f32 0.0, %v2257
        %v2259 = vpop.f32.mrb[0].mxu0
        %v2260 = vpop.f32.mrb[0].mxu0
        %v2261 = vadd.f32 0.0, %v2260
        %v2262 = vpop.f32.mrb[0].mxu0
        %2263 = vdwg.mxu0
        %v2264 = vadd.f32 %v2051, %v2202
        %v2265 = vadd.f32 %v2052, %v2205
        %v2266 = vadd.f32 %v2053, %v2210
        %v2267 = vadd.f32 %v2054, %v2213
        %v2268 = vadd.f32 %v2055, %v2218
        %v2269 = vadd.f32 %v2056, %v2221
        %v2270 = vadd.f32 %v2057, %v2226
        %v2271 = vadd.f32 %v2058, %v2229
        %v2272 = vadd.f32 %v2059, %v2234
        %v2273 = vadd.f32 %v2060, %v2237
        %v2274 = vadd.f32 %v2061, %v2242
        %v2275 = vadd.f32 %v2062, %v2245
        %v2276 = vadd.f32 %v2063, %v2250
        %v2277 = vadd.f32 %v2064, %v2253
        %v2278 = vadd.f32 %v2065, %v2258
        %v2279 = vadd.f32 %v2066, %v2261
        %v2280 = vld [vmem:[#allocation2 + $0x48] sm:$0x1f]
        %v2281 = vsel %vm1499, %v2067, 0
        %v2282 = vsel %vm1500, %v1784, 0
        %v2283 = vsel %vm1501, %v1785, 0
        %v2284 = vsel %vm1502, %v1786, 0
        %v2285 = vsel %vm1503, %v1787, 0
        %v2286 = vsel %vm1504, %v1788, 0
        %v2287 = vsel %vm1505, %v1789, 0
        %v2288 = vsel %vm1506, %v1790, 0
        %v2289 = vsel %vm1507, %v2280, 0
        %s2290 = scalar_lea.vmem [#allocation8], 320
        %v2291 = vld [vmem:[%s2290] sm:$0xf]
        %v2292 = vld [vmem:[%s2290 + $0x4] sm:$0xf]
        %v2293 = vld [vmem:[%s2290 + $0x8] sm:$0xf]
        %v2294 = vld [vmem:[%s2290 + $0xc] sm:$0xf]
        %v2295 = vld [vmem:[%s2290 + $0x10] sm:$0xf]
        %v2296 = vld [vmem:[%s2290 + $0x14] sm:$0xf]
        %v2297 = vld [vmem:[%s2290 + $0x18] sm:$0xf]
        %v2298 = vld [vmem:[%s2290 + $0x1c] sm:$0xf]
        %v2299 = vld [vmem:[%s2290 + $0x20] sm:$0xf]
        %v2300 = vld [vmem:[%s2290 + $0x24] sm:$0xf]
        %v2301 = vld [vmem:[%s2290 + $0x28] sm:$0xf]
        %v2302 = vld [vmem:[%s2290 + $0x2c] sm:$0xf]
        %v2303 = vld [vmem:[%s2290 + $0x30] sm:$0xf]
        %v2304 = vld [vmem:[%s2290 + $0x34] sm:$0xf]
        %v2305 = vld [vmem:[%s2290 + $0x38] sm:$0xf]
        %v2306 = vld [vmem:[%s2290 + $0x3c] sm:$0xf]
        %v2308 = vshrl.u32 %v2281, 16
        %v2310 = vrot.slane %v2308, 4
        %v2311 = vshll.u32 %v2281, 16
        %v2313 = vrot.slane %v2311, 5
        %v2314 = vor.u32 %v2310, %v2313
        %v2316 = vshrl.u32 %v2282, 16
        %v2318 = vrot.slane %v2316, 4
        %v2319 = vshll.u32 %v2282, 16
        %v2321 = vrot.slane %v2319, 5
        %v2322 = vor.u32 %v2318, %v2321
        %v2323 = vsel %vm801, %v2314, %v2322
        %v2325 = vshrl.u32 %v2283, 16
        %v2327 = vrot.slane %v2325, 4
        %v2328 = vshll.u32 %v2283, 16
        %v2330 = vrot.slane %v2328, 5
        %v2331 = vor.u32 %v2327, %v2330
        %v2332 = vsel %vm801, %v2322, %v2331
        %v2334 = vshrl.u32 %v2284, 16
        %v2336 = vrot.slane %v2334, 4
        %v2337 = vshll.u32 %v2284, 16
        %v2339 = vrot.slane %v2337, 5
        %v2340 = vor.u32 %v2336, %v2339
        %v2341 = vsel %vm801, %v2331, %v2340
        %v2343 = vshrl.u32 %v2285, 16
        %v2345 = vrot.slane %v2343, 4
        %v2346 = vshll.u32 %v2285, 16
        %v2348 = vrot.slane %v2346, 5
        %v2349 = vor.u32 %v2345, %v2348
        %v2350 = vsel %vm801, %v2340, %v2349
        %v2352 = vshrl.u32 %v2286, 16
        %v2354 = vrot.slane %v2352, 4
        %v2355 = vshll.u32 %v2286, 16
        %v2357 = vrot.slane %v2355, 5
        %v2358 = vor.u32 %v2354, %v2357
        %v2359 = vsel %vm801, %v2349, %v2358
        %v2361 = vshrl.u32 %v2287, 16
        %v2363 = vrot.slane %v2361, 4
        %v2364 = vshll.u32 %v2287, 16
        %v2366 = vrot.slane %v2364, 5
        %v2367 = vor.u32 %v2363, %v2366
        %v2368 = vsel %vm801, %v2358, %v2367
        %v2370 = vshrl.u32 %v2288, 16
        %v2372 = vrot.slane %v2370, 4
        %v2373 = vshll.u32 %v2288, 16
        %v2375 = vrot.slane %v2373, 5
        %v2376 = vor.u32 %v2372, %v2375
        %v2377 = vsel %vm801, %v2367, %v2376
        %v2379 = vshrl.u32 %v2289, 16
        %v2381 = vrot.slane %v2379, 4
        %v2382 = vshll.u32 %v2289, 16
        %v2384 = vrot.slane %v2382, 5
        %v2385 = vor.u32 %v2381, %v2384
        %v2386 = vsel %vm801, %v2376, %v2385
        %v2411 = vunpack.c.l.b16 %v2291
        %v2412 = vunpack.c.l.b16 %v2292
        %v2413 = vunpack.c.l.b16 %v2293
        %v2414 = vunpack.c.l.b16 %v2294
        %v2415 = vunpack.c.l.b16 %v2295
        %v2416 = vunpack.c.l.b16 %v2296
        %v2417 = vunpack.c.l.b16 %v2297
        %v2418 = vunpack.c.l.b16 %v2298
        %v2419 = vunpack.c.l.b16 %v2299
        %v2420 = vunpack.c.l.b16 %v2300
        %v2421 = vunpack.c.l.b16 %v2301
        %v2422 = vunpack.c.l.b16 %v2302
        %v2423 = vunpack.c.l.b16 %v2303
        %v2424 = vunpack.c.l.b16 %v2304
        %v2425 = vunpack.c.l.b16 %v2305
        %v2426 = vunpack.c.l.b16 %v2306
        %v2427 = vpack.c.b16 %v2412, %v2411
        %v2428 = vpack.c.b16 %v2414, %v2413
        %v2429 = vpack.c.b16 %v2416, %v2415
        %v2430 = vpack.c.b16 %v2418, %v2417
        %v2431 = vpack.c.b16 %v2420, %v2419
        %v2432 = vpack.c.b16 %v2422, %v2421
        %v2433 = vpack.c.b16 %v2424, %v2423
        %v2434 = vpack.c.b16 %v2426, %v2425
        %2443 = vmatprep.subr.bf16.mxu0 0
        %2444 = vmatpush1.bf16.msra.mxu0 %v2427
        %2445 = vmatprep.subr.bf16.mxu0 0
        %2446 = vmatpush1.bf16.msra.mxu0 %v2428
        %2447 = vmatprep.subr.bf16.mxu0 0
        %2448 = vmatpush1.bf16.msra.mxu0 %v2429
        %2449 = vmatprep.subr.bf16.mxu0 0
        %2450 = vmatpush1.bf16.msra.mxu0 %v2430
        %2451 = vmatprep.subr.bf16.mxu0 0
        %2452 = vmatpush1.bf16.msra.mxu0 %v2431
        %2453 = vmatprep.subr.bf16.mxu0 0
        %2454 = vmatpush1.bf16.msra.mxu0 %v2432
        %2455 = vmatprep.subr.bf16.mxu0 0
        %2456 = vmatpush1.bf16.msra.mxu0 %v2433
        %2457 = vmatprep.subr.bf16.mxu0 0
        %2458 = vmatpush1.bf16.msra.mxu0 %v2434
        %2459 = vmatprep.subr.bf16.mxu0 0
        %2460 = vmatpush1.bf16.msra.mxu0 0
        %2461 = vmatprep.subr.bf16.mxu0 0
        %2462 = vmatpush1.bf16.msra.mxu0 0
        %2463 = vmatprep.subr.bf16.mxu0 0
        %2464 = vmatpush1.bf16.msra.mxu0 0
        %2465 = vmatprep.subr.bf16.mxu0 0
        %2466 = vmatpush1.bf16.msra.mxu0 0
        %2467 = vmatprep.subr.bf16.mxu0 0
        %2468 = vmatpush1.bf16.msra.mxu0 0
        %2469 = vmatprep.subr.bf16.mxu0 0
        %2470 = vmatpush1.bf16.msra.mxu0 0
        %2471 = vmatprep.subr.bf16.mxu0 0
        %2472 = vmatpush1.bf16.msra.mxu0 0
        %2473 = vmatprep.subr.bf16.mxu0 0
        %2474 = vmatpush1.bf16.msra.mxu0 0
        %2475 = vmatprep.mubr.bf16.mxu0 0
        %2476 = vmatmul.mubr.bf16.gmra.mrb[0].mxu0 %v2323
        %v2477 = vpop.f32.mrb[0].mxu0
        %v2478 = vadd.f32 0.0, %v2477
        %v2479 = vpop.f32.mrb[0].mxu0
        %v2480 = vpop.f32.mrb[0].mxu0
        %v2481 = vadd.f32 0.0, %v2480
        %v2482 = vpop.f32.mrb[0].mxu0
        %2483 = vmatprep.mubr.bf16.mxu0 0
        %2484 = vmatmul.mubr.bf16.gmra.mrb[0].mxu0 %v2332
        %v2485 = vpop.f32.mrb[0].mxu0
        %v2486 = vadd.f32 0.0, %v2485
        %v2487 = vpop.f32.mrb[0].mxu0
        %v2488 = vpop.f32.mrb[0].mxu0
        %v2489 = vadd.f32 0.0, %v2488
        %v2490 = vpop.f32.mrb[0].mxu0
        %2491 = vmatprep.mubr.bf16.mxu0 0
        %2492 = vmatmul.mubr.bf16.gmra.mrb[0].mxu0 %v2341
        %v2493 = vpop.f32.mrb[0].mxu0
        %v2494 = vadd.f32 0.0, %v2493
        %v2495 = vpop.f32.mrb[0].mxu0
        %v2496 = vpop.f32.mrb[0].mxu0
        %v2497 = vadd.f32 0.0, %v2496
        %v2498 = vpop.f32.mrb[0].mxu0
        %2499 = vmatprep.mubr.bf16.mxu0 0
        %2500 = vmatmul.mubr.bf16.gmra.mrb[0].mxu0 %v2350
        %v2501 = vpop.f32.mrb[0].mxu0
        %v2502 = vadd.f32 0.0, %v2501
        %v2503 = vpop.f32.mrb[0].mxu0
        %v2504 = vpop.f32.mrb[0].mxu0
        %v2505 = vadd.f32 0.0, %v2504
        %v2506 = vpop.f32.mrb[0].mxu0
        %2507 = vmatprep.mubr.bf16.mxu0 0
        %2508 = vmatmul.mubr.bf16.gmra.mrb[0].mxu0 %v2359
        %v2509 = vpop.f32.mrb[0].mxu0
        %v2510 = vadd.f32 0.0, %v2509
        %v2511 = vpop.f32.mrb[0].mxu0
        %v2512 = vpop.f32.mrb[0].mxu0
        %v2513 = vadd.f32 0.0, %v2512
        %v2514 = vpop.f32.mrb[0].mxu0
        %2515 = vmatprep.mubr.bf16.mxu0 0
        %2516 = vmatmul.mubr.bf16.gmra.mrb[0].mxu0 %v2368
        %v2517 = vpop.f32.mrb[0].mxu0
        %v2518 = vadd.f32 0.0, %v2517
        %v2519 = vpop.f32.mrb[0].mxu0
        %v2520 = vpop.f32.mrb[0].mxu0
        %v2521 = vadd.f32 0.0, %v2520
        %v2522 = vpop.f32.mrb[0].mxu0
        %2523 = vmatprep.mubr.bf16.mxu0 0
        %2524 = vmatmul.mubr.bf16.gmra.mrb[0].mxu0 %v2377
        %v2525 = vpop.f32.mrb[0].mxu0
        %v2526 = vadd.f32 0.0, %v2525
        %v2527 = vpop.f32.mrb[0].mxu0
        %v2528 = vpop.f32.mrb[0].mxu0
        %v2529 = vadd.f32 0.0, %v2528
        %v2530 = vpop.f32.mrb[0].mxu0
        %2531 = vmatprep.mubr.bf16.mxu0 0
        %2532 = vmatmul.mubr.bf16.gmra.mrb[0].mxu0 %v2386
        %v2533 = vpop.f32.mrb[0].mxu0
        %v2534 = vadd.f32 0.0, %v2533
        %v2535 = vpop.f32.mrb[0].mxu0
        %v2536 = vpop.f32.mrb[0].mxu0
        %v2537 = vadd.f32 0.0, %v2536
        %v2538 = vpop.f32.mrb[0].mxu0
        %2539 = vdwg.mxu0
        %v2540 = vadd.f32 %v2264, %v2478
        %v2541 = vadd.f32 %v2265, %v2481
        %v2542 = vadd.f32 %v2266, %v2486
        %v2543 = vadd.f32 %v2267, %v2489
        %v2544 = vadd.f32 %v2268, %v2494
        %v2545 = vadd.f32 %v2269, %v2497
        %v2546 = vadd.f32 %v2270, %v2502
        %v2547 = vadd.f32 %v2271, %v2505
        %v2548 = vadd.f32 %v2272, %v2510
        %v2549 = vadd.f32 %v2273, %v2513
        %v2550 = vadd.f32 %v2274, %v2518
        %v2551 = vadd.f32 %v2275, %v2521
        %v2552 = vadd.f32 %v2276, %v2526
        %v2553 = vadd.f32 %v2277, %v2529
        %v2554 = vadd.f32 %v2278, %v2534
        %v2555 = vadd.f32 %v2279, %v2537
        %v2556 = vld [vmem:[#allocation2 + $0x10] sm:$0xf8]
        %v2557 = vld [vmem:[#allocation2 + $0x18] sm:$0xff]
        %v2558 = vld [vmem:[#allocation2 + $0x20] sm:$0xff]
        %v2559 = vld [vmem:[#allocation2 + $0x28] sm:$0xff]
        %v2560 = vld [vmem:[#allocation2 + $0x30] sm:$0xff]
        %v2561 = vld [vmem:[#allocation2 + $0x38] sm:$0xff]
        %v2562 = vld [vmem:[#allocation2 + $0x40] sm:$0xff]
        %v2563 = vld [vmem:[#allocation2 + $0x48] sm:$0xff]
        %v2564 = vld [vmem:[#allocation2 + $0x50] sm:$0xf]
        %v2565 = vsel %vm873, %v2556, 0
        %v2566 = vsel %vm874, %v2557, 0
        %v2567 = vsel %vm875, %v2558, 0
        %v2568 = vsel %vm876, %v2559, 0
        %v2569 = vsel %vm877, %v2560, 0
        %v2570 = vsel %vm878, %v2561, 0
        %v2571 = vsel %vm879, %v2562, 0
        %v2572 = vsel %vm880, %v2563, 0
        %v2573 = vsel %vm881, %v2564, 0
        %s2574 = scalar_lea.vmem [#allocation8], 384
        %v2575 = vld [vmem:[%s2574] sm:$0xf]
        %v2576 = vld [vmem:[%s2574 + $0x4] sm:$0xf]
        %v2577 = vld [vmem:[%s2574 + $0x8] sm:$0xf]
        %v2578 = vld [vmem:[%s2574 + $0xc] sm:$0xf]
        %v2579 = vld [vmem:[%s2574 + $0x10] sm:$0xf]
        %v2580 = vld [vmem:[%s2574 + $0x14] sm:$0xf]
        %v2581 = vld [vmem:[%s2574 + $0x18] sm:$0xf]
        %v2582 = vld [vmem:[%s2574 + $0x1c] sm:$0xf]
        %v2583 = vld [vmem:[%s2574 + $0x20] sm:$0xf]
        %v2584 = vld [vmem:[%s2574 + $0x24] sm:$0xf]
        %v2585 = vld [vmem:[%s2574 + $0x28] sm:$0xf]
        %v2586 = vld [vmem:[%s2574 + $0x2c] sm:$0xf]
        %v2587 = vld [vmem:[%s2574 + $0x30] sm:$0xf]
        %v2588 = vld [vmem:[%s2574 + $0x34] sm:$0xf]
        %v2589 = vld [vmem:[%s2574 + $0x38] sm:$0xf]
        %v2590 = vld [vmem:[%s2574 + $0x3c] sm:$0xf]
        %v2592 = vshrl.u32 %v2565, 16
        %v2594 = vrot.slane %v2592, 3
        %v2595 = vshll.u32 %v2565, 16
        %v2597 = vrot.slane %v2595, 4
        %v2598 = vor.u32 %v2594, %v2597
        %v2600 = vshrl.u32 %v2566, 16
        %v2602 = vrot.slane %v2600, 3
        %v2603 = vshll.u32 %v2566, 16
        %v2605 = vrot.slane %v2603, 4
        %v2606 = vor.u32 %v2602, %v2605
        %v2607 = vsel %vm1105, %v2598, %v2606
        %v2609 = vshrl.u32 %v2567, 16
        %v2611 = vrot.slane %v2609, 3
        %v2612 = vshll.u32 %v2567, 16
        %v2614 = vrot.slane %v2612, 4
        %v2615 = vor.u32 %v2611, %v2614
        %v2616 = vsel %vm1105, %v2606, %v2615
        %v2618 = vshrl.u32 %v2568, 16
        %v2620 = vrot.slane %v2618, 3
        %v2621 = vshll.u32 %v2568, 16
        %v2623 = vrot.slane %v2621, 4
        %v2624 = vor.u32 %v2620, %v2623
        %v2625 = vsel %vm1105, %v2615, %v2624
        %v2627 = vshrl.u32 %v2569, 16
        %v2629 = vrot.slane %v2627, 3
        %v2630 = vshll.u32 %v2569, 16
        %v2632 = vrot.slane %v2630, 4
        %v2633 = vor.u32 %v2629, %v2632
        %v2634 = vsel %vm1105, %v2624, %v2633
        %v2636 = vshrl.u32 %v2570, 16
        %v2638 = vrot.slane %v2636, 3
        %v2639 = vshll.u32 %v2570, 16
        %v2641 = vrot.slane %v2639, 4
        %v2642 = vor.u32 %v2638, %v2641
        %v2643 = vsel %vm1105, %v2633, %v2642
        %v2645 = vshrl.u32 %v2571, 16
        %v2647 = vrot.slane %v2645, 3
        %v2648 = vshll.u32 %v2571, 16
        %v2650 = vrot.slane %v2648, 4
        %v2651 = vor.u32 %v2647, %v2650
        %v2652 = vsel %vm1105, %v2642, %v2651
        %v2654 = vshrl.u32 %v2572, 16
        %v2656 = vrot.slane %v2654, 3
        %v2657 = vshll.u32 %v2572, 16
        %v2659 = vrot.slane %v2657, 4
        %v2660 = vor.u32 %v2656, %v2659
        %v2661 = vsel %vm1105, %v2651, %v2660
        %v2663 = vshrl.u32 %v2573, 16
        %v2665 = vrot.slane %v2663, 3
        %v2666 = vshll.u32 %v2573, 16
        %v2668 = vrot.slane %v2666, 4
        %v2669 = vor.u32 %v2665, %v2668
        %v2670 = vsel %vm1105, %v2660, %v2669
        %v2695 = vunpack.c.l.b16 %v2575
        %v2696 = vunpack.c.l.b16 %v2576
        %v2697 = vunpack.c.l.b16 %v2577
        %v2698 = vunpack.c.l.b16 %v2578
        %v2699 = vunpack.c.l.b16 %v2579
        %v2700 = vunpack.c.l.b16 %v2580
        %v2701 = vunpack.c.l.b16 %v2581
        %v2702 = vunpack.c.l.b16 %v2582
        %v2703 = vunpack.c.l.b16 %v2583
        %v2704 = vunpack.c.l.b16 %v2584
        %v2705 = vunpack.c.l.b16 %v2585
        %v2706 = vunpack.c.l.b16 %v2586
        %v2707 = vunpack.c.l.b16 %v2587
        %v2708 = vunpack.c.l.b16 %v2588
        %v2709 = vunpack.c.l.b16 %v2589
        %v2710 = vunpack.c.l.b16 %v2590
        %v2711 = vpack.c.b16 %v2696, %v2695
        %v2712 = vpack.c.b16 %v2698, %v2697
        %v2713 = vpack.c.b16 %v2700, %v2699
        %v2714 = vpack.c.b16 %v2702, %v2701
        %v2715 = vpack.c.b16 %v2704, %v2703
        %v2716 = vpack.c.b16 %v2706, %v2705
        %v2717 = vpack.c.b16 %v2708, %v2707
        %v2718 = vpack.c.b16 %v2710, %v2709
        %2727 = vmatprep.subr.bf16.mxu0 0
        %2728 = vmatpush1.bf16.msra.mxu0 %v2711
        %2729 = vmatprep.subr.bf16.mxu0 0
        %2730 = vmatpush1.bf16.msra.mxu0 %v2712
        %2731 = vmatprep.subr.bf16.mxu0 0
        %2732 = vmatpush1.bf16.msra.mxu0 %v2713
        %2733 = vmatprep.subr.bf16.mxu0 0
        %2734 = vmatpush1.bf16.msra.mxu0 %v2714
        %2735 = vmatprep.subr.bf16.mxu0 0
        %2736 = vmatpush1.bf16.msra.mxu0 %v2715
        %2737 = vmatprep.subr.bf16.mxu0 0
        %2738 = vmatpush1.bf16.msra.mxu0 %v2716
        %2739 = vmatprep.subr.bf16.mxu0 0
        %2740 = vmatpush1.bf16.msra.mxu0 %v2717
        %2741 = vmatprep.subr.bf16.mxu0 0
        %2742 = vmatpush1.bf16.msra.mxu0 %v2718
        %2743 = vmatprep.subr.bf16.mxu0 0
        %2744 = vmatpush1.bf16.msra.mxu0 0
        %2745 = vmatprep.subr.bf16.mxu0 0
        %2746 = vmatpush1.bf16.msra.mxu0 0
        %2747 = vmatprep.subr.bf16.mxu0 0
        %2748 = vmatpush1.bf16.msra.mxu0 0
        %2749 = vmatprep.subr.bf16.mxu0 0
        %2750 = vmatpush1.bf16.msra.mxu0 0
        %2751 = vmatprep.subr.bf16.mxu0 0
        %2752 = vmatpush1.bf16.msra.mxu0 0
        %2753 = vmatprep.subr.bf16.mxu0 0
        %2754 = vmatpush1.bf16.msra.mxu0 0
        %2755 = vmatprep.subr.bf16.mxu0 0
        %2756 = vmatpush1.bf16.msra.mxu0 0
        %2757 = vmatprep.subr.bf16.mxu0 0
        %2758 = vmatpush1.bf16.msra.mxu0 0
        %2759 = vmatprep.mubr.bf16.mxu0 0
        %2760 = vmatmul.mubr.bf16.gmra.mrb[0].mxu0 %v2607
        %v2761 = vpop.f32.mrb[0].mxu0
        %v2762 = vadd.f32 0.0, %v2761
        %v2763 = vpop.f32.mrb[0].mxu0
        %v2764 = vpop.f32.mrb[0].mxu0
        %v2765 = vadd.f32 0.0, %v2764
        %v2766 = vpop.f32.mrb[0].mxu0
        %2767 = vmatprep.mubr.bf16.mxu0 0
        %2768 = vmatmul.mubr.bf16.gmra.mrb[0].mxu0 %v2616
        %v2769 = vpop.f32.mrb[0].mxu0
        %v2770 = vadd.f32 0.0, %v2769
        %v2771 = vpop.f32.mrb[0].mxu0
        %v2772 = vpop.f32.mrb[0].mxu0
        %v2773 = vadd.f32 0.0, %v2772
        %v2774 = vpop.f32.mrb[0].mxu0
        %2775 = vmatprep.mubr.bf16.mxu0 0
        %2776 = vmatmul.mubr.bf16.gmra.mrb[0].mxu0 %v2625
        %v2777 = vpop.f32.mrb[0].mxu0
        %v2778 = vadd.f32 0.0, %v2777
        %v2779 = vpop.f32.mrb[0].mxu0
        %v2780 = vpop.f32.mrb[0].mxu0
        %v2781 = vadd.f32 0.0, %v2780
        %v2782 = vpop.f32.mrb[0].mxu0
        %2783 = vmatprep.mubr.bf16.mxu0 0
        %2784 = vmatmul.mubr.bf16.gmra.mrb[0].mxu0 %v2634
        %v2785 = vpop.f32.mrb[0].mxu0
        %v2786 = vadd.f32 0.0, %v2785
        %v2787 = vpop.f32.mrb[0].mxu0
        %v2788 = vpop.f32.mrb[0].mxu0
        %v2789 = vadd.f32 0.0, %v2788
        %v2790 = vpop.f32.mrb[0].mxu0
        %2791 = vmatprep.mubr.bf16.mxu0 0
        %2792 = vmatmul.mubr.bf16.gmra.mrb[0].mxu0 %v2643
        %v2793 = vpop.f32.mrb[0].mxu0
        %v2794 = vadd.f32 0.0, %v2793
        %v2795 = vpop.f32.mrb[0].mxu0
        %v2796 = vpop.f32.mrb[0].mxu0
        %v2797 = vadd.f32 0.0, %v2796
        %v2798 = vpop.f32.mrb[0].mxu0
        %2799 = vmatprep.mubr.bf16.mxu0 0
        %2800 = vmatmul.mubr.bf16.gmra.mrb[0].mxu0 %v2652
        %v2801 = vpop.f32.mrb[0].mxu0
        %v2802 = vadd.f32 0.0, %v2801
        %v2803 = vpop.f32.mrb[0].mxu0
        %v2804 = vpop.f32.mrb[0].mxu0
        %v2805 = vadd.f32 0.0, %v2804
        %v2806 = vpop.f32.mrb[0].mxu0
        %2807 = vmatprep.mubr.bf16.mxu0 0
        %2808 = vmatmul.mubr.bf16.gmra.mrb[0].mxu0 %v2661
        %v2809 = vpop.f32.mrb[0].mxu0
        %v2810 = vadd.f32 0.0, %v2809
        %v2811 = vpop.f32.mrb[0].mxu0
        %v2812 = vpop.f32.mrb[0].mxu0
        %v2813 = vadd.f32 0.0, %v2812
        %v2814 = vpop.f32.mrb[0].mxu0
        %2815 = vmatprep.mubr.bf16.mxu0 0
        %2816 = vmatmul.mubr.bf16.gmra.mrb[0].mxu0 %v2670
        %v2817 = vpop.f32.mrb[0].mxu0
        %v2818 = vadd.f32 0.0, %v2817
        %v2819 = vpop.f32.mrb[0].mxu0
        %v2820 = vpop.f32.mrb[0].mxu0
        %v2821 = vadd.f32 0.0, %v2820
        %v2822 = vpop.f32.mrb[0].mxu0
        %2823 = vdwg.mxu0
        %v2824 = vadd.f32 %v2540, %v2762
        %v2825 = vadd.f32 %v2541, %v2765
        %v2826 = vadd.f32 %v2542, %v2770
        %v2827 = vadd.f32 %v2543, %v2773
        %v2828 = vadd.f32 %v2544, %v2778
        %v2829 = vadd.f32 %v2545, %v2781
        %v2830 = vadd.f32 %v2546, %v2786
        %v2831 = vadd.f32 %v2547, %v2789
        %v2832 = vadd.f32 %v2548, %v2794
        %v2833 = vadd.f32 %v2549, %v2797
        %v2834 = vadd.f32 %v2550, %v2802
        %v2835 = vadd.f32 %v2551, %v2805
        %v2836 = vadd.f32 %v2552, %v2810
        %v2837 = vadd.f32 %v2553, %v2813
        %v2838 = vadd.f32 %v2554, %v2818
        %v2839 = vadd.f32 %v2555, %v2821
        %v2840 = vld [vmem:[#allocation2 + $0x10] sm:$0xf0]
        %s2841 = scalar_lea.vmem [#allocation8], 448
        %v2842 = vld [vmem:[%s2841] sm:$0xf]
        %v2843 = vld [vmem:[%s2841 + $0x4] sm:$0xf]
        %v2844 = vld [vmem:[%s2841 + $0x8] sm:$0xf]
        %v2845 = vld [vmem:[%s2841 + $0xc] sm:$0xf]
        %v2846 = vld [vmem:[%s2841 + $0x10] sm:$0xf]
        %v2847 = vld [vmem:[%s2841 + $0x14] sm:$0xf]
        %v2848 = vld [vmem:[%s2841 + $0x18] sm:$0xf]
        %v2849 = vld [vmem:[%s2841 + $0x1c] sm:$0xf]
        %v2850 = vld [vmem:[%s2841 + $0x20] sm:$0xf]
        %v2851 = vld [vmem:[%s2841 + $0x24] sm:$0xf]
        %v2852 = vld [vmem:[%s2841 + $0x28] sm:$0xf]
        %v2853 = vld [vmem:[%s2841 + $0x2c] sm:$0xf]
        %v2854 = vld [vmem:[%s2841 + $0x30] sm:$0xf]
        %v2855 = vld [vmem:[%s2841 + $0x34] sm:$0xf]
        %v2856 = vld [vmem:[%s2841 + $0x38] sm:$0xf]
        %v2857 = vld [vmem:[%s2841 + $0x3c] sm:$0xf]
        %v2867 = vrot.slane %v2840, 4
        %v2868 = vrot.slane %v2557, 4
        %v2869 = vsel %vm934, %v2867, %v2868
        %v2870 = vrot.slane %v2558, 4
        %v2871 = vsel %vm934, %v2868, %v2870
        %v2872 = vrot.slane %v2559, 4
        %v2873 = vsel %vm934, %v2870, %v2872
        %v2874 = vrot.slane %v2560, 4
        %v2875 = vsel %vm934, %v2872, %v2874
        %v2876 = vrot.slane %v2561, 4
        %v2877 = vsel %vm934, %v2874, %v2876
        %v2878 = vrot.slane %v2562, 4
        %v2879 = vsel %vm934, %v2876, %v2878
        %v2880 = vrot.slane %v2563, 4
        %v2881 = vsel %vm934, %v2878, %v2880
        %v2882 = vrot.slane %v2564, 4
        %v2883 = vsel %vm934, %v2880, %v2882
        %v2908 = vunpack.c.l.b16 %v2842
        %v2909 = vunpack.c.l.b16 %v2843
        %v2910 = vunpack.c.l.b16 %v2844
        %v2911 = vunpack.c.l.b16 %v2845
        %v2912 = vunpack.c.l.b16 %v2846
        %v2913 = vunpack.c.l.b16 %v2847
        %v2914 = vunpack.c.l.b16 %v2848
        %v2915 = vunpack.c.l.b16 %v2849
        %v2916 = vunpack.c.l.b16 %v2850
        %v2917 = vunpack.c.l.b16 %v2851
        %v2918 = vunpack.c.l.b16 %v2852
        %v2919 = vunpack.c.l.b16 %v2853
        %v2920 = vunpack.c.l.b16 %v2854
        %v2921 = vunpack.c.l.b16 %v2855
        %v2922 = vunpack.c.l.b16 %v2856
        %v2923 = vunpack.c.l.b16 %v2857
        %v2924 = vpack.c.b16 %v2909, %v2908
        %v2925 = vpack.c.b16 %v2911, %v2910
        %v2926 = vpack.c.b16 %v2913, %v2912
        %v2927 = vpack.c.b16 %v2915, %v2914
        %v2928 = vpack.c.b16 %v2917, %v2916
        %v2929 = vpack.c.b16 %v2919, %v2918
        %v2930 = vpack.c.b16 %v2921, %v2920
        %v2931 = vpack.c.b16 %v2923, %v2922
        %2940 = vmatprep.subr.bf16.mxu0 0
        %2941 = vmatpush1.bf16.msra.mxu0 %v2924
        %2942 = vmatprep.subr.bf16.mxu0 0
        %2943 = vmatpush1.bf16.msra.mxu0 %v2925
        %2944 = vmatprep.subr.bf16.mxu0 0
        %2945 = vmatpush1.bf16.msra.mxu0 %v2926
        %2946 = vmatprep.subr.bf16.mxu0 0
        %2947 = vmatpush1.bf16.msra.mxu0 %v2927
        %2948 = vmatprep.subr.bf16.mxu0 0
        %2949 = vmatpush1.bf16.msra.mxu0 %v2928
        %2950 = vmatprep.subr.bf16.mxu0 0
        %2951 = vmatpush1.bf16.msra.mxu0 %v2929
        %2952 = vmatprep.subr.bf16.mxu0 0
        %2953 = vmatpush1.bf16.msra.mxu0 %v2930
        %2954 = vmatprep.subr.bf16.mxu0 0
        %2955 = vmatpush1.bf16.msra.mxu0 %v2931
        %2956 = vmatprep.subr.bf16.mxu0 0
        %2957 = vmatpush1.bf16.msra.mxu0 0
        %2958 = vmatprep.subr.bf16.mxu0 0
        %2959 = vmatpush1.bf16.msra.mxu0 0
        %2960 = vmatprep.subr.bf16.mxu0 0
        %2961 = vmatpush1.bf16.msra.mxu0 0
        %2962 = vmatprep.subr.bf16.mxu0 0
        %2963 = vmatpush1.bf16.msra.mxu0 0
        %2964 = vmatprep.subr.bf16.mxu0 0
        %2965 = vmatpush1.bf16.msra.mxu0 0
        %2966 = vmatprep.subr.bf16.mxu0 0
        %2967 = vmatpush1.bf16.msra.mxu0 0
        %2968 = vmatprep.subr.bf16.mxu0 0
        %2969 = vmatpush1.bf16.msra.mxu0 0
        %2970 = vmatprep.subr.bf16.mxu0 0
        %2971 = vmatpush1.bf16.msra.mxu0 0
        %2972 = vmatprep.mubr.bf16.mxu0 0
        %2973 = vmatmul.mubr.bf16.gmra.mrb[0].mxu0 %v2869
        %v2974 = vpop.f32.mrb[0].mxu0
        %v2975 = vadd.f32 0.0, %v2974
        %v2976 = vpop.f32.mrb[0].mxu0
        %v2977 = vpop.f32.mrb[0].mxu0
        %v2978 = vadd.f32 0.0, %v2977
        %v2979 = vpop.f32.mrb[0].mxu0
        %2980 = vmatprep.mubr.bf16.mxu0 0
        %2981 = vmatmul.mubr.bf16.gmra.mrb[0].mxu0 %v2871
        %v2982 = vpop.f32.mrb[0].mxu0
        %v2983 = vadd.f32 0.0, %v2982
        %v2984 = vpop.f32.mrb[0].mxu0
        %v2985 = vpop.f32.mrb[0].mxu0
        %v2986 = vadd.f32 0.0, %v2985
        %v2987 = vpop.f32.mrb[0].mxu0
        %2988 = vmatprep.mubr.bf16.mxu0 0
        %2989 = vmatmul.mubr.bf16.gmra.mrb[0].mxu0 %v2873
        %v2990 = vpop.f32.mrb[0].mxu0
        %v2991 = vadd.f32 0.0, %v2990
        %v2992 = vpop.f32.mrb[0].mxu0
        %v2993 = vpop.f32.mrb[0].mxu0
        %v2994 = vadd.f32 0.0, %v2993
        %v2995 = vpop.f32.mrb[0].mxu0
        %2996 = vmatprep.mubr.bf16.mxu0 0
        %2997 = vmatmul.mubr.bf16.gmra.mrb[0].mxu0 %v2875
        %v2998 = vpop.f32.mrb[0].mxu0
        %v2999 = vadd.f32 0.0, %v2998
        %v3000 = vpop.f32.mrb[0].mxu0
        %v3001 = vpop.f32.mrb[0].mxu0
        %v3002 = vadd.f32 0.0, %v3001
        %v3003 = vpop.f32.mrb[0].mxu0
        %3004 = vmatprep.mubr.bf16.mxu0 0
        %3005 = vmatmul.mubr.bf16.gmra.mrb[0].mxu0 %v2877
        %v3006 = vpop.f32.mrb[0].mxu0
        %v3007 = vadd.f32 0.0, %v3006
        %v3008 = vpop.f32.mrb[0].mxu0
        %v3009 = vpop.f32.mrb[0].mxu0
        %v3010 = vadd.f32 0.0, %v3009
        %v3011 = vpop.f32.mrb[0].mxu0
        %3012 = vmatprep.mubr.bf16.mxu0 0
        %3013 = vmatmul.mubr.bf16.gmra.mrb[0].mxu0 %v2879
        %v3014 = vpop.f32.mrb[0].mxu0
        %v3015 = vadd.f32 0.0, %v3014
        %v3016 = vpop.f32.mrb[0].mxu0
        %v3017 = vpop.f32.mrb[0].mxu0
        %v3018 = vadd.f32 0.0, %v3017
        %v3019 = vpop.f32.mrb[0].mxu0
        %3020 = vmatprep.mubr.bf16.mxu0 0
        %3021 = vmatmul.mubr.bf16.gmra.mrb[0].mxu0 %v2881
        %v3022 = vpop.f32.mrb[0].mxu0
        %v3023 = vadd.f32 0.0, %v3022
        %v3024 = vpop.f32.mrb[0].mxu0
        %v3025 = vpop.f32.mrb[0].mxu0
        %v3026 = vadd.f32 0.0, %v3025
        %v3027 = vpop.f32.mrb[0].mxu0
        %3028 = vmatprep.mubr.bf16.mxu0 0
        %3029 = vmatmul.mubr.bf16.gmra.mrb[0].mxu0 %v2883
        %v3030 = vpop.f32.mrb[0].mxu0
        %v3031 = vadd.f32 0.0, %v3030
        %v3032 = vpop.f32.mrb[0].mxu0
        %v3033 = vpop.f32.mrb[0].mxu0
        %v3034 = vadd.f32 0.0, %v3033
        %v3035 = vpop.f32.mrb[0].mxu0
        %3036 = vdwg.mxu0
        %v3037 = vadd.f32 %v2824, %v2975
        %v3038 = vadd.f32 %v2825, %v2978
        %v3039 = vadd.f32 %v2826, %v2983
        %v3040 = vadd.f32 %v2827, %v2986
        %v3041 = vadd.f32 %v2828, %v2991
        %v3042 = vadd.f32 %v2829, %v2994
        %v3043 = vadd.f32 %v2830, %v2999
        %v3044 = vadd.f32 %v2831, %v3002
        %v3045 = vadd.f32 %v2832, %v3007
        %v3046 = vadd.f32 %v2833, %v3010
        %v3047 = vadd.f32 %v2834, %v3015
        %v3048 = vadd.f32 %v2835, %v3018
        %v3049 = vadd.f32 %v2836, %v3023
        %v3050 = vadd.f32 %v2837, %v3026
        %v3051 = vadd.f32 %v2838, %v3031
        %v3052 = vadd.f32 %v2839, %v3034
        %v3053 = vld [vmem:[#allocation2 + $0x50] sm:$0x1f]
        %v3054 = vsel %vm1499, %v2840, 0
        %v3055 = vsel %vm1500, %v2557, 0
        %v3056 = vsel %vm1501, %v2558, 0
        %v3057 = vsel %vm1502, %v2559, 0
        %v3058 = vsel %vm1503, %v2560, 0
        %v3059 = vsel %vm1504, %v2561, 0
        %v3060 = vsel %vm1505, %v2562, 0
        %v3061 = vsel %vm1506, %v2563, 0
        %v3062 = vsel %vm1507, %v3053, 0
        %s3063 = scalar_lea.vmem [#allocation8], 512
        %v3064 = vld [vmem:[%s3063] sm:$0xf]
        %v3065 = vld [vmem:[%s3063 + $0x4] sm:$0xf]
        %v3066 = vld [vmem:[%s3063 + $0x8] sm:$0xf]
        %v3067 = vld [vmem:[%s3063 + $0xc] sm:$0xf]
        %v3068 = vld [vmem:[%s3063 + $0x10] sm:$0xf]
        %v3069 = vld [vmem:[%s3063 + $0x14] sm:$0xf]
        %v3070 = vld [vmem:[%s3063 + $0x18] sm:$0xf]
        %v3071 = vld [vmem:[%s3063 + $0x1c] sm:$0xf]
        %v3072 = vld [vmem:[%s3063 + $0x20] sm:$0xf]
        %v3073 = vld [vmem:[%s3063 + $0x24] sm:$0xf]
        %v3074 = vld [vmem:[%s3063 + $0x28] sm:$0xf]
        %v3075 = vld [vmem:[%s3063 + $0x2c] sm:$0xf]
        %v3076 = vld [vmem:[%s3063 + $0x30] sm:$0xf]
        %v3077 = vld [vmem:[%s3063 + $0x34] sm:$0xf]
        %v3078 = vld [vmem:[%s3063 + $0x38] sm:$0xf]
        %v3079 = vld [vmem:[%s3063 + $0x3c] sm:$0xf]
        %v3081 = vshrl.u32 %v3054, 16
        %v3083 = vrot.slane %v3081, 4
        %v3084 = vshll.u32 %v3054, 16
        %v3086 = vrot.slane %v3084, 5
        %v3087 = vor.u32 %v3083, %v3086
        %v3089 = vshrl.u32 %v3055, 16
        %v3091 = vrot.slane %v3089, 4
        %v3092 = vshll.u32 %v3055, 16
        %v3094 = vrot.slane %v3092, 5
        %v3095 = vor.u32 %v3091, %v3094
        %v3096 = vsel %vm801, %v3087, %v3095
        %v3098 = vshrl.u32 %v3056, 16
        %v3100 = vrot.slane %v3098, 4
        %v3101 = vshll.u32 %v3056, 16
        %v3103 = vrot.slane %v3101, 5
        %v3104 = vor.u32 %v3100, %v3103
        %v3105 = vsel %vm801, %v3095, %v3104
        %v3107 = vshrl.u32 %v3057, 16
        %v3109 = vrot.slane %v3107, 4
        %v3110 = vshll.u32 %v3057, 16
        %v3112 = vrot.slane %v3110, 5
        %v3113 = vor.u32 %v3109, %v3112
        %v3114 = vsel %vm801, %v3104, %v3113
        %v3116 = vshrl.u32 %v3058, 16
        %v3118 = vrot.slane %v3116, 4
        %v3119 = vshll.u32 %v3058, 16
        %v3121 = vrot.slane %v3119, 5
        %v3122 = vor.u32 %v3118, %v3121
        %v3123 = vsel %vm801, %v3113, %v3122
        %v3125 = vshrl.u32 %v3059, 16
        %v3127 = vrot.slane %v3125, 4
        %v3128 = vshll.u32 %v3059, 16
        %v3130 = vrot.slane %v3128, 5
        %v3131 = vor.u32 %v3127, %v3130
        %v3132 = vsel %vm801, %v3122, %v3131
        %v3134 = vshrl.u32 %v3060, 16
        %v3136 = vrot.slane %v3134, 4
        %v3137 = vshll.u32 %v3060, 16
        %v3139 = vrot.slane %v3137, 5
        %v3140 = vor.u32 %v3136, %v3139
        %v3141 = vsel %vm801, %v3131, %v3140
        %v3143 = vshrl.u32 %v3061, 16
        %v3145 = vrot.slane %v3143, 4
        %v3146 = vshll.u32 %v3061, 16
        %v3148 = vrot.slane %v3146, 5
        %v3149 = vor.u32 %v3145, %v3148
        %v3150 = vsel %vm801, %v3140, %v3149
        %v3152 = vshrl.u32 %v3062, 16
        %v3154 = vrot.slane %v3152, 4
        %v3155 = vshll.u32 %v3062, 16
        %v3157 = vrot.slane %v3155, 5
        %v3158 = vor.u32 %v3154, %v3157
        %v3159 = vsel %vm801, %v3149, %v3158
        %v3184 = vunpack.c.l.b16 %v3064
        %v3185 = vunpack.c.l.b16 %v3065
        %v3186 = vunpack.c.l.b16 %v3066
        %v3187 = vunpack.c.l.b16 %v3067
        %v3188 = vunpack.c.l.b16 %v3068
        %v3189 = vunpack.c.l.b16 %v3069
        %v3190 = vunpack.c.l.b16 %v3070
        %v3191 = vunpack.c.l.b16 %v3071
        %v3192 = vunpack.c.l.b16 %v3072
        %v3193 = vunpack.c.l.b16 %v3073
        %v3194 = vunpack.c.l.b16 %v3074
        %v3195 = vunpack.c.l.b16 %v3075
        %v3196 = vunpack.c.l.b16 %v3076
        %v3197 = vunpack.c.l.b16 %v3077
        %v3198 = vunpack.c.l.b16 %v3078
        %v3199 = vunpack.c.l.b16 %v3079
        %v3200 = vpack.c.b16 %v3185, %v3184
        %v3201 = vpack.c.b16 %v3187, %v3186
        %v3202 = vpack.c.b16 %v3189, %v3188
        %v3203 = vpack.c.b16 %v3191, %v3190
        %v3204 = vpack.c.b16 %v3193, %v3192
        %v3205 = vpack.c.b16 %v3195, %v3194
        %v3206 = vpack.c.b16 %v3197, %v3196
        %v3207 = vpack.c.b16 %v3199, %v3198
        %3216 = vmatprep.subr.bf16.mxu0 0
        %3217 = vmatpush1.bf16.msra.mxu0 %v3200
        %3218 = vmatprep.subr.bf16.mxu0 0
        %3219 = vmatpush1.bf16.msra.mxu0 %v3201
        %3220 = vmatprep.subr.bf16.mxu0 0
        %3221 = vmatpush1.bf16.msra.mxu0 %v3202
        %3222 = vmatprep.subr.bf16.mxu0 0
        %3223 = vmatpush1.bf16.msra.mxu0 %v3203
        %3224 = vmatprep.subr.bf16.mxu0 0
        %3225 = vmatpush1.bf16.msra.mxu0 %v3204
        %3226 = vmatprep.subr.bf16.mxu0 0
        %3227 = vmatpush1.bf16.msra.mxu0 %v3205
        %3228 = vmatprep.subr.bf16.mxu0 0
        %3229 = vmatpush1.bf16.msra.mxu0 %v3206
        %3230 = vmatprep.subr.bf16.mxu0 0
        %3231 = vmatpush1.bf16.msra.mxu0 %v3207
        %3232 = vmatprep.subr.bf16.mxu0 0
        %3233 = vmatpush1.bf16.msra.mxu0 0
        %3234 = vmatprep.subr.bf16.mxu0 0
        %3235 = vmatpush1.bf16.msra.mxu0 0
        %3236 = vmatprep.subr.bf16.mxu0 0
        %3237 = vmatpush1.bf16.msra.mxu0 0
        %3238 = vmatprep.subr.bf16.mxu0 0
        %3239 = vmatpush1.bf16.msra.mxu0 0
        %3240 = vmatprep.subr.bf16.mxu0 0
        %3241 = vmatpush1.bf16.msra.mxu0 0
        %3242 = vmatprep.subr.bf16.mxu0 0
        %3243 = vmatpush1.bf16.msra.mxu0 0
        %3244 = vmatprep.subr.bf16.mxu0 0
        %3245 = vmatpush1.bf16.msra.mxu0 0
        %3246 = vmatprep.subr.bf16.mxu0 0
        %3247 = vmatpush1.bf16.msra.mxu0 0
        %3248 = vmatprep.mubr.bf16.mxu0 0
        %3249 = vmatmul.mubr.bf16.gmra.mrb[0].mxu0 %v3096
        %v3250 = vpop.f32.mrb[0].mxu0
        %v3251 = vadd.f32 0.0, %v3250
        %v3252 = vpop.f32.mrb[0].mxu0
        %v3253 = vpop.f32.mrb[0].mxu0
        %v3254 = vadd.f32 0.0, %v3253
        %v3255 = vpop.f32.mrb[0].mxu0
        %3256 = vmatprep.mubr.bf16.mxu0 0
        %3257 = vmatmul.mubr.bf16.gmra.mrb[0].mxu0 %v3105
        %v3258 = vpop.f32.mrb[0].mxu0
        %v3259 = vadd.f32 0.0, %v3258
        %v3260 = vpop.f32.mrb[0].mxu0
        %v3261 = vpop.f32.mrb[0].mxu0
        %v3262 = vadd.f32 0.0, %v3261
        %v3263 = vpop.f32.mrb[0].mxu0
        %3264 = vmatprep.mubr.bf16.mxu0 0
        %3265 = vmatmul.mubr.bf16.gmra.mrb[0].mxu0 %v3114
        %v3266 = vpop.f32.mrb[0].mxu0
        %v3267 = vadd.f32 0.0, %v3266
        %v3268 = vpop.f32.mrb[0].mxu0
        %v3269 = vpop.f32.mrb[0].mxu0
        %v3270 = vadd.f32 0.0, %v3269
        %v3271 = vpop.f32.mrb[0].mxu0
        %3272 = vmatprep.mubr.bf16.mxu0 0
        %3273 = vmatmul.mubr.bf16.gmra.mrb[0].mxu0 %v3123
        %v3274 = vpop.f32.mrb[0].mxu0
        %v3275 = vadd.f32 0.0, %v3274
        %v3276 = vpop.f32.mrb[0].mxu0
        %v3277 = vpop.f32.mrb[0].mxu0
        %v3278 = vadd.f32 0.0, %v3277
        %v3279 = vpop.f32.mrb[0].mxu0
        %3280 = vmatprep.mubr.bf16.mxu0 0
        %3281 = vmatmul.mubr.bf16.gmra.mrb[0].mxu0 %v3132
        %v3282 = vpop.f32.mrb[0].mxu0
        %v3283 = vadd.f32 0.0, %v3282
        %v3284 = vpop.f32.mrb[0].mxu0
        %v3285 = vpop.f32.mrb[0].mxu0
        %v3286 = vadd.f32 0.0, %v3285
        %v3287 = vpop.f32.mrb[0].mxu0
        %3288 = vmatprep.mubr.bf16.mxu0 0
        %3289 = vmatmul.mubr.bf16.gmra.mrb[0].mxu0 %v3141
        %v3290 = vpop.f32.mrb[0].mxu0
        %v3291 = vadd.f32 0.0, %v3290
        %v3292 = vpop.f32.mrb[0].mxu0
        %v3293 = vpop.f32.mrb[0].mxu0
        %v3294 = vadd.f32 0.0, %v3293
        %v3295 = vpop.f32.mrb[0].mxu0
        %3296 = vmatprep.mubr.bf16.mxu0 0
        %3297 = vmatmul.mubr.bf16.gmra.mrb[0].mxu0 %v3150
        %v3298 = vpop.f32.mrb[0].mxu0
        %v3299 = vadd.f32 0.0, %v3298
        %v3300 = vpop.f32.mrb[0].mxu0
        %v3301 = vpop.f32.mrb[0].mxu0
        %v3302 = vadd.f32 0.0, %v3301
        %v3303 = vpop.f32.mrb[0].mxu0
        %3304 = vmatprep.mubr.bf16.mxu0 0
        %3305 = vmatmul.mubr.bf16.gmra.mrb[0].mxu0 %v3159
        %v3306 = vpop.f32.mrb[0].mxu0
        %v3307 = vadd.f32 0.0, %v3306
        %v3308 = vpop.f32.mrb[0].mxu0
        %v3309 = vpop.f32.mrb[0].mxu0
        %v3310 = vadd.f32 0.0, %v3309
        %v3311 = vpop.f32.mrb[0].mxu0
        %3312 = vdwg.mxu0
        %v3313 = vadd.f32 %v3037, %v3251
        %v3314 = vadd.f32 %v3038, %v3254
        %v3315 = vadd.f32 %v3039, %v3259
        %v3316 = vadd.f32 %v3040, %v3262
        %v3317 = vadd.f32 %v3041, %v3267
        %v3318 = vadd.f32 %v3042, %v3270
        %v3319 = vadd.f32 %v3043, %v3275
        %v3320 = vadd.f32 %v3044, %v3278
        %v3321 = vadd.f32 %v3045, %v3283
        %v3322 = vadd.f32 %v3046, %v3286
        %v3323 = vadd.f32 %v3047, %v3291
        %v3324 = vadd.f32 %v3048, %v3294
        %v3325 = vadd.f32 %v3049, %v3299
        %v3326 = vadd.f32 %v3050, %v3302
        %v3327 = vadd.f32 %v3051, %v3307
        %v3328 = vadd.f32 %v3052, %v3310
        %v3329 = vpack.c.bf16 %v3314, %v3313
        %v3330 = vpack.c.bf16 %v3316, %v3315
        %v3331 = vpack.c.bf16 %v3318, %v3317
        %v3332 = vpack.c.bf16 %v3320, %v3319
        %v3333 = vpack.c.bf16 %v3322, %v3321
        %v3334 = vpack.c.bf16 %v3324, %v3323
        %v3335 = vpack.c.bf16 %v3326, %v3325
        %v3336 = vpack.c.bf16 %v3328, %v3327
        %v3345 = vunpack.c.l.b16 %v3329
        %v3346 = vunpack.c.h.b16 %v3329
        %v3347 = vunpack.c.l.b16 %v3330
        %v3348 = vunpack.c.h.b16 %v3330
        %v3349 = vunpack.c.l.b16 %v3331
        %v3350 = vunpack.c.h.b16 %v3331
        %v3351 = vunpack.c.l.b16 %v3332
        %v3352 = vunpack.c.h.b16 %v3332
        %v3353 = vunpack.c.l.b16 %v3333
        %v3354 = vunpack.c.h.b16 %v3333
        %v3355 = vunpack.c.l.b16 %v3334
        %v3356 = vunpack.c.h.b16 %v3334
        %v3357 = vunpack.c.l.b16 %v3335
        %v3358 = vunpack.c.h.b16 %v3335
        %v3359 = vunpack.c.l.b16 %v3336
        %v3360 = vunpack.c.h.b16 %v3336
        %v3361 = vpack.c.b16 %v3345, %v3345
        %v3362 = vpack.c.b16 %v3346, %v3346
        %v3363 = vpack.c.b16 %v3347, %v3347
        %v3364 = vpack.c.b16 %v3348, %v3348
        %v3365 = vpack.c.b16 %v3349, %v3349
        %v3366 = vpack.c.b16 %v3350, %v3350
        %v3367 = vpack.c.b16 %v3351, %v3351
        %v3368 = vpack.c.b16 %v3352, %v3352
        %v3369 = vpack.c.b16 %v3353, %v3353
        %v3370 = vpack.c.b16 %v3354, %v3354
        %v3371 = vpack.c.b16 %v3355, %v3355
        %v3372 = vpack.c.b16 %v3356, %v3356
        %v3373 = vpack.c.b16 %v3357, %v3357
        %v3374 = vpack.c.b16 %v3358, %v3358
        %v3375 = vpack.c.b16 %v3359, %v3359
        %v3376 = vpack.c.b16 %v3360, %v3360
        %3393 = vst [vmem:[%s351] sm:$0xf] %v3361
        %3394 = vst [vmem:[%s351 + $0x4] sm:$0xf] %v3362
        %3395 = vst [vmem:[%s351 + $0x8] sm:$0xf] %v3363
        %3396 = vst [vmem:[%s351 + $0xc] sm:$0xf] %v3364
        %3397 = vst [vmem:[%s351 + $0x10] sm:$0xf] %v3365
        %3398 = vst [vmem:[%s351 + $0x14] sm:$0xf] %v3366
        %3399 = vst [vmem:[%s351 + $0x18] sm:$0xf] %v3367
        %3400 = vst [vmem:[%s351 + $0x1c] sm:$0xf] %v3368
        %3401 = vst [vmem:[%s351 + $0x20] sm:$0xf] %v3369
        %3402 = vst [vmem:[%s351 + $0x24] sm:$0xf] %v3370
        %3403 = vst [vmem:[%s351 + $0x28] sm:$0xf] %v3371
        %3404 = vst [vmem:[%s351 + $0x2c] sm:$0xf] %v3372
        %3405 = vst [vmem:[%s351 + $0x30] sm:$0xf] %v3373
        %3406 = vst [vmem:[%s351 + $0x34] sm:$0xf] %v3374
        %3407 = vst [vmem:[%s351 + $0x38] sm:$0xf] %v3375
        %3408 = vst [vmem:[%s351 + $0x3c] sm:$0xf] %v3376
        %v3409 = vadd.f32 %v3313, %v3314
        %v3410 = vadd.f32 %v3409, %v3315
        %v3411 = vadd.f32 %v3410, %v3316
        %v3412 = vadd.f32 %v3411, %v3317
        %v3413 = vadd.f32 %v3412, %v3318
        %v3414 = vadd.f32 %v3413, %v3319
        %v3415 = vadd.f32 %v3414, %v3320
        %v3416 = vadd.f32 %v3415, %v3321
        %v3417 = vadd.f32 %v3416, %v3322
        %v3418 = vadd.f32 %v3417, %v3323
        %v3419 = vadd.f32 %v3418, %v3324
        %v3420 = vadd.f32 %v3419, %v3325
        %v3421 = vadd.f32 %v3420, %v3326
        %v3422 = vadd.f32 %v3421, %v3327
        %v3423 = vadd.f32 %v3422, %v3328
        %v3424 = vrot.slane %v3423, 4
        %v3425 = vadd.f32 %v3423, %v3424
        %v3426 = vrot.slane %v3425, 2
        %v3427 = vadd.f32 %v3425, %v3426
        %v3428 = vrot.slane %v3427, 1
        %v3429 = vadd.f32 %v3427, %v3428
        %v3430 = vmul.f32 %v3313, %v3313
        %v3431 = vmul.f32 %v3314, %v3314
        %v3432 = vmul.f32 %v3315, %v3315
        %v3433 = vmul.f32 %v3316, %v3316
        %v3434 = vmul.f32 %v3317, %v3317
        %v3435 = vmul.f32 %v3318, %v3318
        %v3436 = vmul.f32 %v3319, %v3319
        %v3437 = vmul.f32 %v3320, %v3320
        %v3438 = vmul.f32 %v3321, %v3321
        %v3439 = vmul.f32 %v3322, %v3322
        %v3440 = vmul.f32 %v3323, %v3323
        %v3441 = vmul.f32 %v3324, %v3324
        %v3442 = vmul.f32 %v3325, %v3325
        %v3443 = vmul.f32 %v3326, %v3326
        %v3444 = vmul.f32 %v3327, %v3327
        %v3445 = vmul.f32 %v3328, %v3328
        %v3446 = vadd.f32 %v3430, %v3431
        %v3447 = vadd.f32 %v3446, %v3432
        %v3448 = vadd.f32 %v3447, %v3433
        %v3449 = vadd.f32 %v3448, %v3434
        %v3450 = vadd.f32 %v3449, %v3435
        %v3451 = vadd.f32 %v3450, %v3436
        %v3452 = vadd.f32 %v3451, %v3437
        %v3453 = vadd.f32 %v3452, %v3438
        %v3454 = vadd.f32 %v3453, %v3439
        %v3455 = vadd.f32 %v3454, %v3440
        %v3456 = vadd.f32 %v3455, %v3441
        %v3457 = vadd.f32 %v3456, %v3442
        %v3458 = vadd.f32 %v3457, %v3443
        %v3459 = vadd.f32 %v3458, %v3444
        %v3460 = vadd.f32 %v3459, %v3445
        %v3461 = vrot.slane %v3460, 4
        %v3462 = vadd.f32 %v3460, %v3461
        %v3463 = vrot.slane %v3462, 2
        %v3464 = vadd.f32 %v3462, %v3463
        %v3465 = vrot.slane %v3464, 1
        %v3466 = vadd.f32 %v3464, %v3465
        %vm3467 = vcmask 1040384
        %v3468 = vsel %vm3467, %v3429, %v3466
        %3469 = vst [vmem:[%s358] sm:$0x3] %v3468
        %s3470 = sand.u32 %s171, 1
        %s3471 = scalar_lea.sflag [#allocation5], %s3470
        %s3472 = sand.u32 %s171, 1
        %s3473 = smul.addr %s3472, 64
        %s3474 = scalar_lea.vmem [#allocation9], %s3473
        %s3475 = sand.u32 %s199, 1
        %s3476 = scalar_lea.sflag [#allocation11], %s3475
        %s3477 = sand.u32 %s199, 1
        %s3478 = smul.addr %s3477, 2
        %s3479 = scalar_lea.vmem [#allocation10], %s3478
        // Predicated region
        $region53: #{tpu_custom_call.1} parent=39 // pred_check
          %p3480 = pneg %p181
        $region54: #{tpu_custom_call.1} parent=39 // pred_check_branch
          %3482 = sbr.rel (%p3480) target = $region56
        $region55: #{tpu_custom_call.1} parent=39 // pred_region
          %s3483 = smul.u32 16, %s35
          %s3485 = ssub.s32 1024, 1024
          %3486 = vsyncadd %s3471, %s3485
          %s3487 = smul.addr %s34, 32
          %s3488 = sadd.s32 %s3483, %s3487
          %s3489 = smul.addr %s3488, 64
          %s3490 = scalar_lea.hbm %s5, %s3489
          %s3491 = sshll.u32 %s3474, 4
          %s3492 = int_to_ptr.vmem [resolvable:$true] %s3491
          %3497 = dma.vmem_to_hbm [thread:$0]  %s3492, 1024, %s3490, %s3471, 64, 64, 4
        $region56: #{tpu_custom_call.1} parent=39 // pred_fallthru
          _
        // Predicated region
        $region57: #{tpu_custom_call.1} parent=39 // pred_check
          %p3498 = pneg %p209
        $region58: #{tpu_custom_call.1} parent=39 // pred_check_branch
          %3500 = sbr.rel (%p3498) target = $region60
        $region59: #{tpu_custom_call.1} parent=39 // pred_region
          %s3502 = ssub.s32 32, 32
          %3503 = vsyncadd %s3476, %s3502
          %s3504 = smul.addr %s34, 2
          %s3505 = sadd.s32 %s35, %s3504
          %s3506 = smul.addr %s3505, 32
          %s3507 = scalar_lea.hbm %s6, %s3506
          %s3509 = sshll.u32 %s3479, 4
          %s3510 = int_to_ptr.vmem [resolvable:$true] %s3509
          %3512 = dma.vmem_to_hbm [thread:$0]  %s3510, 32, %s3507, %s3476
        $region60: #{tpu_custom_call.1} parent=39 // pred_fallthru
          _
      $region40: #{tpu_custom_call.1} parent=5 // pred_fallthru
        _
      %p3513 = scmp.le.s32.totalorder 2, %s25
      // Predicated region
      $region61: #{tpu_custom_call.1} parent=5 // pred_check
        %p3514 = pneg %p3513
      $region62: #{tpu_custom_call.1} parent=5 // pred_check_branch
        %3516 = sbr.rel (%p3514) target = $region64
      $region63: #{tpu_custom_call.1} parent=5 // pred_region
        %s3517 = ssub.s32 %s25, 2
        // Predicated region
        $region65: #{tpu_custom_call.1} parent=63 // pred_check
          %p3518 = pneg %p187
        $region66: #{tpu_custom_call.1} parent=63 // pred_check_branch
          %3520 = sbr.rel (%p3518) target = $region68
        $region67: #{tpu_custom_call.1} parent=63 // pred_region
          %s3521 = sand.u32 %s172, 1
          %s3522 = scalar_lea.sflag [#allocation5], %s3521
          %s3523 = sand.u32 %s172, 1
          %s3524 = smul.addr %s3523, 64
          %s3525 = scalar_lea.vmem [#allocation9], %s3524
          %3526 = dma.done %s3522, 1024
        $region68: #{tpu_custom_call.1} parent=63 // pred_fallthru
          _
        // Predicated region
        $region69: #{tpu_custom_call.1} parent=63 // pred_check
          %p3527 = pneg %p215
        $region70: #{tpu_custom_call.1} parent=63 // pred_check_branch
          %3529 = sbr.rel (%p3527) target = $region72
        $region71: #{tpu_custom_call.1} parent=63 // pred_region
          %s3530 = sand.u32 %s200, 1
          %s3531 = scalar_lea.sflag [#allocation11], %s3530
          %s3532 = sand.u32 %s200, 1
          %s3533 = smul.addr %s3532, 2
          %s3534 = scalar_lea.vmem [#allocation10], %s3533
          %3535 = dma.done %s3531, 32
        $region72: #{tpu_custom_call.1} parent=63 // pred_fallthru
          _
      $region64: #{tpu_custom_call.1} parent=5 // pred_fallthru
        _
    $region6: #{tpu_custom_call.1} parent=1 // loop_footer
      %s29 = sadd.s32 1, %s25
    $region7: #{tpu_custom_call.1} parent=1 // loop_footer_branch
      %24 = sbr.rel target = $region3
    $region8: #{tpu_custom_call.1} parent=1 // loop_exit
      _
    %3536 = vsyncpa [#allocation4], 1
    %s3537 = scalar_lea.sflag [#allocation4], 1
    %3538 = vsyncpa %s3537, 1
    %3539 = vsyncpa [#allocation7], 1
    %s3540 = scalar_lea.sflag [#allocation7], 1
    %3541 = vsyncpa %s3540, 1
    %3542 = vsyncpa [#allocation5], 1
    %s3543 = scalar_lea.sflag [#allocation5], 1
    %3544 = vsyncpa %s3543, 1
    %3545 = vsyncpa [#allocation11], 1
    %s3546 = scalar_lea.sflag [#allocation11], 1
    %3547 = vsyncpa %s3546, 1

</llo_original>
